<compile_context>
chip_gen: v7x
topology: tpu7x:2x2x1
jax: 0.10.0
libtpu: 0.0.40
codegen_flags: <defaults>
</compile_context>

<pallas_src>
import jax
import jax.numpy as jnp
from jax.experimental import pallas as pl
from jax.experimental.pallas import tpu as pltpu

LANES = 128                        # lane-dense padded output-channel width
VMEM_LIMIT = 32 * 1024 * 1024      # safe scoped-VMEM limit on v5e / v6e / v7x


# ----------------------------------------------------------------------------
# Pallas kernels
# ----------------------------------------------------------------------------

def _conv_relu_pool_kernel(p_ref, w_ref, b_ref, o_ref):
    """Fused conv(as matmul) + bias + ReLU + 2x2 max-pool.

    p_ref: (4, TM, K) bf16 pool-grouped im2col rows (group g holds the patches of the
           conv-output position that lands in pool sub-slot g of each pooled pixel).
    w_ref: (K, 128) bf16 lane-padded weight, b_ref: (1, 128) f32, o_ref: (TM, 128) bf16.
    relu(max_g(p_g @ W + b)) == maxpool2x2(relu(conv(x))) since ReLU is monotone and the
    bias is shared across the 4 pool positions.
    """
    w = w_ref[...]
    acc = jnp.dot(p_ref[0], w, preferred_element_type=jnp.float32)
    for t in range(1, 4):
        acc = jnp.maximum(acc, jnp.dot(p_ref[t], w, preferred_element_type=jnp.float32))
    o_ref[...] = jnp.maximum(acc + b_ref[...], 0.0).astype(o_ref.dtype)


def _fc_head_kernel(x_ref, w1_ref, b1_ref, w2_ref, b2_ref, w3_ref, b3_ref, o_ref):
    """Fused fc1(+ReLU) -> fc2(+ReLU) -> fc3; weights resident in VMEM."""
    h = jnp.dot(x_ref[...], w1_ref[...], preferred_element_type=jnp.float32)
    h = jnp.maximum(h + b1_ref[...], 0.0).astype(jnp.bfloat16)
    h = jnp.dot(h, w2_ref[...], preferred_element_type=jnp.float32)
    h = jnp.maximum(h + b2_ref[...], 0.0).astype(jnp.bfloat16)
    h = jnp.dot(h, w3_ref[...], preferred_element_type=jnp.float32)
    o_ref[...] = (h + b3_ref[...]).astype(o_ref.dtype)


# ----------------------------------------------------------------------------
# XLA glue: pool-grouped im2col (stride-1 'same' conv followed by 2x2/2 max-pool)
# ----------------------------------------------------------------------------

def _im2col_pool_groups(x_nhwc, k, pad, cin):
    """Returns (patches, Ho, Wo) with patches: (4, N*Ho*Wo, cin*k*k) bf16.

    Group g = 2*r + s holds, for every pooled pixel (n, ho, wo), the im2col row of the
    conv output at (2*ho + r, 2*wo + s).  Row order inside a group is (n, ho, wo);
    column order is (c, kh, kw) -> matches torch weight.reshape(Cout, -1).
    Floor-mode pooling: conv rows/cols beyond 2*Ho / 2*Wo are never materialized.
    """
    N, H, W, _ = x_nhwc.shape
    Ho, Wo = H // 2, W // 2
    xp = jnp.pad(x_nhwc[..., :cin], ((0, 0), (pad, pad), (pad, pad), (0, 0)))
    K = cin * k * k
    groups = []
    for r in range(2):
        for s in range(2):
            taps = []
            for i in range(k):
                for j in range(k):
                    taps.append(xp[:, r + i: r + i + 2 * Ho: 2,
                                   s + j: s + j + 2 * Wo: 2, :])        # (N,Ho,Wo,cin)
            g = jnp.stack(taps, axis=-1)                                # (N,Ho,Wo,cin,k*k)
            groups.append(g.reshape(N, Ho * Wo, K))
    p = jnp.stack(groups, axis=0).reshape(4, N * Ho * Wo, K)
    return p, Ho, Wo


# ----------------------------------------------------------------------------
# Pallas wrappers
# ----------------------------------------------------------------------------

def conv_relu_pool(x_nhwc, w_eff, b_eff, *, k, pad, cin, tm=512):
    """Conv2d(stride=1, padding=pad) + ReLU + MaxPool2d(2,2) fused.

    x_nhwc: (N,H,W,C>=cin) bf16 -> (N, H//2, W//2, 128) bf16 (lane-padded channels)."""
    N = x_nhwc.shape[0]
    p, Ho, Wo = _im2col_pool_groups(x_nhwc, k, pad, cin)   # (4, M, K) bf16
    _, M, K = p.shape
    Np = w_eff.shape[1]
    tm_eff = M if M <= tm else tm                          # full-dim block or 8-mult tile
    grid_m = pl.cdiv(M, tm_eff)
    cost = pl.CostEstimate(
        flops=2 * 4 * M * K * Np + 4 * M * Np,
        transcendentals=0,
        bytes_accessed=(4 * M * K * 2 + K * Np * 2 + Np * 4 + M * Np * 2),
    )
    out = pl.pallas_call(
        _conv_relu_pool_kernel,
        out_shape=jax.ShapeDtypeStruct((M, Np), jnp.bfloat16),
        grid=(grid_m,),
        in_specs=[
            pl.BlockSpec((4, tm_eff, K), lambda i: (0, i, 0)),
            pl.BlockSpec((K, Np), lambda i: (0, 0)),
            pl.BlockSpec((1, Np), lambda i: (0, 0)),
        ],
        out_specs=pl.BlockSpec((tm_eff, Np), lambda i: (i, 0)),
        compiler_params=pltpu.CompilerParams(
            dimension_semantics=("parallel",),
            vmem_limit_bytes=VMEM_LIMIT),
        cost_estimate=cost,
    )(p, w_eff, b_eff)
    return out.reshape(N, Ho, Wo, Np)


def fc_head(x, w1, b1, w2, b2, w3, b3, *, tb=256):
    """Fused fc1+ReLU -> fc2+ReLU -> fc3 (logits padded to 128 lanes). x: (N,1152) bf16."""
    N, K1 = x.shape
    d1, d2, d3 = w1.shape[1], w2.shape[1], w3.shape[1]
    tb_eff = N if N <= tb else tb
    cost = pl.CostEstimate(
        flops=2 * N * (K1 * d1 + d1 * d2 + d2 * d3),
        transcendentals=0,
        bytes_accessed=(N * K1 * 2 + (K1 * d1 + d1 * d2 + d2 * d3) * 2 + N * d3 * 4),
    )
    return pl.pallas_call(
        _fc_head_kernel,
        out_shape=jax.ShapeDtypeStruct((N, d3), jnp.float32),
        grid=(pl.cdiv(N, tb_eff),),
        in_specs=[
            pl.BlockSpec((tb_eff, K1), lambda i: (i, 0)),
            pl.BlockSpec((K1, d1), lambda i: (0, 0)),
            pl.BlockSpec((1, d1), lambda i: (0, 0)),
            pl.BlockSpec((d1, d2), lambda i: (0, 0)),
            pl.BlockSpec((1, d2), lambda i: (0, 0)),
            pl.BlockSpec((d2, d3), lambda i: (0, 0)),
            pl.BlockSpec((1, d3), lambda i: (0, 0)),
        ],
        out_specs=pl.BlockSpec((tb_eff, d3), lambda i: (i, 0)),
        compiler_params=pltpu.CompilerParams(
            dimension_semantics=("parallel",),
            vmem_limit_bytes=VMEM_LIMIT),
        cost_estimate=cost,
    )(x, w1, b1, w2, b2, w3, b3)


# ----------------------------------------------------------------------------
# Parameters: torch-layout init + one-time conversion to kernel layout
# ----------------------------------------------------------------------------

def init_params(key):
    def conv_init(k, cout, cin, kh, kw):
        k1, k2 = jax.random.split(k)
        fan_in = cin * kh * kw
        w = jax.random.normal(k1, (cout, cin, kh, kw), jnp.float32) * (fan_in ** -0.5)
        b = jax.random.normal(k2, (cout,), jnp.float32) * 0.01
        return w, b

    def fc_init(k, dout, din):
        k1, k2 = jax.random.split(k)
        w = jax.random.normal(k1, (dout, din), jnp.float32) * (din ** -0.5)
        b = jax.random.normal(k2, (dout,), jnp.float32) * 0.01
        return w, b

    ks = jax.random.split(key, 6)
    return {
        "conv1": conv_init(ks[0], 16, 1, 5, 5),
        "conv2": conv_init(ks[1], 32, 16, 5, 5),
        "conv3": conv_init(ks[2], 64, 32, 3, 3),
        "fc1": fc_init(ks[3], 256, 64 * 3 * 3),
        "fc2": fc_init(ks[4], 128, 256),
        "fc3": fc_init(ks[5], 10, 128),
    }


def prepare_params(params):
    """One-time: pre-transpose, zero-pad to 128 output lanes, cast matmul operands to bf16."""
    def conv_prep(w, b):
        cout, cin, kh, kw = w.shape
        K = cin * kh * kw
        wm = jnp.zeros((K, LANES), jnp.float32).at[:, :cout].set(w.reshape(cout, K).T)
        bb = jnp.zeros((1, LANES), jnp.float32).at[0, :cout].set(b)
        return wm.astype(jnp.bfloat16), bb

    w1, b1 = conv_prep(*params["conv1"])
    w2, b2 = conv_prep(*params["conv2"])
    w3, b3 = conv_prep(*params["conv3"])

    # fc1 acts on PyTorch's NCHW flatten of the (64,3,3) map; our activation is the
    # NHWC (3,3,128)-padded map flattened to 1152 -> permute/pad the weight once.
    fw1, fb1 = params["fc1"]                                            # (256, 576), (256,)
    fw1 = jnp.transpose(fw1.reshape(256, 64, 3, 3), (2, 3, 1, 0))       # (h, w, c, out)
    fw1p = jnp.zeros((3, 3, LANES, 256), jnp.float32).at[:, :, :64, :].set(fw1)
    fc1_w = fw1p.reshape(3 * 3 * LANES, 256).astype(jnp.bfloat16)
    fc1_b = fb1.reshape(1, 256).astype(jnp.float32)

    fw2, fb2 = params["fc2"]                                            # (128, 256)
    fc2_w = fw2.T.astype(jnp.bfloat16)                                  # (256, 128)
    fc2_b = fb2.reshape(1, 128).astype(jnp.float32)

    fw3, fb3 = params["fc3"]                                            # (10, 128)
    fc3_w = jnp.zeros((128, LANES), jnp.float32).at[:, :10].set(fw3.T).astype(jnp.bfloat16)
    fc3_b = jnp.zeros((1, LANES), jnp.float32).at[0, :10].set(fb3)

    return {
        "w1": w1, "b1": b1, "w2": w2, "b2": b2, "w3": w3, "b3": b3,
        "fc1_w": fc1_w, "fc1_b": fc1_b, "fc2_w": fc2_w, "fc2_b": fc2_b,
        "fc3_w": fc3_w, "fc3_b": fc3_b,
    }


# ----------------------------------------------------------------------------
# Forward pass
# ----------------------------------------------------------------------------

def extended_cnn_forward(x_nchw, kp):
    # NCHW (PyTorch) -> NHWC; bf16 activations (accumulation stays f32 in-kernel).
    x = jnp.transpose(x_nchw, (0, 2, 3, 1)).astype(jnp.bfloat16)        # (N,28,28,1)
    N = x.shape[0]

    x = conv_relu_pool(x, kp["w1"], kp["b1"], k=5, pad=2, cin=1)        # (N,14,14,128) [16 real]
    x = conv_relu_pool(x, kp["w2"], kp["b2"], k=5, pad=2, cin=16)       # (N, 7, 7,128) [32 real]
    x = conv_relu_pool(x, kp["w3"], kp["b3"], k=3, pad=1, cin=32)       # (N, 3, 3,128) [64 real]

    xf = x.reshape(N, 3 * 3 * LANES)                                    # free reshape -> (N,1152)
    logits_p = fc_head(xf, kp["fc1_w"], kp["fc1_b"], kp["fc2_w"], kp["fc2_b"],
                       kp["fc3_w"], kp["fc3_b"])                        # (N,128) f32
    return logits_p[:, :10]                                             # real logits


# ----------------------------------------------------------------------------
# Main
# ----------------------------------------------------------------------------

if __name__ == "__main__":
    key = jax.random.PRNGKey(0)
    k_params, k_input = jax.random.split(key)

    params = prepare_params(init_params(k_params))

    # Fashion-MNIST-like input; fc1 expects 64*3*3, which requires 28x28 spatial.
    x = jax.random.normal(k_input, (2, 1, 28, 28), jnp.float32)

    fwd = jax.jit(extended_cnn_forward)
    logits = fwd(x, params)
    jax.block_until_ready(logits)

    assert logits.shape == (2, 10), logits.shape
    print("KERNEL_OK")
</pallas_src>

<mosaic_0001>
module attributes {stable_mosaic.version = 11 : i64} {
  func.func @_conv_relu_pool_kernel(%arg0: i32, %arg1: memref<4x392x25xbf16, #tpu.memory_space<vmem>>, %arg2: memref<25x128xbf16, #tpu.memory_space<vmem>>, %arg3: memref<1x128xf32, #tpu.memory_space<vmem>>, %arg4: memref<392x128xbf16, #tpu.memory_space<vmem>>) attributes {dimension_semantics = [#tpu.dimension_semantics<parallel>], iteration_bounds = array<i64: 1>, scalar_prefetch = 0 : i64, scratch_operands = 0 : i64, tpu.core_type = #tpu.core_type<tc>, window_params = [{transform_indices = @transform_0, window_bounds = array<i64: 4, 392, 25>}, {pipeline_mode = #tpu.pipeline_mode<synchronous>, transform_indices = @transform_1, window_bounds = array<i64: 25, 128>}, {pipeline_mode = #tpu.pipeline_mode<synchronous>, transform_indices = @transform_2, window_bounds = array<i64: 1, 128>}, {transform_indices = @transform_3, window_bounds = array<i64: 392, 128>}]} {
    %c0 = arith.constant 0 : index
    %c0_0 = arith.constant 0 : index
    %0 = vector.load %arg2[%c0, %c0_0] : memref<25x128xbf16, #tpu.memory_space<vmem>>, vector<25x128xbf16>
    %c0_1 = arith.constant 0 : index
    %c0_2 = arith.constant 0 : index
    %c0_3 = arith.constant 0 : index
    %1 = vector.load %arg1[%c0_1, %c0_2, %c0_3] : memref<4x392x25xbf16, #tpu.memory_space<vmem>>, vector<1x392x25xbf16>
    %2 = vector.shape_cast %1 : vector<1x392x25xbf16> to vector<392x25xbf16>
    %cst = arith.constant dense<0.000000e+00> : vector<392x128xf32>
    %3 = tpu.matmul %2, %0, %cst {dimension_numbers = #tpu.dot_dimension_numbers<[1], [0], [0], [1], [0, 0, 1, 1], [], []>} : vector<392x25xbf16>, vector<25x128xbf16>, vector<392x128xf32> -> vector<392x128xf32>
    %c1 = arith.constant 1 : index
    %c0_4 = arith.constant 0 : index
    %c0_5 = arith.constant 0 : index
    %4 = vector.load %arg1[%c1, %c0_4, %c0_5] : memref<4x392x25xbf16, #tpu.memory_space<vmem>>, vector<1x392x25xbf16>
    %5 = vector.shape_cast %4 : vector<1x392x25xbf16> to vector<392x25xbf16>
    %cst_6 = arith.constant dense<0.000000e+00> : vector<392x128xf32>
    %6 = tpu.matmul %5, %0, %cst_6 {dimension_numbers = #tpu.dot_dimension_numbers<[1], [0], [0], [1], [0, 0, 1, 1], [], []>} : vector<392x25xbf16>, vector<25x128xbf16>, vector<392x128xf32> -> vector<392x128xf32>
    %7 = arith.maximumf %3, %6 : vector<392x128xf32>
    %c2 = arith.constant 2 : index
    %c0_7 = arith.constant 0 : index
    %c0_8 = arith.constant 0 : index
    %8 = vector.load %arg1[%c2, %c0_7, %c0_8] : memref<4x392x25xbf16, #tpu.memory_space<vmem>>, vector<1x392x25xbf16>
    %9 = vector.shape_cast %8 : vector<1x392x25xbf16> to vector<392x25xbf16>
    %cst_9 = arith.constant dense<0.000000e+00> : vector<392x128xf32>
    %10 = tpu.matmul %9, %0, %cst_9 {dimension_numbers = #tpu.dot_dimension_numbers<[1], [0], [0], [1], [0, 0, 1, 1], [], []>} : vector<392x25xbf16>, vector<25x128xbf16>, vector<392x128xf32> -> vector<392x128xf32>
    %11 = arith.maximumf %7, %10 : vector<392x128xf32>
    %c3 = arith.constant 3 : index
    %c0_10 = arith.constant 0 : index
    %c0_11 = arith.constant 0 : index
    %12 = vector.load %arg1[%c3, %c0_10, %c0_11] : memref<4x392x25xbf16, #tpu.memory_space<vmem>>, vector<1x392x25xbf16>
    %13 = vector.shape_cast %12 : vector<1x392x25xbf16> to vector<392x25xbf16>
    %cst_12 = arith.constant dense<0.000000e+00> : vector<392x128xf32>
    %14 = tpu.matmul %13, %0, %cst_12 {dimension_numbers = #tpu.dot_dimension_numbers<[1], [0], [0], [1], [0, 0, 1, 1], [], []>} : vector<392x25xbf16>, vector<25x128xbf16>, vector<392x128xf32> -> vector<392x128xf32>
    %15 = arith.maximumf %11, %14 : vector<392x128xf32>
    %c0_13 = arith.constant 0 : index
    %c0_14 = arith.constant 0 : index
    %16 = vector.load %arg3[%c0_13, %c0_14] : memref<1x128xf32, #tpu.memory_space<vmem>>, vector<1x128xf32>
    %17 = vector.broadcast %16 : vector<1x128xf32> to vector<392x128xf32>
    %18 = arith.addf %15, %17 : vector<392x128xf32>
    %cst_15 = arith.constant 0.000000e+00 : f32
    %19 = vector.broadcast %cst_15 : f32 to vector<392x128xf32>
    %20 = arith.maximumf %18, %19 : vector<392x128xf32>
    %21 = arith.truncf %20 : vector<392x128xf32> to vector<392x128xbf16>
    %c0_16 = arith.constant 0 : index
    %c0_17 = arith.constant 0 : index
    %22 = vector.load %arg4[%c0_16, %c0_17] : memref<392x128xbf16, #tpu.memory_space<vmem>>, vector<392x128xbf16>
    tpu.vector_store %arg4[%c0_16, %c0_17], %21 {strides = array<i32>} : memref<392x128xbf16, #tpu.memory_space<vmem>>, vector<392x128xbf16>,
    return
  }
  func.func @transform_0(%arg0: i32) -> (i32, i32, i32) {
    %c0_i32 = arith.constant 0 : i32
    %c0_i32_0 = arith.constant 0 : i32
    %c0_i32_1 = arith.constant 0 : i32
    return %c0_i32, %arg0, %c0_i32_0 : i32, i32, i32
  }
  func.func @transform_1(%arg0: i32) -> (i32, i32) {
    %c0_i32 = arith.constant 0 : i32
    %c0_i32_0 = arith.constant 0 : i32
    %c0_i32_1 = arith.constant 0 : i32
    return %c0_i32, %c0_i32_0 : i32, i32
  }
  func.func @transform_2(%arg0: i32) -> (i32, i32) {
    %c0_i32 = arith.constant 0 : i32
    %c0_i32_0 = arith.constant 0 : i32
    %c0_i32_1 = arith.constant 0 : i32
    return %c0_i32, %c0_i32_0 : i32, i32
  }
  func.func @transform_3(%arg0: i32) -> (i32, i32) {
    %c0_i32 = arith.constant 0 : i32
    %c0_i32_0 = arith.constant 0 : i32
    return %arg0, %c0_i32 : i32, i32
  }
}

module attributes {stable_mosaic.version = 11 : i64} {
  func.func @_conv_relu_pool_kernel(%arg0: i32, %arg1: memref<4x98x400xbf16, #tpu.memory_space<vmem>>, %arg2: memref<400x128xbf16, #tpu.memory_space<vmem>>, %arg3: memref<1x128xf32, #tpu.memory_space<vmem>>, %arg4: memref<98x128xbf16, #tpu.memory_space<vmem>>) attributes {dimension_semantics = [#tpu.dimension_semantics<parallel>], iteration_bounds = array<i64: 1>, scalar_prefetch = 0 : i64, scratch_operands = 0 : i64, tpu.core_type = #tpu.core_type<tc>, window_params = [{transform_indices = @transform_0, window_bounds = array<i64: 4, 98, 400>}, {pipeline_mode = #tpu.pipeline_mode<synchronous>, transform_indices = @transform_1, window_bounds = array<i64: 400, 128>}, {pipeline_mode = #tpu.pipeline_mode<synchronous>, transform_indices = @transform_2, window_bounds = array<i64: 1, 128>}, {transform_indices = @transform_3, window_bounds = array<i64: 98, 128>}]} {
    %c0 = arith.constant 0 : index
    %c0_0 = arith.constant 0 : index
    %0 = vector.load %arg2[%c0, %c0_0] : memref<400x128xbf16, #tpu.memory_space<vmem>>, vector<400x128xbf16>
    %c0_1 = arith.constant 0 : index
    %c0_2 = arith.constant 0 : index
    %c0_3 = arith.constant 0 : index
    %1 = vector.load %arg1[%c0_1, %c0_2, %c0_3] : memref<4x98x400xbf16, #tpu.memory_space<vmem>>, vector<1x98x400xbf16>
    %2 = vector.shape_cast %1 : vector<1x98x400xbf16> to vector<98x400xbf16>
    %cst = arith.constant dense<0.000000e+00> : vector<98x128xf32>
    %3 = tpu.matmul %2, %0, %cst {dimension_numbers = #tpu.dot_dimension_numbers<[1], [0], [0], [1], [0, 0, 1, 1], [], []>} : vector<98x400xbf16>, vector<400x128xbf16>, vector<98x128xf32> -> vector<98x128xf32>
    %c1 = arith.constant 1 : index
    %c0_4 = arith.constant 0 : index
    %c0_5 = arith.constant 0 : index
    %4 = vector.load %arg1[%c1, %c0_4, %c0_5] : memref<4x98x400xbf16, #tpu.memory_space<vmem>>, vector<1x98x400xbf16>
    %5 = vector.shape_cast %4 : vector<1x98x400xbf16> to vector<98x400xbf16>
    %cst_6 = arith.constant dense<0.000000e+00> : vector<98x128xf32>
    %6 = tpu.matmul %5, %0, %cst_6 {dimension_numbers = #tpu.dot_dimension_numbers<[1], [0], [0], [1], [0, 0, 1, 1], [], []>} : vector<98x400xbf16>, vector<400x128xbf16>, vector<98x128xf32> -> vector<98x128xf32>
    %7 = arith.maximumf %3, %6 : vector<98x128xf32>
    %c2 = arith.constant 2 : index
    %c0_7 = arith.constant 0 : index
    %c0_8 = arith.constant 0 : index
    %8 = vector.load %arg1[%c2, %c0_7, %c0_8] : memref<4x98x400xbf16, #tpu.memory_space<vmem>>, vector<1x98x400xbf16>
    %9 = vector.shape_cast %8 : vector<1x98x400xbf16> to vector<98x400xbf16>
    %cst_9 = arith.constant dense<0.000000e+00> : vector<98x128xf32>
    %10 = tpu.matmul %9, %0, %cst_9 {dimension_numbers = #tpu.dot_dimension_numbers<[1], [0], [0], [1], [0, 0, 1, 1], [], []>} : vector<98x400xbf16>, vector<400x128xbf16>, vector<98x128xf32> -> vector<98x128xf32>
    %11 = arith.maximumf %7, %10 : vector<98x128xf32>
    %c3 = arith.constant 3 : index
    %c0_10 = arith.constant 0 : index
    %c0_11 = arith.constant 0 : index
    %12 = vector.load %arg1[%c3, %c0_10, %c0_11] : memref<4x98x400xbf16, #tpu.memory_space<vmem>>, vector<1x98x400xbf16>
    %13 = vector.shape_cast %12 : vector<1x98x400xbf16> to vector<98x400xbf16>
    %cst_12 = arith.constant dense<0.000000e+00> : vector<98x128xf32>
    %14 = tpu.matmul %13, %0, %cst_12 {dimension_numbers = #tpu.dot_dimension_numbers<[1], [0], [0], [1], [0, 0, 1, 1], [], []>} : vector<98x400xbf16>, vector<400x128xbf16>, vector<98x128xf32> -> vector<98x128xf32>
    %15 = arith.maximumf %11, %14 : vector<98x128xf32>
    %c0_13 = arith.constant 0 : index
    %c0_14 = arith.constant 0 : index
    %16 = vector.load %arg3[%c0_13, %c0_14] : memref<1x128xf32, #tpu.memory_space<vmem>>, vector<1x128xf32>
    %17 = vector.broadcast %16 : vector<1x128xf32> to vector<98x128xf32>
    %18 = arith.addf %15, %17 : vector<98x128xf32>
    %cst_15 = arith.constant 0.000000e+00 : f32
    %19 = vector.broadcast %cst_15 : f32 to vector<98x128xf32>
    %20 = arith.maximumf %18, %19 : vector<98x128xf32>
    %21 = arith.truncf %20 : vector<98x128xf32> to vector<98x128xbf16>
    %c0_16 = arith.constant 0 : index
    %c0_17 = arith.constant 0 : index
    %22 = vector.load %arg4[%c0_16, %c0_17] : memref<98x128xbf16, #tpu.memory_space<vmem>>, vector<98x128xbf16>
    tpu.vector_store %arg4[%c0_16, %c0_17], %21 {strides = array<i32>} : memref<98x128xbf16, #tpu.memory_space<vmem>>, vector<98x128xbf16>,
    return
  }
  func.func @transform_0(%arg0: i32) -> (i32, i32, i32) {
    %c0_i32 = arith.constant 0 : i32
    %c0_i32_0 = arith.constant 0 : i32
    %c0_i32_1 = arith.constant 0 : i32
    return %c0_i32, %arg0, %c0_i32_0 : i32, i32, i32
  }
  func.func @transform_1(%arg0: i32) -> (i32, i32) {
    %c0_i32 = arith.constant 0 : i32
    %c0_i32_0 = arith.constant 0 : i32
    %c0_i32_1 = arith.constant 0 : i32
    return %c0_i32, %c0_i32_0 : i32, i32
  }
  func.func @transform_2(%arg0: i32) -> (i32, i32) {
    %c0_i32 = arith.constant 0 : i32
    %c0_i32_0 = arith.constant 0 : i32
    %c0_i32_1 = arith.constant 0 : i32
    return %c0_i32, %c0_i32_0 : i32, i32
  }
  func.func @transform_3(%arg0: i32) -> (i32, i32) {
    %c0_i32 = arith.constant 0 : i32
    %c0_i32_0 = arith.constant 0 : i32
    return %arg0, %c0_i32 : i32, i32
  }
}

module attributes {stable_mosaic.version = 11 : i64} {
  func.func @_conv_relu_pool_kernel(%arg0: i32, %arg1: memref<4x18x288xbf16, #tpu.memory_space<vmem>>, %arg2: memref<288x128xbf16, #tpu.memory_space<vmem>>, %arg3: memref<1x128xf32, #tpu.memory_space<vmem>>, %arg4: memref<18x128xbf16, #tpu.memory_space<vmem>>) attributes {dimension_semantics = [#tpu.dimension_semantics<parallel>], iteration_bounds = array<i64: 1>, scalar_prefetch = 0 : i64, scratch_operands = 0 : i64, tpu.core_type = #tpu.core_type<tc>, window_params = [{transform_indices = @transform_0, window_bounds = array<i64: 4, 18, 288>}, {pipeline_mode = #tpu.pipeline_mode<synchronous>, transform_indices = @transform_1, window_bounds = array<i64: 288, 128>}, {pipeline_mode = #tpu.pipeline_mode<synchronous>, transform_indices = @transform_2, window_bounds = array<i64: 1, 128>}, {transform_indices = @transform_3, window_bounds = array<i64: 18, 128>}]} {
    %c0 = arith.constant 0 : index
    %c0_0 = arith.constant 0 : index
    %0 = vector.load %arg2[%c0, %c0_0] : memref<288x128xbf16, #tpu.memory_space<vmem>>, vector<288x128xbf16>
    %c0_1 = arith.constant 0 : index
    %c0_2 = arith.constant 0 : index
    %c0_3 = arith.constant 0 : index
    %1 = vector.load %arg1[%c0_1, %c0_2, %c0_3] : memref<4x18x288xbf16, #tpu.memory_space<vmem>>, vector<1x18x288xbf16>
    %2 = vector.shape_cast %1 : vector<1x18x288xbf16> to vector<18x288xbf16>
    %cst = arith.constant dense<0.000000e+00> : vector<18x128xf32>
    %3 = tpu.matmul %2, %0, %cst {dimension_numbers = #tpu.dot_dimension_numbers<[1], [0], [0], [1], [0, 0, 1, 1], [], []>} : vector<18x288xbf16>, vector<288x128xbf16>, vector<18x128xf32> -> vector<18x128xf32>
    %c1 = arith.constant 1 : index
    %c0_4 = arith.constant 0 : index
    %c0_5 = arith.constant 0 : index
    %4 = vector.load %arg1[%c1, %c0_4, %c0_5] : memref<4x18x288xbf16, #tpu.memory_space<vmem>>, vector<1x18x288xbf16>
    %5 = vector.shape_cast %4 : vector<1x18x288xbf16> to vector<18x288xbf16>
    %cst_6 = arith.constant dense<0.000000e+00> : vector<18x128xf32>
    %6 = tpu.matmul %5, %0, %cst_6 {dimension_numbers = #tpu.dot_dimension_numbers<[1], [0], [0], [1], [0, 0, 1, 1], [], []>} : vector<18x288xbf16>, vector<288x128xbf16>, vector<18x128xf32> -> vector<18x128xf32>
    %7 = arith.maximumf %3, %6 : vector<18x128xf32>
    %c2 = arith.constant 2 : index
    %c0_7 = arith.constant 0 : index
    %c0_8 = arith.constant 0 : index
    %8 = vector.load %arg1[%c2, %c0_7, %c0_8] : memref<4x18x288xbf16, #tpu.memory_space<vmem>>, vector<1x18x288xbf16>
    %9 = vector.shape_cast %8 : vector<1x18x288xbf16> to vector<18x288xbf16>
    %cst_9 = arith.constant dense<0.000000e+00> : vector<18x128xf32>
    %10 = tpu.matmul %9, %0, %cst_9 {dimension_numbers = #tpu.dot_dimension_numbers<[1], [0], [0], [1], [0, 0, 1, 1], [], []>} : vector<18x288xbf16>, vector<288x128xbf16>, vector<18x128xf32> -> vector<18x128xf32>
    %11 = arith.maximumf %7, %10 : vector<18x128xf32>
    %c3 = arith.constant 3 : index
    %c0_10 = arith.constant 0 : index
    %c0_11 = arith.constant 0 : index
    %12 = vector.load %arg1[%c3, %c0_10, %c0_11] : memref<4x18x288xbf16, #tpu.memory_space<vmem>>, vector<1x18x288xbf16>
    %13 = vector.shape_cast %12 : vector<1x18x288xbf16> to vector<18x288xbf16>
    %cst_12 = arith.constant dense<0.000000e+00> : vector<18x128xf32>
    %14 = tpu.matmul %13, %0, %cst_12 {dimension_numbers = #tpu.dot_dimension_numbers<[1], [0], [0], [1], [0, 0, 1, 1], [], []>} : vector<18x288xbf16>, vector<288x128xbf16>, vector<18x128xf32> -> vector<18x128xf32>
    %15 = arith.maximumf %11, %14 : vector<18x128xf32>
    %c0_13 = arith.constant 0 : index
    %c0_14 = arith.constant 0 : index
    %16 = vector.load %arg3[%c0_13, %c0_14] : memref<1x128xf32, #tpu.memory_space<vmem>>, vector<1x128xf32>
    %17 = vector.broadcast %16 : vector<1x128xf32> to vector<18x128xf32>
    %18 = arith.addf %15, %17 : vector<18x128xf32>
    %cst_15 = arith.constant 0.000000e+00 : f32
    %19 = vector.broadcast %cst_15 : f32 to vector<18x128xf32>
    %20 = arith.maximumf %18, %19 : vector<18x128xf32>
    %21 = arith.truncf %20 : vector<18x128xf32> to vector<18x128xbf16>
    %c0_16 = arith.constant 0 : index
    %c0_17 = arith.constant 0 : index
    %22 = vector.load %arg4[%c0_16, %c0_17] : memref<18x128xbf16, #tpu.memory_space<vmem>>, vector<18x128xbf16>
    tpu.vector_store %arg4[%c0_16, %c0_17], %21 {strides = array<i32>} : memref<18x128xbf16, #tpu.memory_space<vmem>>, vector<18x128xbf16>,
    return
  }
  func.func @transform_0(%arg0: i32) -> (i32, i32, i32) {
    %c0_i32 = arith.constant 0 : i32
    %c0_i32_0 = arith.constant 0 : i32
    %c0_i32_1 = arith.constant 0 : i32
    return %c0_i32, %arg0, %c0_i32_0 : i32, i32, i32
  }
  func.func @transform_1(%arg0: i32) -> (i32, i32) {
    %c0_i32 = arith.constant 0 : i32
    %c0_i32_0 = arith.constant 0 : i32
    %c0_i32_1 = arith.constant 0 : i32
    return %c0_i32, %c0_i32_0 : i32, i32
  }
  func.func @transform_2(%arg0: i32) -> (i32, i32) {
    %c0_i32 = arith.constant 0 : i32
    %c0_i32_0 = arith.constant 0 : i32
    %c0_i32_1 = arith.constant 0 : i32
    return %c0_i32, %c0_i32_0 : i32, i32
  }
  func.func @transform_3(%arg0: i32) -> (i32, i32) {
    %c0_i32 = arith.constant 0 : i32
    %c0_i32_0 = arith.constant 0 : i32
    return %arg0, %c0_i32 : i32, i32
  }
}

module attributes {stable_mosaic.version = 11 : i64} {
  func.func @_fc_head_kernel(%arg0: i32, %arg1: memref<2x1152xbf16, #tpu.memory_space<vmem>>, %arg2: memref<1152x256xbf16, #tpu.memory_space<vmem>>, %arg3: memref<1x256xf32, #tpu.memory_space<vmem>>, %arg4: memref<256x128xbf16, #tpu.memory_space<vmem>>, %arg5: memref<1x128xf32, #tpu.memory_space<vmem>>, %arg6: memref<128x128xbf16, #tpu.memory_space<vmem>>, %arg7: memref<1x128xf32, #tpu.memory_space<vmem>>, %arg8: memref<2x128xf32, #tpu.memory_space<vmem>>) attributes {dimension_semantics = [#tpu.dimension_semantics<parallel>], iteration_bounds = array<i64: 1>, scalar_prefetch = 0 : i64, scratch_operands = 0 : i64, tpu.core_type = #tpu.core_type<tc>, window_params = [{transform_indices = @transform_0, window_bounds = array<i64: 2, 1152>}, {pipeline_mode = #tpu.pipeline_mode<synchronous>, transform_indices = @transform_1, window_bounds = array<i64: 1152, 256>}, {pipeline_mode = #tpu.pipeline_mode<synchronous>, transform_indices = @transform_2, window_bounds = array<i64: 1, 256>}, {pipeline_mode = #tpu.pipeline_mode<synchronous>, transform_indices = @transform_3, window_bounds = array<i64: 256, 128>}, {pipeline_mode = #tpu.pipeline_mode<synchronous>, transform_indices = @transform_4, window_bounds = array<i64: 1, 128>}, {pipeline_mode = #tpu.pipeline_mode<synchronous>, transform_indices = @transform_5, window_bounds = array<i64: 128, 128>}, {pipeline_mode = #tpu.pipeline_mode<synchronous>, transform_indices = @transform_6, window_bounds = array<i64: 1, 128>}, {transform_indices = @transform_7, window_bounds = array<i64: 2, 128>}]} {
    %c0 = arith.constant 0 : index
    %c0_0 = arith.constant 0 : index
    %0 = vector.load %arg1[%c0, %c0_0] : memref<2x1152xbf16, #tpu.memory_space<vmem>>, vector<2x1152xbf16>
    %c0_1 = arith.constant 0 : index
    %c0_2 = arith.constant 0 : index
    %1 = vector.load %arg2[%c0_1, %c0_2] : memref<1152x256xbf16, #tpu.memory_space<vmem>>, vector<1152x256xbf16>
    %cst = arith.constant dense<0.000000e+00> : vector<2x256xf32>
    %2 = tpu.matmul %0, %1, %cst {dimension_numbers = #tpu.dot_dimension_numbers<[1], [0], [0], [1], [0, 0, 1, 1], [], []>} : vector<2x1152xbf16>, vector<1152x256xbf16>, vector<2x256xf32> -> vector<2x256xf32>
    %c0_3 = arith.constant 0 : index
    %c0_4 = arith.constant 0 : index
    %3 = vector.load %arg3[%c0_3, %c0_4] : memref<1x256xf32, #tpu.memory_space<vmem>>, vector<1x256xf32>
    %4 = vector.broadcast %3 : vector<1x256xf32> to vector<2x256xf32>
    %5 = arith.addf %2, %4 : vector<2x256xf32>
    %cst_5 = arith.constant 0.000000e+00 : f32
    %6 = vector.broadcast %cst_5 : f32 to vector<2x256xf32>
    %7 = arith.maximumf %5, %6 : vector<2x256xf32>
    %8 = arith.truncf %7 : vector<2x256xf32> to vector<2x256xbf16>
    %c0_6 = arith.constant 0 : index
    %c0_7 = arith.constant 0 : index
    %9 = vector.load %arg4[%c0_6, %c0_7] : memref<256x128xbf16, #tpu.memory_space<vmem>>, vector<256x128xbf16>
    %cst_8 = arith.constant dense<0.000000e+00> : vector<2x128xf32>
    %10 = tpu.matmul %8, %9, %cst_8 {dimension_numbers = #tpu.dot_dimension_numbers<[1], [0], [0], [1], [0, 0, 1, 1], [], []>} : vector<2x256xbf16>, vector<256x128xbf16>, vector<2x128xf32> -> vector<2x128xf32>
    %c0_9 = arith.constant 0 : index
    %c0_10 = arith.constant 0 : index
    %11 = vector.load %arg5[%c0_9, %c0_10] : memref<1x128xf32, #tpu.memory_space<vmem>>, vector<1x128xf32>
    %12 = vector.broadcast %11 : vector<1x128xf32> to vector<2x128xf32>
    %13 = arith.addf %10, %12 : vector<2x128xf32>
    %cst_11 = arith.constant 0.000000e+00 : f32
    %14 = vector.broadcast %cst_11 : f32 to vector<2x128xf32>
    %15 = arith.maximumf %13, %14 : vector<2x128xf32>
    %16 = arith.truncf %15 : vector<2x128xf32> to vector<2x128xbf16>
    %c0_12 = arith.constant 0 : index
    %c0_13 = arith.constant 0 : index
    %17 = vector.load %arg6[%c0_12, %c0_13] : memref<128x128xbf16, #tpu.memory_space<vmem>>, vector<128x128xbf16>
    %cst_14 = arith.constant dense<0.000000e+00> : vector<2x128xf32>
    %18 = tpu.matmul %16, %17, %cst_14 {dimension_numbers = #tpu.dot_dimension_numbers<[1], [0], [0], [1], [0, 0, 1, 1], [], []>} : vector<2x128xbf16>, vector<128x128xbf16>, vector<2x128xf32> -> vector<2x128xf32>
    %c0_15 = arith.constant 0 : index
    %c0_16 = arith.constant 0 : index
    %19 = vector.load %arg7[%c0_15, %c0_16] : memref<1x128xf32, #tpu.memory_space<vmem>>, vector<1x128xf32>
    %20 = vector.broadcast %19 : vector<1x128xf32> to vector<2x128xf32>
    %21 = arith.addf %18, %20 : vector<2x128xf32>
    %c0_17 = arith.constant 0 : index
    %c0_18 = arith.constant 0 : index
    %22 = vector.load %arg8[%c0_17, %c0_18] : memref<2x128xf32, #tpu.memory_space<vmem>>, vector<2x128xf32>
    tpu.vector_store %arg8[%c0_17, %c0_18], %21 {strides = array<i32>} : memref<2x128xf32, #tpu.memory_space<vmem>>, vector<2x128xf32>,
    return
  }
  func.func @transform_0(%arg0: i32) -> (i32, i32) {
    %c0_i32 = arith.constant 0 : i32
    %c0_i32_0 = arith.constant 0 : i32
    return %arg0, %c0_i32 : i32, i32
  }
  func.func @transform_1(%arg0: i32) -> (i32, i32) {
    %c0_i32 = arith.constant 0 : i32
    %c0_i32_0 = arith.constant 0 : i32
    %c0_i32_1 = arith.constant 0 : i32
    return %c0_i32, %c0_i32_0 : i32, i32
  }
  func.func @transform_2(%arg0: i32) -> (i32, i32) {
    %c0_i32 = arith.constant 0 : i32
    %c0_i32_0 = arith.constant 0 : i32
    %c0_i32_1 = arith.constant 0 : i32
    return %c0_i32, %c0_i32_0 : i32, i32
  }
  func.func @transform_3(%arg0: i32) -> (i32, i32) {
    %c0_i32 = arith.constant 0 : i32
    %c0_i32_0 = arith.constant 0 : i32
    %c0_i32_1 = arith.constant 0 : i32
    return %c0_i32, %c0_i32_0 : i32, i32
  }
  func.func @transform_4(%arg0: i32) -> (i32, i32) {
    %c0_i32 = arith.constant 0 : i32
    %c0_i32_0 = arith.constant 0 : i32
    %c0_i32_1 = arith.constant 0 : i32
    return %c0_i32, %c0_i32_0 : i32, i32
  }
  func.func @transform_5(%arg0: i32) -> (i32, i32) {
    %c0_i32 = arith.constant 0 : i32
    %c0_i32_0 = arith.constant 0 : i32
    %c0_i32_1 = arith.constant 0 : i32
    return %c0_i32, %c0_i32_0 : i32, i32
  }
  func.func @transform_6(%arg0: i32) -> (i32, i32) {
    %c0_i32 = arith.constant 0 : i32
    %c0_i32_0 = arith.constant 0 : i32
    %c0_i32_1 = arith.constant 0 : i32
    return %c0_i32, %c0_i32_0 : i32, i32
  }
  func.func @transform_7(%arg0: i32) -> (i32, i32) {
    %c0_i32 = arith.constant 0 : i32
    %c0_i32_0 = arith.constant 0 : i32
    return %arg0, %c0_i32 : i32, i32
  }
}

</mosaic_0001>

<llo_original>
// kernel: extended_cnn_forward.4
$region0: #{extended_cnn_forward.4}
  #allocation0 [shape = 'u32[]', space=smem, size = 0x4, offset = 0x4, fixed_abs, tag = 'smem constant byte address 0x4 - core index']
  #allocation1 [shape = 'u32[144,128]{1,0:T(1,128)}', space=vmem, size = 0x12000, scoped, tag = 'internal scratch']
  %s0 = inlined_call_operand.vmem [shape: bf16[4,392,25], index: 0, kind: input, shape index: {}]
  %s1 = inlined_call_operand.vmem [shape: bf16[25,128], index: 1, kind: input, shape index: {}]
  %s2 = inlined_call_operand.vmem [shape: f32[1,128], index: 2, kind: input, shape index: {}]
  %s3 = inlined_call_operand.vmem [shape: bf16[392,128], index: 3, kind: output, shape index: {}]
  %s4 = sld [smem:[#allocation0]]
  $region22: #{extended_cnn_forward.4} parent=0
    _
  %s6 = ssub.s32 1, %s4
  %s7 = scalar_select 0, %s6, %s4
  // Predicated region
  $region2: #{extended_cnn_forward.4} parent=0 // pred_check
    _
  $region3: #{extended_cnn_forward.4} parent=0 // pred_check_branch
    %9 = sbr.rel (0) target = $region5
  $region4: #{extended_cnn_forward.4} parent=0 // pred_region
    _
  $region5: #{extended_cnn_forward.4} parent=0 // pred_fallthru
    _
  // Predicated region
  $region6: #{extended_cnn_forward.4} parent=0 // pred_check
    _
  $region7: #{extended_cnn_forward.4} parent=0 // pred_check_branch
    %11 = sbr.rel (0) target = $region9
  $region8: #{extended_cnn_forward.4} parent=0 // pred_region
    _
  $region9: #{extended_cnn_forward.4} parent=0 // pred_fallthru
    _
  // Predicated region
  $region10: #{extended_cnn_forward.4} parent=0 // pred_check
    _
  $region11: #{extended_cnn_forward.4} parent=0 // pred_check_branch
    %13 = sbr.rel (0) target = $region13
  $region12: #{extended_cnn_forward.4} parent=0 // pred_region
    _
  $region13: #{extended_cnn_forward.4} parent=0 // pred_fallthru
    _
  %v15 = vld [vmem:[%s1] sm:$0xf]
  %v16 = vld [vmem:[%s1 + $0x4] sm:$0xf]
  %v17 = vld [vmem:[%s1 + $0x8] sm:$0xf]
  %v18 = vld [vmem:[%s1 + $0xc] sm:$0x1]
  %v19 = vld [vmem:[%s0] sm:$0xf]
  %v20 = vld [vmem:[%s0 + $0x4] sm:$0xf]
  %v21 = vld [vmem:[%s0 + $0x8] sm:$0xf]
  %v22 = vld [vmem:[%s0 + $0xc] sm:$0xf]
  %v23 = vld [vmem:[%s0 + $0x10] sm:$0xf]
  %v24 = vld [vmem:[%s0 + $0x14] sm:$0xf]
  %v25 = vld [vmem:[%s0 + $0x18] sm:$0xf]
  %v26 = vld [vmem:[%s0 + $0x1c] sm:$0xf]
  %v27 = vld [vmem:[%s0 + $0x20] sm:$0xf]
  %v28 = vld [vmem:[%s0 + $0x24] sm:$0xf]
  %v29 = vld [vmem:[%s0 + $0x28] sm:$0xf]
  %v30 = vld [vmem:[%s0 + $0x2c] sm:$0xf]
  %v31 = vld [vmem:[%s0 + $0x30] sm:$0xf]
  %v32 = vld [vmem:[%s0 + $0x34] sm:$0xf]
  %v33 = vld [vmem:[%s0 + $0x38] sm:$0xf]
  %v34 = vld [vmem:[%s0 + $0x3c] sm:$0xf]
  %v35 = vld [vmem:[%s0 + $0x40] sm:$0xf]
  %v36 = vld [vmem:[%s0 + $0x44] sm:$0xf]
  %v37 = vld [vmem:[%s0 + $0x48] sm:$0xf]
  %v38 = vld [vmem:[%s0 + $0x4c] sm:$0xf]
  %v39 = vld [vmem:[%s0 + $0x50] sm:$0xf]
  %v40 = vld [vmem:[%s0 + $0x54] sm:$0xf]
  %v41 = vld [vmem:[%s0 + $0x58] sm:$0xf]
  %v42 = vld [vmem:[%s0 + $0x5c] sm:$0xf]
  %v43 = vld [vmem:[%s0 + $0x60] sm:$0xf]
  %v44 = vld [vmem:[%s0 + $0x64] sm:$0xf]
  %v45 = vld [vmem:[%s0 + $0x68] sm:$0xf]
  %v46 = vld [vmem:[%s0 + $0x6c] sm:$0xf]
  %v47 = vld [vmem:[%s0 + $0x70] sm:$0xf]
  %v48 = vld [vmem:[%s0 + $0x74] sm:$0xf]
  %v49 = vld [vmem:[%s0 + $0x78] sm:$0xf]
  %v50 = vld [vmem:[%s0 + $0x7c] sm:$0xf]
  %v51 = vld [vmem:[%s0 + $0x80] sm:$0xf]
  %v52 = vld [vmem:[%s0 + $0x84] sm:$0xf]
  %v53 = vld [vmem:[%s0 + $0x88] sm:$0xf]
  %v54 = vld [vmem:[%s0 + $0x8c] sm:$0xf]
  %v55 = vld [vmem:[%s0 + $0x90] sm:$0xf]
  %v56 = vld [vmem:[%s0 + $0x94] sm:$0xf]
  %v57 = vld [vmem:[%s0 + $0x98] sm:$0xf]
  %v58 = vld [vmem:[%s0 + $0x9c] sm:$0xf]
  %v59 = vld [vmem:[%s0 + $0xa0] sm:$0xf]
  %v60 = vld [vmem:[%s0 + $0xa4] sm:$0xf]
  %v61 = vld [vmem:[%s0 + $0xa8] sm:$0xf]
  %v62 = vld [vmem:[%s0 + $0xac] sm:$0xf]
  %v63 = vld [vmem:[%s0 + $0xb0] sm:$0xf]
  %v64 = vld [vmem:[%s0 + $0xb4] sm:$0xf]
  %v65 = vld [vmem:[%s0 + $0xb8] sm:$0xf]
  %v66 = vld [vmem:[%s0 + $0xbc] sm:$0xf]
  %v67 = vld [vmem:[%s0 + $0xc0] sm:$0xf]
  %v117 = vunpack.c.l.b16 %v19
  %v118 = vunpack.c.l.b16 %v20
  %v119 = vunpack.c.l.b16 %v21
  %v120 = vunpack.c.l.b16 %v22
  %v121 = vunpack.c.l.b16 %v23
  %v122 = vunpack.c.l.b16 %v24
  %v123 = vunpack.c.l.b16 %v25
  %v124 = vunpack.c.l.b16 %v26
  %v125 = vunpack.c.l.b16 %v27
  %v126 = vunpack.c.l.b16 %v28
  %v127 = vunpack.c.l.b16 %v29
  %v128 = vunpack.c.l.b16 %v30
  %v129 = vunpack.c.l.b16 %v31
  %v130 = vunpack.c.l.b16 %v32
  %v131 = vunpack.c.l.b16 %v33
  %v132 = vunpack.c.l.b16 %v34
  %v133 = vunpack.c.l.b16 %v35
  %v134 = vunpack.c.l.b16 %v36
  %v135 = vunpack.c.l.b16 %v37
  %v136 = vunpack.c.l.b16 %v38
  %v137 = vunpack.c.l.b16 %v39
  %v138 = vunpack.c.l.b16 %v40
  %v139 = vunpack.c.l.b16 %v41
  %v140 = vunpack.c.l.b16 %v42
  %v141 = vunpack.c.l.b16 %v43
  %v142 = vunpack.c.l.b16 %v44
  %v143 = vunpack.c.l.b16 %v45
  %v144 = vunpack.c.l.b16 %v46
  %v145 = vunpack.c.l.b16 %v47
  %v146 = vunpack.c.l.b16 %v48
  %v147 = vunpack.c.l.b16 %v49
  %v148 = vunpack.c.l.b16 %v50
  %v149 = vunpack.c.l.b16 %v51
  %v150 = vunpack.c.l.b16 %v52
  %v151 = vunpack.c.l.b16 %v53
  %v152 = vunpack.c.l.b16 %v54
  %v153 = vunpack.c.l.b16 %v55
  %v154 = vunpack.c.l.b16 %v56
  %v155 = vunpack.c.l.b16 %v57
  %v156 = vunpack.c.l.b16 %v58
  %v157 = vunpack.c.l.b16 %v59
  %v158 = vunpack.c.l.b16 %v60
  %v159 = vunpack.c.l.b16 %v61
  %v160 = vunpack.c.l.b16 %v62
  %v161 = vunpack.c.l.b16 %v63
  %v162 = vunpack.c.l.b16 %v64
  %v163 = vunpack.c.l.b16 %v65
  %v164 = vunpack.c.l.b16 %v66
  %v165 = vunpack.c.l.b16 %v67
  %v166 = vpack.c.b16 %v118, %v117
  %v167 = vpack.c.b16 %v120, %v119
  %v168 = vpack.c.b16 %v122, %v121
  %v169 = vpack.c.b16 %v124, %v123
  %v170 = vpack.c.b16 %v126, %v125
  %v171 = vpack.c.b16 %v128, %v127
  %v172 = vpack.c.b16 %v130, %v129
  %v173 = vpack.c.b16 %v132, %v131
  %v174 = vpack.c.b16 %v134, %v133
  %v175 = vpack.c.b16 %v136, %v135
  %v176 = vpack.c.b16 %v138, %v137
  %v177 = vpack.c.b16 %v140, %v139
  %v178 = vpack.c.b16 %v142, %v141
  %v179 = vpack.c.b16 %v144, %v143
  %v180 = vpack.c.b16 %v146, %v145
  %v181 = vpack.c.b16 %v148, %v147
  %v182 = vpack.c.b16 %v150, %v149
  %v183 = vpack.c.b16 %v152, %v151
  %v184 = vpack.c.b16 %v154, %v153
  %v185 = vpack.c.b16 %v156, %v155
  %v186 = vpack.c.b16 %v158, %v157
  %v187 = vpack.c.b16 %v160, %v159
  %v188 = vpack.c.b16 %v162, %v161
  %v189 = vpack.c.b16 %v164, %v163
  %v190 = vpack.c.b16 %v165, %v165
  %v195 = vunpack.c.l.b16 %v15
  %v196 = vunpack.c.l.b16 %v16
  %v197 = vunpack.c.l.b16 %v17
  %v198 = vunpack.c.l.b16 %v18
  %v199 = vpack.c.b16 %v196, %v195
  %v200 = vpack.c.b16 %v198, %v197
  %vm202 = vcmask 203776
  %v204 = vsel %vm202, %v166, 0
  %v207 = vsel %vm202, %v167, 0
  %v210 = vsel %vm202, %v168, 0
  %v213 = vsel %vm202, %v169, 0
  %v216 = vsel %vm202, %v170, 0
  %v219 = vsel %vm202, %v171, 0
  %v222 = vsel %vm202, %v172, 0
  %v225 = vsel %vm202, %v173, 0
  %v228 = vsel %vm202, %v174, 0
  %v231 = vsel %vm202, %v175, 0
  %v234 = vsel %vm202, %v176, 0
  %v237 = vsel %vm202, %v177, 0
  %v240 = vsel %vm202, %v178, 0
  %v243 = vsel %vm202, %v179, 0
  %v246 = vsel %vm202, %v180, 0
  %v249 = vsel %vm202, %v181, 0
  %v252 = vsel %vm202, %v182, 0
  %v255 = vsel %vm202, %v183, 0
  %v258 = vsel %vm202, %v184, 0
  %v261 = vsel %vm202, %v185, 0
  %v264 = vsel %vm202, %v186, 0
  %v267 = vsel %vm202, %v187, 0
  %v270 = vsel %vm202, %v188, 0
  %v273 = vsel %vm202, %v189, 0
  %v276 = vsel %vm202, %v190, 0
  %vm278 = vcmask 1043456
  %vm279 = vcmask 1044480
  %v280 = vsel %vm278, 4294967295, 65535
  %v281 = vsel %vm279, %v280, 0
  %v283 = vand.u32 %v200, %v281
  %285 = vmatprep.subr.bf16.mxu0 0
  %286 = vmatpush1.bf16.msra.mxu0 %v199
  %287 = vmatprep.subr.bf16.mxu0 0
  %288 = vmatpush1.bf16.msra.mxu0 %v283
  %289 = vmatprep.subr.bf16.mxu0 0
  %290 = vmatpush1.bf16.msra.mxu0 0
  %291 = vmatprep.subr.bf16.mxu0 0
  %292 = vmatpush1.bf16.msra.mxu0 0
  %293 = vmatprep.subr.bf16.mxu0 0
  %294 = vmatpush1.bf16.msra.mxu0 0
  %295 = vmatprep.subr.bf16.mxu0 0
  %296 = vmatpush1.bf16.msra.mxu0 0
  %297 = vmatprep.subr.bf16.mxu0 0
  %298 = vmatpush1.bf16.msra.mxu0 0
  %299 = vmatprep.subr.bf16.mxu0 0
  %300 = vmatpush1.bf16.msra.mxu0 0
  %301 = vmatprep.subr.bf16.mxu0 0
  %302 = vmatpush1.bf16.msra.mxu0 0
  %303 = vmatprep.subr.bf16.mxu0 0
  %304 = vmatpush1.bf16.msra.mxu0 0
  %305 = vmatprep.subr.bf16.mxu0 0
  %306 = vmatpush1.bf16.msra.mxu0 0
  %307 = vmatprep.subr.bf16.mxu0 0
  %308 = vmatpush1.bf16.msra.mxu0 0
  %309 = vmatprep.subr.bf16.mxu0 0
  %310 = vmatpush1.bf16.msra.mxu0 0
  %311 = vmatprep.subr.bf16.mxu0 0
  %312 = vmatpush1.bf16.msra.mxu0 0
  %313 = vmatprep.subr.bf16.mxu0 0
  %314 = vmatpush1.bf16.msra.mxu0 0
  %315 = vmatprep.subr.bf16.mxu0 0
  %316 = vmatpush1.bf16.msra.mxu0 0
  %317 = vmatprep.mubr.bf16.mxu0 0
  %318 = vmatmul.mubr.bf16.gmra.mrb[0].mxu0 %v204
  %v319 = vpop.f32.mrb[0].mxu0
  %v320 = vadd.f32 0.0, %v319
  %v321 = vpop.f32.mrb[0].mxu0
  %v322 = vpop.f32.mrb[0].mxu0
  %v323 = vadd.f32 0.0, %v322
  %v324 = vpop.f32.mrb[0].mxu0
  %325 = vmatprep.mubr.bf16.mxu0 0
  %326 = vmatmul.mubr.bf16.gmra.mrb[0].mxu0 %v207
  %v327 = vpop.f32.mrb[0].mxu0
  %v328 = vadd.f32 0.0, %v327
  %v329 = vpop.f32.mrb[0].mxu0
  %v330 = vpop.f32.mrb[0].mxu0
  %v331 = vadd.f32 0.0, %v330
  %v332 = vpop.f32.mrb[0].mxu0
  %333 = vmatprep.mubr.bf16.mxu0 0
  %334 = vmatmul.mubr.bf16.gmra.mrb[0].mxu0 %v210
  %v335 = vpop.f32.mrb[0].mxu0
  %v336 = vadd.f32 0.0, %v335
  %v337 = vpop.f32.mrb[0].mxu0
  %v338 = vpop.f32.mrb[0].mxu0
  %v339 = vadd.f32 0.0, %v338
  %v340 = vpop.f32.mrb[0].mxu0
  %341 = vmatprep.mubr.bf16.mxu0 0
  %342 = vmatmul.mubr.bf16.gmra.mrb[0].mxu0 %v213
  %v343 = vpop.f32.mrb[0].mxu0
  %v344 = vadd.f32 0.0, %v343
  %v345 = vpop.f32.mrb[0].mxu0
  %v346 = vpop.f32.mrb[0].mxu0
  %v347 = vadd.f32 0.0, %v346
  %v348 = vpop.f32.mrb[0].mxu0
  %349 = vmatprep.mubr.bf16.mxu0 0
  %350 = vmatmul.mubr.bf16.gmra.mrb[0].mxu0 %v216
  %v351 = vpop.f32.mrb[0].mxu0
  %v352 = vadd.f32 0.0, %v351
  %v353 = vpop.f32.mrb[0].mxu0
  %v354 = vpop.f32.mrb[0].mxu0
  %v355 = vadd.f32 0.0, %v354
  %v356 = vpop.f32.mrb[0].mxu0
  %357 = vmatprep.mubr.bf16.mxu0 0
  %358 = vmatmul.mubr.bf16.gmra.mrb[0].mxu0 %v219
  %v359 = vpop.f32.mrb[0].mxu0
  %v360 = vadd.f32 0.0, %v359
  %v361 = vpop.f32.mrb[0].mxu0
  %v362 = vpop.f32.mrb[0].mxu0
  %v363 = vadd.f32 0.0, %v362
  %v364 = vpop.f32.mrb[0].mxu0
  %365 = vmatprep.mubr.bf16.mxu0 0
  %366 = vmatmul.mubr.bf16.gmra.mrb[0].mxu0 %v222
  %v367 = vpop.f32.mrb[0].mxu0
  %v368 = vadd.f32 0.0, %v367
  %v369 = vpop.f32.mrb[0].mxu0
  %v370 = vpop.f32.mrb[0].mxu0
  %v371 = vadd.f32 0.0, %v370
  %v372 = vpop.f32.mrb[0].mxu0
  %373 = vmatprep.mubr.bf16.mxu0 0
  %374 = vmatmul.mubr.bf16.gmra.mrb[0].mxu0 %v225
  %v375 = vpop.f32.mrb[0].mxu0
  %v376 = vadd.f32 0.0, %v375
  %v377 = vpop.f32.mrb[0].mxu0
  %v378 = vpop.f32.mrb[0].mxu0
  %v379 = vadd.f32 0.0, %v378
  %v380 = vpop.f32.mrb[0].mxu0
  %381 = vmatprep.mubr.bf16.mxu0 0
  %382 = vmatmul.mubr.bf16.gmra.mrb[0].mxu0 %v228
  %v383 = vpop.f32.mrb[0].mxu0
  %v384 = vadd.f32 0.0, %v383
  %v385 = vpop.f32.mrb[0].mxu0
  %v386 = vpop.f32.mrb[0].mxu0
  %v387 = vadd.f32 0.0, %v386
  %v388 = vpop.f32.mrb[0].mxu0
  %389 = vmatprep.mubr.bf16.mxu0 0
  %390 = vmatmul.mubr.bf16.gmra.mrb[0].mxu0 %v231
  %v391 = vpop.f32.mrb[0].mxu0
  %v392 = vadd.f32 0.0, %v391
  %v393 = vpop.f32.mrb[0].mxu0
  %v394 = vpop.f32.mrb[0].mxu0
  %v395 = vadd.f32 0.0, %v394
  %v396 = vpop.f32.mrb[0].mxu0
  %397 = vmatprep.mubr.bf16.mxu0 0
  %398 = vmatmul.mubr.bf16.gmra.mrb[0].mxu0 %v234
  %v399 = vpop.f32.mrb[0].mxu0
  %v400 = vadd.f32 0.0, %v399
  %v401 = vpop.f32.mrb[0].mxu0
  %v402 = vpop.f32.mrb[0].mxu0
  %v403 = vadd.f32 0.0, %v402
  %v404 = vpop.f32.mrb[0].mxu0
  %405 = vmatprep.mubr.bf16.mxu0 0
  %406 = vmatmul.mubr.bf16.gmra.mrb[0].mxu0 %v237
  %v407 = vpop.f32.mrb[0].mxu0
  %v408 = vadd.f32 0.0, %v407
  %v409 = vpop.f32.mrb[0].mxu0
  %v410 = vpop.f32.mrb[0].mxu0
  %v411 = vadd.f32 0.0, %v410
  %v412 = vpop.f32.mrb[0].mxu0
  %413 = vmatprep.mubr.bf16.mxu0 0
  %414 = vmatmul.mubr.bf16.gmra.mrb[0].mxu0 %v240
  %v415 = vpop.f32.mrb[0].mxu0
  %v416 = vadd.f32 0.0, %v415
  %v417 = vpop.f32.mrb[0].mxu0
  %v418 = vpop.f32.mrb[0].mxu0
  %v419 = vadd.f32 0.0, %v418
  %v420 = vpop.f32.mrb[0].mxu0
  %421 = vmatprep.mubr.bf16.mxu0 0
  %422 = vmatmul.mubr.bf16.gmra.mrb[0].mxu0 %v243
  %v423 = vpop.f32.mrb[0].mxu0
  %v424 = vadd.f32 0.0, %v423
  %v425 = vpop.f32.mrb[0].mxu0
  %v426 = vpop.f32.mrb[0].mxu0
  %v427 = vadd.f32 0.0, %v426
  %v428 = vpop.f32.mrb[0].mxu0
  %429 = vmatprep.mubr.bf16.mxu0 0
  %430 = vmatmul.mubr.bf16.gmra.mrb[0].mxu0 %v246
  %v431 = vpop.f32.mrb[0].mxu0
  %v432 = vadd.f32 0.0, %v431
  %v433 = vpop.f32.mrb[0].mxu0
  %v434 = vpop.f32.mrb[0].mxu0
  %v435 = vadd.f32 0.0, %v434
  %v436 = vpop.f32.mrb[0].mxu0
  %437 = vmatprep.mubr.bf16.mxu0 0
  %438 = vmatmul.mubr.bf16.gmra.mrb[0].mxu0 %v249
  %v439 = vpop.f32.mrb[0].mxu0
  %v440 = vadd.f32 0.0, %v439
  %v441 = vpop.f32.mrb[0].mxu0
  %v442 = vpop.f32.mrb[0].mxu0
  %v443 = vadd.f32 0.0, %v442
  %v444 = vpop.f32.mrb[0].mxu0
  %445 = vmatprep.mubr.bf16.mxu0 0
  %446 = vmatmul.mubr.bf16.gmra.mrb[0].mxu0 %v252
  %v447 = vpop.f32.mrb[0].mxu0
  %v448 = vadd.f32 0.0, %v447
  %v449 = vpop.f32.mrb[0].mxu0
  %v450 = vpop.f32.mrb[0].mxu0
  %v451 = vadd.f32 0.0, %v450
  %v452 = vpop.f32.mrb[0].mxu0
  %453 = vmatprep.mubr.bf16.mxu0 0
  %454 = vmatmul.mubr.bf16.gmra.mrb[0].mxu0 %v255
  %v455 = vpop.f32.mrb[0].mxu0
  %v456 = vadd.f32 0.0, %v455
  %v457 = vpop.f32.mrb[0].mxu0
  %v458 = vpop.f32.mrb[0].mxu0
  %v459 = vadd.f32 0.0, %v458
  %v460 = vpop.f32.mrb[0].mxu0
  %461 = vmatprep.mubr.bf16.mxu0 0
  %462 = vmatmul.mubr.bf16.gmra.mrb[0].mxu0 %v258
  %v463 = vpop.f32.mrb[0].mxu0
  %v464 = vadd.f32 0.0, %v463
  %v465 = vpop.f32.mrb[0].mxu0
  %v466 = vpop.f32.mrb[0].mxu0
  %v467 = vadd.f32 0.0, %v466
  %v468 = vpop.f32.mrb[0].mxu0
  %469 = vmatprep.mubr.bf16.mxu0 0
  %470 = vmatmul.mubr.bf16.gmra.mrb[0].mxu0 %v261
  %v471 = vpop.f32.mrb[0].mxu0
  %v472 = vadd.f32 0.0, %v471
  %v473 = vpop.f32.mrb[0].mxu0
  %v474 = vpop.f32.mrb[0].mxu0
  %v475 = vadd.f32 0.0, %v474
  %v476 = vpop.f32.mrb[0].mxu0
  %477 = vmatprep.mubr.bf16.mxu0 0
  %478 = vmatmul.mubr.bf16.gmra.mrb[0].mxu0 %v264
  %v479 = vpop.f32.mrb[0].mxu0
  %v480 = vadd.f32 0.0, %v479
  %v481 = vpop.f32.mrb[0].mxu0
  %v482 = vpop.f32.mrb[0].mxu0
  %v483 = vadd.f32 0.0, %v482
  %v484 = vpop.f32.mrb[0].mxu0
  %485 = vmatprep.mubr.bf16.mxu0 0
  %486 = vmatmul.mubr.bf16.gmra.mrb[0].mxu0 %v267
  %v487 = vpop.f32.mrb[0].mxu0
  %v488 = vadd.f32 0.0, %v487
  %v489 = vpop.f32.mrb[0].mxu0
  %v490 = vpop.f32.mrb[0].mxu0
  %v491 = vadd.f32 0.0, %v490
  %v492 = vpop.f32.mrb[0].mxu0
  %493 = vmatprep.mubr.bf16.mxu0 0
  %494 = vmatmul.mubr.bf16.gmra.mrb[0].mxu0 %v270
  %v495 = vpop.f32.mrb[0].mxu0
  %v496 = vadd.f32 0.0, %v495
  %v497 = vpop.f32.mrb[0].mxu0
  %v498 = vpop.f32.mrb[0].mxu0
  %v499 = vadd.f32 0.0, %v498
  %v500 = vpop.f32.mrb[0].mxu0
  %501 = vmatprep.mubr.bf16.mxu0 0
  %502 = vmatmul.mubr.bf16.gmra.mrb[0].mxu0 %v273
  %v503 = vpop.f32.mrb[0].mxu0
  %v504 = vadd.f32 0.0, %v503
  %v505 = vpop.f32.mrb[0].mxu0
  %v506 = vpop.f32.mrb[0].mxu0
  %v507 = vadd.f32 0.0, %v506
  %v508 = vpop.f32.mrb[0].mxu0
  %509 = vmatprep.mubr.bf16.mxu0 0
  %510 = vmatmul.mubr.bf16.gmra.mrb[0].mxu0 %v276
  %v511 = vpop.f32.mrb[0].mxu0
  %v512 = vadd.f32 0.0, %v511
  %v513 = vpop.f32.mrb[0].mxu0
  %v514 = vpop.f32.mrb[0].mxu0
  %v515 = vpop.f32.mrb[0].mxu0
  %516 = vdwg.mxu0
  %s517 = scalar_lea.vmem %s0, 196
  %v518 = vld [vmem:[%s517] sm:$0xf]
  %v519 = vld [vmem:[%s517 + $0x4] sm:$0xf]
  %v520 = vld [vmem:[%s517 + $0x8] sm:$0xf]
  %v521 = vld [vmem:[%s517 + $0xc] sm:$0xf]
  %v522 = vld [vmem:[%s517 + $0x10] sm:$0xf]
  %v523 = vld [vmem:[%s517 + $0x14] sm:$0xf]
  %v524 = vld [vmem:[%s517 + $0x18] sm:$0xf]
  %v525 = vld [vmem:[%s517 + $0x1c] sm:$0xf]
  %v526 = vld [vmem:[%s517 + $0x20] sm:$0xf]
  %v527 = vld [vmem:[%s517 + $0x24] sm:$0xf]
  %v528 = vld [vmem:[%s517 + $0x28] sm:$0xf]
  %v529 = vld [vmem:[%s517 + $0x2c] sm:$0xf]
  %v530 = vld [vmem:[%s517 + $0x30] sm:$0xf]
  %v531 = vld [vmem:[%s517 + $0x34] sm:$0xf]
  %v532 = vld [vmem:[%s517 + $0x38] sm:$0xf]
  %v533 = vld [vmem:[%s517 + $0x3c] sm:$0xf]
  %v534 = vld [vmem:[%s517 + $0x40] sm:$0xf]
  %v535 = vld [vmem:[%s517 + $0x44] sm:$0xf]
  %v536 = vld [vmem:[%s517 + $0x48] sm:$0xf]
  %v537 = vld [vmem:[%s517 + $0x4c] sm:$0xf]
  %v538 = vld [vmem:[%s517 + $0x50] sm:$0xf]
  %v539 = vld [vmem:[%s517 + $0x54] sm:$0xf]
  %v540 = vld [vmem:[%s517 + $0x58] sm:$0xf]
  %v541 = vld [vmem:[%s517 + $0x5c] sm:$0xf]
  %v542 = vld [vmem:[%s517 + $0x60] sm:$0xf]
  %v543 = vld [vmem:[%s517 + $0x64] sm:$0xf]
  %v544 = vld [vmem:[%s517 + $0x68] sm:$0xf]
  %v545 = vld [vmem:[%s517 + $0x6c] sm:$0xf]
  %v546 = vld [vmem:[%s517 + $0x70] sm:$0xf]
  %v547 = vld [vmem:[%s517 + $0x74] sm:$0xf]
  %v548 = vld [vmem:[%s517 + $0x78] sm:$0xf]
  %v549 = vld [vmem:[%s517 + $0x7c] sm:$0xf]
  %v550 = vld [vmem:[%s517 + $0x80] sm:$0xf]
  %v551 = vld [vmem:[%s517 + $0x84] sm:$0xf]
  %v552 = vld [vmem:[%s517 + $0x88] sm:$0xf]
  %v553 = vld [vmem:[%s517 + $0x8c] sm:$0xf]
  %v554 = vld [vmem:[%s517 + $0x90] sm:$0xf]
  %v555 = vld [vmem:[%s517 + $0x94] sm:$0xf]
  %v556 = vld [vmem:[%s517 + $0x98] sm:$0xf]
  %v557 = vld [vmem:[%s517 + $0x9c] sm:$0xf]
  %v558 = vld [vmem:[%s517 + $0xa0] sm:$0xf]
  %v559 = vld [vmem:[%s517 + $0xa4] sm:$0xf]
  %v560 = vld [vmem:[%s517 + $0xa8] sm:$0xf]
  %v561 = vld [vmem:[%s517 + $0xac] sm:$0xf]
  %v562 = vld [vmem:[%s517 + $0xb0] sm:$0xf]
  %v563 = vld [vmem:[%s517 + $0xb4] sm:$0xf]
  %v564 = vld [vmem:[%s517 + $0xb8] sm:$0xf]
  %v565 = vld [vmem:[%s517 + $0xbc] sm:$0xf]
  %v566 = vld [vmem:[%s517 + $0xc0] sm:$0xf]
  %v616 = vunpack.c.l.b16 %v518
  %v617 = vunpack.c.l.b16 %v519
  %v618 = vunpack.c.l.b16 %v520
  %v619 = vunpack.c.l.b16 %v521
  %v620 = vunpack.c.l.b16 %v522
  %v621 = vunpack.c.l.b16 %v523
  %v622 = vunpack.c.l.b16 %v524
  %v623 = vunpack.c.l.b16 %v525
  %v624 = vunpack.c.l.b16 %v526
  %v625 = vunpack.c.l.b16 %v527
  %v626 = vunpack.c.l.b16 %v528
  %v627 = vunpack.c.l.b16 %v529
  %v628 = vunpack.c.l.b16 %v530
  %v629 = vunpack.c.l.b16 %v531
  %v630 = vunpack.c.l.b16 %v532
  %v631 = vunpack.c.l.b16 %v533
  %v632 = vunpack.c.l.b16 %v534
  %v633 = vunpack.c.l.b16 %v535
  %v634 = vunpack.c.l.b16 %v536
  %v635 = vunpack.c.l.b16 %v537
  %v636 = vunpack.c.l.b16 %v538
  %v637 = vunpack.c.l.b16 %v539
  %v638 = vunpack.c.l.b16 %v540
  %v639 = vunpack.c.l.b16 %v541
  %v640 = vunpack.c.l.b16 %v542
  %v641 = vunpack.c.l.b16 %v543
  %v642 = vunpack.c.l.b16 %v544
  %v643 = vunpack.c.l.b16 %v545
  %v644 = vunpack.c.l.b16 %v546
  %v645 = vunpack.c.l.b16 %v547
  %v646 = vunpack.c.l.b16 %v548
  %v647 = vunpack.c.l.b16 %v549
  %v648 = vunpack.c.l.b16 %v550
  %v649 = vunpack.c.l.b16 %v551
  %v650 = vunpack.c.l.b16 %v552
  %v651 = vunpack.c.l.b16 %v553
  %v652 = vunpack.c.l.b16 %v554
  %v653 = vunpack.c.l.b16 %v555
  %v654 = vunpack.c.l.b16 %v556
  %v655 = vunpack.c.l.b16 %v557
  %v656 = vunpack.c.l.b16 %v558
  %v657 = vunpack.c.l.b16 %v559
  %v658 = vunpack.c.l.b16 %v560
  %v659 = vunpack.c.l.b16 %v561
  %v660 = vunpack.c.l.b16 %v562
  %v661 = vunpack.c.l.b16 %v563
  %v662 = vunpack.c.l.b16 %v564
  %v663 = vunpack.c.l.b16 %v565
  %v664 = vunpack.c.l.b16 %v566
  %v665 = vpack.c.b16 %v617, %v616
  %v666 = vpack.c.b16 %v619, %v618
  %v667 = vpack.c.b16 %v621, %v620
  %v668 = vpack.c.b16 %v623, %v622
  %v669 = vpack.c.b16 %v625, %v624
  %v670 = vpack.c.b16 %v627, %v626
  %v671 = vpack.c.b16 %v629, %v628
  %v672 = vpack.c.b16 %v631, %v630
  %v673 = vpack.c.b16 %v633, %v632
  %v674 = vpack.c.b16 %v635, %v634
  %v675 = vpack.c.b16 %v637, %v636
  %v676 = vpack.c.b16 %v639, %v638
  %v677 = vpack.c.b16 %v641, %v640
  %v678 = vpack.c.b16 %v643, %v642
  %v679 = vpack.c.b16 %v645, %v644
  %v680 = vpack.c.b16 %v647, %v646
  %v681 = vpack.c.b16 %v649, %v648
  %v682 = vpack.c.b16 %v651, %v650
  %v683 = vpack.c.b16 %v653, %v652
  %v684 = vpack.c.b16 %v655, %v654
  %v685 = vpack.c.b16 %v657, %v656
  %v686 = vpack.c.b16 %v659, %v658
  %v687 = vpack.c.b16 %v661, %v660
  %v688 = vpack.c.b16 %v663, %v662
  %v689 = vpack.c.b16 %v664, %v664
  %v691 = vsel %vm202, %v665, 0
  %v694 = vsel %vm202, %v666, 0
  %v697 = vsel %vm202, %v667, 0
  %v700 = vsel %vm202, %v668, 0
  %v703 = vsel %vm202, %v669, 0
  %v706 = vsel %vm202, %v670, 0
  %v709 = vsel %vm202, %v671, 0
  %v712 = vsel %vm202, %v672, 0
  %v715 = vsel %vm202, %v673, 0
  %v718 = vsel %vm202, %v674, 0
  %v721 = vsel %vm202, %v675, 0
  %v724 = vsel %vm202, %v676, 0
  %v727 = vsel %vm202, %v677, 0
  %v730 = vsel %vm202, %v678, 0
  %v733 = vsel %vm202, %v679, 0
  %v736 = vsel %vm202, %v680, 0
  %v739 = vsel %vm202, %v681, 0
  %v742 = vsel %vm202, %v682, 0
  %v745 = vsel %vm202, %v683, 0
  %v748 = vsel %vm202, %v684, 0
  %v751 = vsel %vm202, %v685, 0
  %v754 = vsel %vm202, %v686, 0
  %v757 = vsel %vm202, %v687, 0
  %v760 = vsel %vm202, %v688, 0
  %v763 = vsel %vm202, %v689, 0
  %765 = vmatprep.subr.bf16.mxu0 0
  %766 = vmatpush1.bf16.msra.mxu0 %v199
  %767 = vmatprep.subr.bf16.mxu0 0
  %768 = vmatpush1.bf16.msra.mxu0 %v283
  %769 = vmatprep.subr.bf16.mxu0 0
  %770 = vmatpush1.bf16.msra.mxu0 0
  %771 = vmatprep.subr.bf16.mxu0 0
  %772 = vmatpush1.bf16.msra.mxu0 0
  %773 = vmatprep.subr.bf16.mxu0 0
  %774 = vmatpush1.bf16.msra.mxu0 0
  %775 = vmatprep.subr.bf16.mxu0 0
  %776 = vmatpush1.bf16.msra.mxu0 0
  %777 = vmatprep.subr.bf16.mxu0 0
  %778 = vmatpush1.bf16.msra.mxu0 0
  %779 = vmatprep.subr.bf16.mxu0 0
  %780 = vmatpush1.bf16.msra.mxu0 0
  %781 = vmatprep.subr.bf16.mxu0 0
  %782 = vmatpush1.bf16.msra.mxu0 0
  %783 = vmatprep.subr.bf16.mxu0 0
  %784 = vmatpush1.bf16.msra.mxu0 0
  %785 = vmatprep.subr.bf16.mxu0 0
  %786 = vmatpush1.bf16.msra.mxu0 0
  %787 = vmatprep.subr.bf16.mxu0 0
  %788 = vmatpush1.bf16.msra.mxu0 0
  %789 = vmatprep.subr.bf16.mxu0 0
  %790 = vmatpush1.bf16.msra.mxu0 0
  %791 = vmatprep.subr.bf16.mxu0 0
  %792 = vmatpush1.bf16.msra.mxu0 0
  %793 = vmatprep.subr.bf16.mxu0 0
  %794 = vmatpush1.bf16.msra.mxu0 0
  %795 = vmatprep.subr.bf16.mxu0 0
  %796 = vmatpush1.bf16.msra.mxu0 0
  %797 = vmatprep.mubr.bf16.mxu0 0
  %798 = vmatmul.mubr.bf16.gmra.mrb[0].mxu0 %v691
  %v799 = vpop.f32.mrb[0].mxu0
  %v800 = vadd.f32 0.0, %v799
  %v801 = vpop.f32.mrb[0].mxu0
  %v802 = vpop.f32.mrb[0].mxu0
  %v803 = vadd.f32 0.0, %v802
  %v804 = vpop.f32.mrb[0].mxu0
  %805 = vmatprep.mubr.bf16.mxu0 0
  %806 = vmatmul.mubr.bf16.gmra.mrb[0].mxu0 %v694
  %v807 = vpop.f32.mrb[0].mxu0
  %v808 = vadd.f32 0.0, %v807
  %v809 = vpop.f32.mrb[0].mxu0
  %v810 = vpop.f32.mrb[0].mxu0
  %v811 = vadd.f32 0.0, %v810
  %v812 = vpop.f32.mrb[0].mxu0
  %813 = vmatprep.mubr.bf16.mxu0 0
  %814 = vmatmul.mubr.bf16.gmra.mrb[0].mxu0 %v697
  %v815 = vpop.f32.mrb[0].mxu0
  %v816 = vadd.f32 0.0, %v815
  %v817 = vpop.f32.mrb[0].mxu0
  %v818 = vpop.f32.mrb[0].mxu0
  %v819 = vadd.f32 0.0, %v818
  %v820 = vpop.f32.mrb[0].mxu0
  %821 = vmatprep.mubr.bf16.mxu0 0
  %822 = vmatmul.mubr.bf16.gmra.mrb[0].mxu0 %v700
  %v823 = vpop.f32.mrb[0].mxu0
  %v824 = vadd.f32 0.0, %v823
  %v825 = vpop.f32.mrb[0].mxu0
  %v826 = vpop.f32.mrb[0].mxu0
  %v827 = vadd.f32 0.0, %v826
  %v828 = vpop.f32.mrb[0].mxu0
  %829 = vmatprep.mubr.bf16.mxu0 0
  %830 = vmatmul.mubr.bf16.gmra.mrb[0].mxu0 %v703
  %v831 = vpop.f32.mrb[0].mxu0
  %v832 = vadd.f32 0.0, %v831
  %v833 = vpop.f32.mrb[0].mxu0
  %v834 = vpop.f32.mrb[0].mxu0
  %v835 = vadd.f32 0.0, %v834
  %v836 = vpop.f32.mrb[0].mxu0
  %837 = vmatprep.mubr.bf16.mxu0 0
  %838 = vmatmul.mubr.bf16.gmra.mrb[0].mxu0 %v706
  %v839 = vpop.f32.mrb[0].mxu0
  %v840 = vadd.f32 0.0, %v839
  %v841 = vpop.f32.mrb[0].mxu0
  %v842 = vpop.f32.mrb[0].mxu0
  %v843 = vadd.f32 0.0, %v842
  %v844 = vpop.f32.mrb[0].mxu0
  %845 = vmatprep.mubr.bf16.mxu0 0
  %846 = vmatmul.mubr.bf16.gmra.mrb[0].mxu0 %v709
  %v847 = vpop.f32.mrb[0].mxu0
  %v848 = vadd.f32 0.0, %v847
  %v849 = vpop.f32.mrb[0].mxu0
  %v850 = vpop.f32.mrb[0].mxu0
  %v851 = vadd.f32 0.0, %v850
  %v852 = vpop.f32.mrb[0].mxu0
  %853 = vmatprep.mubr.bf16.mxu0 0
  %854 = vmatmul.mubr.bf16.gmra.mrb[0].mxu0 %v712
  %v855 = vpop.f32.mrb[0].mxu0
  %v856 = vadd.f32 0.0, %v855
  %v857 = vpop.f32.mrb[0].mxu0
  %v858 = vpop.f32.mrb[0].mxu0
  %v859 = vadd.f32 0.0, %v858
  %v860 = vpop.f32.mrb[0].mxu0
  %861 = vmatprep.mubr.bf16.mxu0 0
  %862 = vmatmul.mubr.bf16.gmra.mrb[0].mxu0 %v715
  %v863 = vpop.f32.mrb[0].mxu0
  %v864 = vadd.f32 0.0, %v863
  %v865 = vpop.f32.mrb[0].mxu0
  %v866 = vpop.f32.mrb[0].mxu0
  %v867 = vadd.f32 0.0, %v866
  %v868 = vpop.f32.mrb[0].mxu0
  %869 = vmatprep.mubr.bf16.mxu0 0
  %870 = vmatmul.mubr.bf16.gmra.mrb[0].mxu0 %v718
  %v871 = vpop.f32.mrb[0].mxu0
  %v872 = vadd.f32 0.0, %v871
  %v873 = vpop.f32.mrb[0].mxu0
  %v874 = vpop.f32.mrb[0].mxu0
  %v875 = vadd.f32 0.0, %v874
  %v876 = vpop.f32.mrb[0].mxu0
  %877 = vmatprep.mubr.bf16.mxu0 0
  %878 = vmatmul.mubr.bf16.gmra.mrb[0].mxu0 %v721
  %v879 = vpop.f32.mrb[0].mxu0
  %v880 = vadd.f32 0.0, %v879
  %v881 = vpop.f32.mrb[0].mxu0
  %v882 = vpop.f32.mrb[0].mxu0
  %v883 = vadd.f32 0.0, %v882
  %v884 = vpop.f32.mrb[0].mxu0
  %885 = vmatprep.mubr.bf16.mxu0 0
  %886 = vmatmul.mubr.bf16.gmra.mrb[0].mxu0 %v724
  %v887 = vpop.f32.mrb[0].mxu0
  %v888 = vadd.f32 0.0, %v887
  %v889 = vpop.f32.mrb[0].mxu0
  %v890 = vpop.f32.mrb[0].mxu0
  %v891 = vadd.f32 0.0, %v890
  %v892 = vpop.f32.mrb[0].mxu0
  %893 = vmatprep.mubr.bf16.mxu0 0
  %894 = vmatmul.mubr.bf16.gmra.mrb[0].mxu0 %v727
  %v895 = vpop.f32.mrb[0].mxu0
  %v896 = vadd.f32 0.0, %v895
  %v897 = vpop.f32.mrb[0].mxu0
  %v898 = vpop.f32.mrb[0].mxu0
  %v899 = vadd.f32 0.0, %v898
  %v900 = vpop.f32.mrb[0].mxu0
  %901 = vmatprep.mubr.bf16.mxu0 0
  %902 = vmatmul.mubr.bf16.gmra.mrb[0].mxu0 %v730
  %v903 = vpop.f32.mrb[0].mxu0
  %v904 = vadd.f32 0.0, %v903
  %v905 = vpop.f32.mrb[0].mxu0
  %v906 = vpop.f32.mrb[0].mxu0
  %v907 = vadd.f32 0.0, %v906
  %v908 = vpop.f32.mrb[0].mxu0
  %909 = vmatprep.mubr.bf16.mxu0 0
  %910 = vmatmul.mubr.bf16.gmra.mrb[0].mxu0 %v733
  %v911 = vpop.f32.mrb[0].mxu0
  %v912 = vadd.f32 0.0, %v911
  %v913 = vpop.f32.mrb[0].mxu0
  %v914 = vpop.f32.mrb[0].mxu0
  %v915 = vadd.f32 0.0, %v914
  %v916 = vpop.f32.mrb[0].mxu0
  %917 = vmatprep.mubr.bf16.mxu0 0
  %918 = vmatmul.mubr.bf16.gmra.mrb[0].mxu0 %v736
  %v919 = vpop.f32.mrb[0].mxu0
  %v920 = vadd.f32 0.0, %v919
  %v921 = vpop.f32.mrb[0].mxu0
  %v922 = vpop.f32.mrb[0].mxu0
  %v923 = vadd.f32 0.0, %v922
  %v924 = vpop.f32.mrb[0].mxu0
  %925 = vmatprep.mubr.bf16.mxu0 0
  %926 = vmatmul.mubr.bf16.gmra.mrb[0].mxu0 %v739
  %v927 = vpop.f32.mrb[0].mxu0
  %v928 = vadd.f32 0.0, %v927
  %v929 = vpop.f32.mrb[0].mxu0
  %v930 = vpop.f32.mrb[0].mxu0
  %v931 = vadd.f32 0.0, %v930
  %v932 = vpop.f32.mrb[0].mxu0
  %933 = vmatprep.mubr.bf16.mxu0 0
  %934 = vmatmul.mubr.bf16.gmra.mrb[0].mxu0 %v742
  %v935 = vpop.f32.mrb[0].mxu0
  %v936 = vadd.f32 0.0, %v935
  %v937 = vpop.f32.mrb[0].mxu0
  %v938 = vpop.f32.mrb[0].mxu0
  %v939 = vadd.f32 0.0, %v938
  %v940 = vpop.f32.mrb[0].mxu0
  %941 = vmatprep.mubr.bf16.mxu0 0
  %942 = vmatmul.mubr.bf16.gmra.mrb[0].mxu0 %v745
  %v943 = vpop.f32.mrb[0].mxu0
  %v944 = vadd.f32 0.0, %v943
  %v945 = vpop.f32.mrb[0].mxu0
  %v946 = vpop.f32.mrb[0].mxu0
  %v947 = vadd.f32 0.0, %v946
  %v948 = vpop.f32.mrb[0].mxu0
  %949 = vmatprep.mubr.bf16.mxu0 0
  %950 = vmatmul.mubr.bf16.gmra.mrb[0].mxu0 %v748
  %v951 = vpop.f32.mrb[0].mxu0
  %v952 = vadd.f32 0.0, %v951
  %v953 = vpop.f32.mrb[0].mxu0
  %v954 = vpop.f32.mrb[0].mxu0
  %v955 = vadd.f32 0.0, %v954
  %v956 = vpop.f32.mrb[0].mxu0
  %957 = vmatprep.mubr.bf16.mxu0 0
  %958 = vmatmul.mubr.bf16.gmra.mrb[0].mxu0 %v751
  %v959 = vpop.f32.mrb[0].mxu0
  %v960 = vadd.f32 0.0, %v959
  %v961 = vpop.f32.mrb[0].mxu0
  %v962 = vpop.f32.mrb[0].mxu0
  %v963 = vadd.f32 0.0, %v962
  %v964 = vpop.f32.mrb[0].mxu0
  %965 = vmatprep.mubr.bf16.mxu0 0
  %966 = vmatmul.mubr.bf16.gmra.mrb[0].mxu0 %v754
  %v967 = vpop.f32.mrb[0].mxu0
  %v968 = vadd.f32 0.0, %v967
  %v969 = vpop.f32.mrb[0].mxu0
  %v970 = vpop.f32.mrb[0].mxu0
  %v971 = vadd.f32 0.0, %v970
  %v972 = vpop.f32.mrb[0].mxu0
  %973 = vmatprep.mubr.bf16.mxu0 0
  %974 = vmatmul.mubr.bf16.gmra.mrb[0].mxu0 %v757
  %v975 = vpop.f32.mrb[0].mxu0
  %v976 = vadd.f32 0.0, %v975
  %v977 = vpop.f32.mrb[0].mxu0
  %v978 = vpop.f32.mrb[0].mxu0
  %v979 = vadd.f32 0.0, %v978
  %v980 = vpop.f32.mrb[0].mxu0
  %981 = vmatprep.mubr.bf16.mxu0 0
  %982 = vmatmul.mubr.bf16.gmra.mrb[0].mxu0 %v760
  %v983 = vpop.f32.mrb[0].mxu0
  %v984 = vadd.f32 0.0, %v983
  %v985 = vpop.f32.mrb[0].mxu0
  %v986 = vpop.f32.mrb[0].mxu0
  %v987 = vadd.f32 0.0, %v986
  %v988 = vpop.f32.mrb[0].mxu0
  %989 = vmatprep.mubr.bf16.mxu0 0
  %990 = vmatmul.mubr.bf16.gmra.mrb[0].mxu0 %v763
  %v991 = vpop.f32.mrb[0].mxu0
  %v992 = vadd.f32 0.0, %v991
  %v993 = vpop.f32.mrb[0].mxu0
  %v994 = vpop.f32.mrb[0].mxu0
  %v995 = vpop.f32.mrb[0].mxu0
  %996 = vdwg.mxu0
  %v997 = vmax.f32 %v320, %v800
  %v998 = vmax.f32 %v323, %v803
  %v999 = vmax.f32 %v328, %v808
  %v1000 = vmax.f32 %v331, %v811
  %v1001 = vmax.f32 %v336, %v816
  %v1002 = vmax.f32 %v339, %v819
  %v1003 = vmax.f32 %v344, %v824
  %v1004 = vmax.f32 %v347, %v827
  %v1005 = vmax.f32 %v352, %v832
  %v1006 = vmax.f32 %v355, %v835
  %v1007 = vmax.f32 %v360, %v840
  %v1008 = vmax.f32 %v363, %v843
  %v1009 = vmax.f32 %v368, %v848
  %v1010 = vmax.f32 %v371, %v851
  %v1011 = vmax.f32 %v376, %v856
  %v1012 = vmax.f32 %v379, %v859
  %v1013 = vmax.f32 %v384, %v864
  %v1014 = vmax.f32 %v387, %v867
  %v1015 = vmax.f32 %v392, %v872
  %v1016 = vmax.f32 %v395, %v875
  %v1017 = vmax.f32 %v400, %v880
  %v1018 = vmax.f32 %v403, %v883
  %v1019 = vmax.f32 %v408, %v888
  %v1020 = vmax.f32 %v411, %v891
  %v1021 = vmax.f32 %v416, %v896
  %v1022 = vmax.f32 %v419, %v899
  %v1023 = vmax.f32 %v424, %v904
  %v1024 = vmax.f32 %v427, %v907
  %v1025 = vmax.f32 %v432, %v912
  %v1026 = vmax.f32 %v435, %v915
  %v1027 = vmax.f32 %v440, %v920
  %v1028 = vmax.f32 %v443, %v923
  %v1029 = vmax.f32 %v448, %v928
  %v1030 = vmax.f32 %v451, %v931
  %v1031 = vmax.f32 %v456, %v936
  %v1032 = vmax.f32 %v459, %v939
  %v1033 = vmax.f32 %v464, %v944
  %v1034 = vmax.f32 %v467, %v947
  %v1035 = vmax.f32 %v472, %v952
  %v1036 = vmax.f32 %v475, %v955
  %v1037 = vmax.f32 %v480, %v960
  %v1038 = vmax.f32 %v483, %v963
  %v1039 = vmax.f32 %v488, %v968
  %v1040 = vmax.f32 %v491, %v971
  %v1041 = vmax.f32 %v496, %v976
  %v1042 = vmax.f32 %v499, %v979
  %v1043 = vmax.f32 %v504, %v984
  %v1044 = vmax.f32 %v507, %v987
  %v1045 = vmax.f32 %v512, %v992
  %s1046 = scalar_lea.vmem %s0, 392
  %v1047 = vld [vmem:[%s1046] sm:$0xf]
  %v1048 = vld [vmem:[%s1046 + $0x4] sm:$0xf]
  %v1049 = vld [vmem:[%s1046 + $0x8] sm:$0xf]
  %v1050 = vld [vmem:[%s1046 + $0xc] sm:$0xf]
  %v1051 = vld [vmem:[%s1046 + $0x10] sm:$0xf]
  %v1052 = vld [vmem:[%s1046 + $0x14] sm:$0xf]
  %v1053 = vld [vmem:[%s1046 + $0x18] sm:$0xf]
  %v1054 = vld [vmem:[%s1046 + $0x1c] sm:$0xf]
  %v1055 = vld [vmem:[%s1046 + $0x20] sm:$0xf]
  %v1056 = vld [vmem:[%s1046 + $0x24] sm:$0xf]
  %v1057 = vld [vmem:[%s1046 + $0x28] sm:$0xf]
  %v1058 = vld [vmem:[%s1046 + $0x2c] sm:$0xf]
  %v1059 = vld [vmem:[%s1046 + $0x30] sm:$0xf]
  %v1060 = vld [vmem:[%s1046 + $0x34] sm:$0xf]
  %v1061 = vld [vmem:[%s1046 + $0x38] sm:$0xf]
  %v1062 = vld [vmem:[%s1046 + $0x3c] sm:$0xf]
  %v1063 = vld [vmem:[%s1046 + $0x40] sm:$0xf]
  %v1064 = vld [vmem:[%s1046 + $0x44] sm:$0xf]
  %v1065 = vld [vmem:[%s1046 + $0x48] sm:$0xf]
  %v1066 = vld [vmem:[%s1046 + $0x4c] sm:$0xf]
  %v1067 = vld [vmem:[%s1046 + $0x50] sm:$0xf]
  %v1068 = vld [vmem:[%s1046 + $0x54] sm:$0xf]
  %v1069 = vld [vmem:[%s1046 + $0x58] sm:$0xf]
  %v1070 = vld [vmem:[%s1046 + $0x5c] sm:$0xf]
  %v1071 = vld [vmem:[%s1046 + $0x60] sm:$0xf]
  %v1072 = vld [vmem:[%s1046 + $0x64] sm:$0xf]
  %v1073 = vld [vmem:[%s1046 + $0x68] sm:$0xf]
  %v1074 = vld [vmem:[%s1046 + $0x6c] sm:$0xf]
  %v1075 = vld [vmem:[%s1046 + $0x70] sm:$0xf]
  %v1076 = vld [vmem:[%s1046 + $0x74] sm:$0xf]
  %v1077 = vld [vmem:[%s1046 + $0x78] sm:$0xf]
  %v1078 = vld [vmem:[%s1046 + $0x7c] sm:$0xf]
  %v1079 = vld [vmem:[%s1046 + $0x80] sm:$0xf]
  %v1080 = vld [vmem:[%s1046 + $0x84] sm:$0xf]
  %v1081 = vld [vmem:[%s1046 + $0x88] sm:$0xf]
  %v1082 = vld [vmem:[%s1046 + $0x8c] sm:$0xf]
  %v1083 = vld [vmem:[%s1046 + $0x90] sm:$0xf]
  %v1084 = vld [vmem:[%s1046 + $0x94] sm:$0xf]
  %v1085 = vld [vmem:[%s1046 + $0x98] sm:$0xf]
  %v1086 = vld [vmem:[%s1046 + $0x9c] sm:$0xf]
  %v1087 = vld [vmem:[%s1046 + $0xa0] sm:$0xf]
  %v1088 = vld [vmem:[%s1046 + $0xa4] sm:$0xf]
  %v1089 = vld [vmem:[%s1046 + $0xa8] sm:$0xf]
  %v1090 = vld [vmem:[%s1046 + $0xac] sm:$0xf]
  %v1091 = vld [vmem:[%s1046 + $0xb0] sm:$0xf]
  %v1092 = vld [vmem:[%s1046 + $0xb4] sm:$0xf]
  %v1093 = vld [vmem:[%s1046 + $0xb8] sm:$0xf]
  %v1094 = vld [vmem:[%s1046 + $0xbc] sm:$0xf]
  %v1095 = vld [vmem:[%s1046 + $0xc0] sm:$0xf]
  %v1145 = vunpack.c.l.b16 %v1047
  %v1146 = vunpack.c.l.b16 %v1048
  %v1147 = vunpack.c.l.b16 %v1049
  %v1148 = vunpack.c.l.b16 %v1050
  %v1149 = vunpack.c.l.b16 %v1051
  %v1150 = vunpack.c.l.b16 %v1052
  %v1151 = vunpack.c.l.b16 %v1053
  %v1152 = vunpack.c.l.b16 %v1054
  %v1153 = vunpack.c.l.b16 %v1055
  %v1154 = vunpack.c.l.b16 %v1056
  %v1155 = vunpack.c.l.b16 %v1057
  %v1156 = vunpack.c.l.b16 %v1058
  %v1157 = vunpack.c.l.b16 %v1059
  %v1158 = vunpack.c.l.b16 %v1060
  %v1159 = vunpack.c.l.b16 %v1061
  %v1160 = vunpack.c.l.b16 %v1062
  %v1161 = vunpack.c.l.b16 %v1063
  %v1162 = vunpack.c.l.b16 %v1064
  %v1163 = vunpack.c.l.b16 %v1065
  %v1164 = vunpack.c.l.b16 %v1066
  %v1165 = vunpack.c.l.b16 %v1067
  %v1166 = vunpack.c.l.b16 %v1068
  %v1167 = vunpack.c.l.b16 %v1069
  %v1168 = vunpack.c.l.b16 %v1070
  %v1169 = vunpack.c.l.b16 %v1071
  %v1170 = vunpack.c.l.b16 %v1072
  %v1171 = vunpack.c.l.b16 %v1073
  %v1172 = vunpack.c.l.b16 %v1074
  %v1173 = vunpack.c.l.b16 %v1075
  %v1174 = vunpack.c.l.b16 %v1076
  %v1175 = vunpack.c.l.b16 %v1077
  %v1176 = vunpack.c.l.b16 %v1078
  %v1177 = vunpack.c.l.b16 %v1079
  %v1178 = vunpack.c.l.b16 %v1080
  %v1179 = vunpack.c.l.b16 %v1081
  %v1180 = vunpack.c.l.b16 %v1082
  %v1181 = vunpack.c.l.b16 %v1083
  %v1182 = vunpack.c.l.b16 %v1084
  %v1183 = vunpack.c.l.b16 %v1085
  %v1184 = vunpack.c.l.b16 %v1086
  %v1185 = vunpack.c.l.b16 %v1087
  %v1186 = vunpack.c.l.b16 %v1088
  %v1187 = vunpack.c.l.b16 %v1089
  %v1188 = vunpack.c.l.b16 %v1090
  %v1189 = vunpack.c.l.b16 %v1091
  %v1190 = vunpack.c.l.b16 %v1092
  %v1191 = vunpack.c.l.b16 %v1093
  %v1192 = vunpack.c.l.b16 %v1094
  %v1193 = vunpack.c.l.b16 %v1095
  %v1194 = vpack.c.b16 %v1146, %v1145
  %v1195 = vpack.c.b16 %v1148, %v1147
  %v1196 = vpack.c.b16 %v1150, %v1149
  %v1197 = vpack.c.b16 %v1152, %v1151
  %v1198 = vpack.c.b16 %v1154, %v1153
  %v1199 = vpack.c.b16 %v1156, %v1155
  %v1200 = vpack.c.b16 %v1158, %v1157
  %v1201 = vpack.c.b16 %v1160, %v1159
  %v1202 = vpack.c.b16 %v1162, %v1161
  %v1203 = vpack.c.b16 %v1164, %v1163
  %v1204 = vpack.c.b16 %v1166, %v1165
  %v1205 = vpack.c.b16 %v1168, %v1167
  %v1206 = vpack.c.b16 %v1170, %v1169
  %v1207 = vpack.c.b16 %v1172, %v1171
  %v1208 = vpack.c.b16 %v1174, %v1173
  %v1209 = vpack.c.b16 %v1176, %v1175
  %v1210 = vpack.c.b16 %v1178, %v1177
  %v1211 = vpack.c.b16 %v1180, %v1179
  %v1212 = vpack.c.b16 %v1182, %v1181
  %v1213 = vpack.c.b16 %v1184, %v1183
  %v1214 = vpack.c.b16 %v1186, %v1185
  %v1215 = vpack.c.b16 %v1188, %v1187
  %v1216 = vpack.c.b16 %v1190, %v1189
  %v1217 = vpack.c.b16 %v1192, %v1191
  %v1218 = vpack.c.b16 %v1193, %v1193
  %v1220 = vsel %vm202, %v1194, 0
  %v1223 = vsel %vm202, %v1195, 0
  %v1226 = vsel %vm202, %v1196, 0
  %v1229 = vsel %vm202, %v1197, 0
  %v1232 = vsel %vm202, %v1198, 0
  %v1235 = vsel %vm202, %v1199, 0
  %v1238 = vsel %vm202, %v1200, 0
  %v1241 = vsel %vm202, %v1201, 0
  %v1244 = vsel %vm202, %v1202, 0
  %v1247 = vsel %vm202, %v1203, 0
  %v1250 = vsel %vm202, %v1204, 0
  %v1253 = vsel %vm202, %v1205, 0
  %v1256 = vsel %vm202, %v1206, 0
  %v1259 = vsel %vm202, %v1207, 0
  %v1262 = vsel %vm202, %v1208, 0
  %v1265 = vsel %vm202, %v1209, 0
  %v1268 = vsel %vm202, %v1210, 0
  %v1271 = vsel %vm202, %v1211, 0
  %v1274 = vsel %vm202, %v1212, 0
  %v1277 = vsel %vm202, %v1213, 0
  %v1280 = vsel %vm202, %v1214, 0
  %v1283 = vsel %vm202, %v1215, 0
  %v1286 = vsel %vm202, %v1216, 0
  %v1289 = vsel %vm202, %v1217, 0
  %v1292 = vsel %vm202, %v1218, 0
  %1294 = vmatprep.subr.bf16.mxu0 0
  %1295 = vmatpush1.bf16.msra.mxu0 %v199
  %1296 = vmatprep.subr.bf16.mxu0 0
  %1297 = vmatpush1.bf16.msra.mxu0 %v283
  %1298 = vmatprep.subr.bf16.mxu0 0
  %1299 = vmatpush1.bf16.msra.mxu0 0
  %1300 = vmatprep.subr.bf16.mxu0 0
  %1301 = vmatpush1.bf16.msra.mxu0 0
  %1302 = vmatprep.subr.bf16.mxu0 0
  %1303 = vmatpush1.bf16.msra.mxu0 0
  %1304 = vmatprep.subr.bf16.mxu0 0
  %1305 = vmatpush1.bf16.msra.mxu0 0
  %1306 = vmatprep.subr.bf16.mxu0 0
  %1307 = vmatpush1.bf16.msra.mxu0 0
  %1308 = vmatprep.subr.bf16.mxu0 0
  %1309 = vmatpush1.bf16.msra.mxu0 0
  %1310 = vmatprep.subr.bf16.mxu0 0
  %1311 = vmatpush1.bf16.msra.mxu0 0
  %1312 = vmatprep.subr.bf16.mxu0 0
  %1313 = vmatpush1.bf16.msra.mxu0 0
  %1314 = vmatprep.subr.bf16.mxu0 0
  %1315 = vmatpush1.bf16.msra.mxu0 0
  %1316 = vmatprep.subr.bf16.mxu0 0
  %1317 = vmatpush1.bf16.msra.mxu0 0
  %1318 = vmatprep.subr.bf16.mxu0 0
  %1319 = vmatpush1.bf16.msra.mxu0 0
  %1320 = vmatprep.subr.bf16.mxu0 0
  %1321 = vmatpush1.bf16.msra.mxu0 0
  %1322 = vmatprep.subr.bf16.mxu0 0
  %1323 = vmatpush1.bf16.msra.mxu0 0
  %1324 = vmatprep.subr.bf16.mxu0 0
  %1325 = vmatpush1.bf16.msra.mxu0 0
  %1326 = vmatprep.mubr.bf16.mxu0 0
  %1327 = vmatmul.mubr.bf16.gmra.mrb[0].mxu0 %v1220
  %v1328 = vpop.f32.mrb[0].mxu0
  %v1329 = vadd.f32 0.0, %v1328
  %v1330 = vpop.f32.mrb[0].mxu0
  %v1331 = vpop.f32.mrb[0].mxu0
  %v1332 = vadd.f32 0.0, %v1331
  %v1333 = vpop.f32.mrb[0].mxu0
  %1334 = vmatprep.mubr.bf16.mxu0 0
  %1335 = vmatmul.mubr.bf16.gmra.mrb[0].mxu0 %v1223
  %v1336 = vpop.f32.mrb[0].mxu0
  %v1337 = vadd.f32 0.0, %v1336
  %v1338 = vpop.f32.mrb[0].mxu0
  %v1339 = vpop.f32.mrb[0].mxu0
  %v1340 = vadd.f32 0.0, %v1339
  %v1341 = vpop.f32.mrb[0].mxu0
  %1342 = vmatprep.mubr.bf16.mxu0 0
  %1343 = vmatmul.mubr.bf16.gmra.mrb[0].mxu0 %v1226
  %v1344 = vpop.f32.mrb[0].mxu0
  %v1345 = vadd.f32 0.0, %v1344
  %v1346 = vpop.f32.mrb[0].mxu0
  %v1347 = vpop.f32.mrb[0].mxu0
  %v1348 = vadd.f32 0.0, %v1347
  %v1349 = vpop.f32.mrb[0].mxu0
  %1350 = vmatprep.mubr.bf16.mxu0 0
  %1351 = vmatmul.mubr.bf16.gmra.mrb[0].mxu0 %v1229
  %v1352 = vpop.f32.mrb[0].mxu0
  %v1353 = vadd.f32 0.0, %v1352
  %v1354 = vpop.f32.mrb[0].mxu0
  %v1355 = vpop.f32.mrb[0].mxu0
  %v1356 = vadd.f32 0.0, %v1355
  %v1357 = vpop.f32.mrb[0].mxu0
  %1358 = vmatprep.mubr.bf16.mxu0 0
  %1359 = vmatmul.mubr.bf16.gmra.mrb[0].mxu0 %v1232
  %v1360 = vpop.f32.mrb[0].mxu0
  %v1361 = vadd.f32 0.0, %v1360
  %v1362 = vpop.f32.mrb[0].mxu0
  %v1363 = vpop.f32.mrb[0].mxu0
  %v1364 = vadd.f32 0.0, %v1363
  %v1365 = vpop.f32.mrb[0].mxu0
  %1366 = vmatprep.mubr.bf16.mxu0 0
  %1367 = vmatmul.mubr.bf16.gmra.mrb[0].mxu0 %v1235
  %v1368 = vpop.f32.mrb[0].mxu0
  %v1369 = vadd.f32 0.0, %v1368
  %v1370 = vpop.f32.mrb[0].mxu0
  %v1371 = vpop.f32.mrb[0].mxu0
  %v1372 = vadd.f32 0.0, %v1371
  %v1373 = vpop.f32.mrb[0].mxu0
  %1374 = vmatprep.mubr.bf16.mxu0 0
  %1375 = vmatmul.mubr.bf16.gmra.mrb[0].mxu0 %v1238
  %v1376 = vpop.f32.mrb[0].mxu0
  %v1377 = vadd.f32 0.0, %v1376
  %v1378 = vpop.f32.mrb[0].mxu0
  %v1379 = vpop.f32.mrb[0].mxu0
  %v1380 = vadd.f32 0.0, %v1379
  %v1381 = vpop.f32.mrb[0].mxu0
  %1382 = vmatprep.mubr.bf16.mxu0 0
  %1383 = vmatmul.mubr.bf16.gmra.mrb[0].mxu0 %v1241
  %v1384 = vpop.f32.mrb[0].mxu0
  %v1385 = vadd.f32 0.0, %v1384
  %v1386 = vpop.f32.mrb[0].mxu0
  %v1387 = vpop.f32.mrb[0].mxu0
  %v1388 = vadd.f32 0.0, %v1387
  %v1389 = vpop.f32.mrb[0].mxu0
  %1390 = vmatprep.mubr.bf16.mxu0 0
  %1391 = vmatmul.mubr.bf16.gmra.mrb[0].mxu0 %v1244
  %v1392 = vpop.f32.mrb[0].mxu0
  %v1393 = vadd.f32 0.0, %v1392
  %v1394 = vpop.f32.mrb[0].mxu0
  %v1395 = vpop.f32.mrb[0].mxu0
  %v1396 = vadd.f32 0.0, %v1395
  %v1397 = vpop.f32.mrb[0].mxu0
  %1398 = vmatprep.mubr.bf16.mxu0 0
  %1399 = vmatmul.mubr.bf16.gmra.mrb[0].mxu0 %v1247
  %v1400 = vpop.f32.mrb[0].mxu0
  %v1401 = vadd.f32 0.0, %v1400
  %v1402 = vpop.f32.mrb[0].mxu0
  %v1403 = vpop.f32.mrb[0].mxu0
  %v1404 = vadd.f32 0.0, %v1403
  %v1405 = vpop.f32.mrb[0].mxu0
  %1406 = vmatprep.mubr.bf16.mxu0 0
  %1407 = vmatmul.mubr.bf16.gmra.mrb[0].mxu0 %v1250
  %v1408 = vpop.f32.mrb[0].mxu0
  %v1409 = vadd.f32 0.0, %v1408
  %v1410 = vpop.f32.mrb[0].mxu0
  %v1411 = vpop.f32.mrb[0].mxu0
  %v1412 = vadd.f32 0.0, %v1411
  %v1413 = vpop.f32.mrb[0].mxu0
  %1414 = vmatprep.mubr.bf16.mxu0 0
  %1415 = vmatmul.mubr.bf16.gmra.mrb[0].mxu0 %v1253
  %v1416 = vpop.f32.mrb[0].mxu0
  %v1417 = vadd.f32 0.0, %v1416
  %v1418 = vpop.f32.mrb[0].mxu0
  %v1419 = vpop.f32.mrb[0].mxu0
  %v1420 = vadd.f32 0.0, %v1419
  %v1421 = vpop.f32.mrb[0].mxu0
  %1422 = vmatprep.mubr.bf16.mxu0 0
  %1423 = vmatmul.mubr.bf16.gmra.mrb[0].mxu0 %v1256
  %v1424 = vpop.f32.mrb[0].mxu0
  %v1425 = vadd.f32 0.0, %v1424
  %v1426 = vpop.f32.mrb[0].mxu0
  %v1427 = vpop.f32.mrb[0].mxu0
  %v1428 = vadd.f32 0.0, %v1427
  %v1429 = vpop.f32.mrb[0].mxu0
  %1430 = vmatprep.mubr.bf16.mxu0 0
  %1431 = vmatmul.mubr.bf16.gmra.mrb[0].mxu0 %v1259
  %v1432 = vpop.f32.mrb[0].mxu0
  %v1433 = vadd.f32 0.0, %v1432
  %v1434 = vpop.f32.mrb[0].mxu0
  %v1435 = vpop.f32.mrb[0].mxu0
  %v1436 = vadd.f32 0.0, %v1435
  %v1437 = vpop.f32.mrb[0].mxu0
  %1438 = vmatprep.mubr.bf16.mxu0 0
  %1439 = vmatmul.mubr.bf16.gmra.mrb[0].mxu0 %v1262
  %v1440 = vpop.f32.mrb[0].mxu0
  %v1441 = vadd.f32 0.0, %v1440
  %v1442 = vpop.f32.mrb[0].mxu0
  %v1443 = vpop.f32.mrb[0].mxu0
  %v1444 = vadd.f32 0.0, %v1443
  %v1445 = vpop.f32.mrb[0].mxu0
  %1446 = vmatprep.mubr.bf16.mxu0 0
  %1447 = vmatmul.mubr.bf16.gmra.mrb[0].mxu0 %v1265
  %v1448 = vpop.f32.mrb[0].mxu0
  %v1449 = vadd.f32 0.0, %v1448
  %v1450 = vpop.f32.mrb[0].mxu0
  %v1451 = vpop.f32.mrb[0].mxu0
  %v1452 = vadd.f32 0.0, %v1451
  %v1453 = vpop.f32.mrb[0].mxu0
  %1454 = vmatprep.mubr.bf16.mxu0 0
  %1455 = vmatmul.mubr.bf16.gmra.mrb[0].mxu0 %v1268
  %v1456 = vpop.f32.mrb[0].mxu0
  %v1457 = vadd.f32 0.0, %v1456
  %v1458 = vpop.f32.mrb[0].mxu0
  %v1459 = vpop.f32.mrb[0].mxu0
  %v1460 = vadd.f32 0.0, %v1459
  %v1461 = vpop.f32.mrb[0].mxu0
  %1462 = vmatprep.mubr.bf16.mxu0 0
  %1463 = vmatmul.mubr.bf16.gmra.mrb[0].mxu0 %v1271
  %v1464 = vpop.f32.mrb[0].mxu0
  %v1465 = vadd.f32 0.0, %v1464
  %v1466 = vpop.f32.mrb[0].mxu0
  %v1467 = vpop.f32.mrb[0].mxu0
  %v1468 = vadd.f32 0.0, %v1467
  %v1469 = vpop.f32.mrb[0].mxu0
  %1470 = vmatprep.mubr.bf16.mxu0 0
  %1471 = vmatmul.mubr.bf16.gmra.mrb[0].mxu0 %v1274
  %v1472 = vpop.f32.mrb[0].mxu0
  %v1473 = vadd.f32 0.0, %v1472
  %v1474 = vpop.f32.mrb[0].mxu0
  %v1475 = vpop.f32.mrb[0].mxu0
  %v1476 = vadd.f32 0.0, %v1475
  %v1477 = vpop.f32.mrb[0].mxu0
  %1478 = vmatprep.mubr.bf16.mxu0 0
  %1479 = vmatmul.mubr.bf16.gmra.mrb[0].mxu0 %v1277
  %v1480 = vpop.f32.mrb[0].mxu0
  %v1481 = vadd.f32 0.0, %v1480
  %v1482 = vpop.f32.mrb[0].mxu0
  %v1483 = vpop.f32.mrb[0].mxu0
  %v1484 = vadd.f32 0.0, %v1483
  %v1485 = vpop.f32.mrb[0].mxu0
  %1486 = vmatprep.mubr.bf16.mxu0 0
  %1487 = vmatmul.mubr.bf16.gmra.mrb[0].mxu0 %v1280
  %v1488 = vpop.f32.mrb[0].mxu0
  %v1489 = vadd.f32 0.0, %v1488
  %v1490 = vpop.f32.mrb[0].mxu0
  %v1491 = vpop.f32.mrb[0].mxu0
  %v1492 = vadd.f32 0.0, %v1491
  %v1493 = vpop.f32.mrb[0].mxu0
  %1494 = vmatprep.mubr.bf16.mxu0 0
  %1495 = vmatmul.mubr.bf16.gmra.mrb[0].mxu0 %v1283
  %v1496 = vpop.f32.mrb[0].mxu0
  %v1497 = vadd.f32 0.0, %v1496
  %v1498 = vpop.f32.mrb[0].mxu0
  %v1499 = vpop.f32.mrb[0].mxu0
  %v1500 = vadd.f32 0.0, %v1499
  %v1501 = vpop.f32.mrb[0].mxu0
  %1502 = vmatprep.mubr.bf16.mxu0 0
  %1503 = vmatmul.mubr.bf16.gmra.mrb[0].mxu0 %v1286
  %v1504 = vpop.f32.mrb[0].mxu0
  %v1505 = vadd.f32 0.0, %v1504
  %v1506 = vpop.f32.mrb[0].mxu0
  %v1507 = vpop.f32.mrb[0].mxu0
  %v1508 = vadd.f32 0.0, %v1507
  %v1509 = vpop.f32.mrb[0].mxu0
  %1510 = vmatprep.mubr.bf16.mxu0 0
  %1511 = vmatmul.mubr.bf16.gmra.mrb[0].mxu0 %v1289
  %v1512 = vpop.f32.mrb[0].mxu0
  %v1513 = vadd.f32 0.0, %v1512
  %v1514 = vpop.f32.mrb[0].mxu0
  %v1515 = vpop.f32.mrb[0].mxu0
  %v1516 = vadd.f32 0.0, %v1515
  %v1517 = vpop.f32.mrb[0].mxu0
  %1518 = vmatprep.mubr.bf16.mxu0 0
  %1519 = vmatmul.mubr.bf16.gmra.mrb[0].mxu0 %v1292
  %v1520 = vpop.f32.mrb[0].mxu0
  %v1521 = vadd.f32 0.0, %v1520
  %v1522 = vpop.f32.mrb[0].mxu0
  %v1523 = vpop.f32.mrb[0].mxu0
  %v1524 = vpop.f32.mrb[0].mxu0
  %1525 = vdwg.mxu0
  %v1526 = vmax.f32 %v997, %v1329
  %v1527 = vmax.f32 %v998, %v1332
  %v1528 = vmax.f32 %v999, %v1337
  %v1529 = vmax.f32 %v1000, %v1340
  %v1530 = vmax.f32 %v1001, %v1345
  %v1531 = vmax.f32 %v1002, %v1348
  %v1532 = vmax.f32 %v1003, %v1353
  %v1533 = vmax.f32 %v1004, %v1356
  %v1534 = vmax.f32 %v1005, %v1361
  %v1535 = vmax.f32 %v1006, %v1364
  %v1536 = vmax.f32 %v1007, %v1369
  %v1537 = vmax.f32 %v1008, %v1372
  %v1538 = vmax.f32 %v1009, %v1377
  %v1539 = vmax.f32 %v1010, %v1380
  %v1540 = vmax.f32 %v1011, %v1385
  %v1541 = vmax.f32 %v1012, %v1388
  %v1542 = vmax.f32 %v1013, %v1393
  %v1543 = vmax.f32 %v1014, %v1396
  %v1544 = vmax.f32 %v1015, %v1401
  %v1545 = vmax.f32 %v1016, %v1404
  %v1546 = vmax.f32 %v1017, %v1409
  %v1547 = vmax.f32 %v1018, %v1412
  %v1548 = vmax.f32 %v1019, %v1417
  %v1549 = vmax.f32 %v1020, %v1420
  %v1550 = vmax.f32 %v1021, %v1425
  %v1551 = vmax.f32 %v1022, %v1428
  %v1552 = vmax.f32 %v1023, %v1433
  %v1553 = vmax.f32 %v1024, %v1436
  %v1554 = vmax.f32 %v1025, %v1441
  %v1555 = vmax.f32 %v1026, %v1444
  %v1556 = vmax.f32 %v1027, %v1449
  %v1557 = vmax.f32 %v1028, %v1452
  %v1558 = vmax.f32 %v1029, %v1457
  %v1559 = vmax.f32 %v1030, %v1460
  %v1560 = vmax.f32 %v1031, %v1465
  %v1561 = vmax.f32 %v1032, %v1468
  %v1562 = vmax.f32 %v1033, %v1473
  %v1563 = vmax.f32 %v1034, %v1476
  %v1564 = vmax.f32 %v1035, %v1481
  %v1565 = vmax.f32 %v1036, %v1484
  %v1566 = vmax.f32 %v1037, %v1489
  %v1567 = vmax.f32 %v1038, %v1492
  %v1568 = vmax.f32 %v1039, %v1497
  %v1569 = vmax.f32 %v1040, %v1500
  %v1570 = vmax.f32 %v1041, %v1505
  %v1571 = vmax.f32 %v1042, %v1508
  %v1572 = vmax.f32 %v1043, %v1513
  %v1573 = vmax.f32 %v1044, %v1516
  %v1574 = vmax.f32 %v1045, %v1521
  %s1575 = scalar_lea.vmem %s0, 588
  %v1576 = vld [vmem:[%s1575] sm:$0xf]
  %v1577 = vld [vmem:[%s1575 + $0x4] sm:$0xf]
  %v1578 = vld [vmem:[%s1575 + $0x8] sm:$0xf]
  %v1579 = vld [vmem:[%s1575 + $0xc] sm:$0xf]
  %v1580 = vld [vmem:[%s1575 + $0x10] sm:$0xf]
  %v1581 = vld [vmem:[%s1575 + $0x14] sm:$0xf]
  %v1582 = vld [vmem:[%s1575 + $0x18] sm:$0xf]
  %v1583 = vld [vmem:[%s1575 + $0x1c] sm:$0xf]
  %v1584 = vld [vmem:[%s1575 + $0x20] sm:$0xf]
  %v1585 = vld [vmem:[%s1575 + $0x24] sm:$0xf]
  %v1586 = vld [vmem:[%s1575 + $0x28] sm:$0xf]
  %v1587 = vld [vmem:[%s1575 + $0x2c] sm:$0xf]
  %v1588 = vld [vmem:[%s1575 + $0x30] sm:$0xf]
  %v1589 = vld [vmem:[%s1575 + $0x34] sm:$0xf]
  %v1590 = vld [vmem:[%s1575 + $0x38] sm:$0xf]
  %v1591 = vld [vmem:[%s1575 + $0x3c] sm:$0xf]
  %v1592 = vld [vmem:[%s1575 + $0x40] sm:$0xf]
  %v1593 = vld [vmem:[%s1575 + $0x44] sm:$0xf]
  %v1594 = vld [vmem:[%s1575 + $0x48] sm:$0xf]
  %v1595 = vld [vmem:[%s1575 + $0x4c] sm:$0xf]
  %v1596 = vld [vmem:[%s1575 + $0x50] sm:$0xf]
  %v1597 = vld [vmem:[%s1575 + $0x54] sm:$0xf]
  %v1598 = vld [vmem:[%s1575 + $0x58] sm:$0xf]
  %v1599 = vld [vmem:[%s1575 + $0x5c] sm:$0xf]
  %v1600 = vld [vmem:[%s1575 + $0x60] sm:$0xf]
  %v1601 = vld [vmem:[%s1575 + $0x64] sm:$0xf]
  %v1602 = vld [vmem:[%s1575 + $0x68] sm:$0xf]
  %v1603 = vld [vmem:[%s1575 + $0x6c] sm:$0xf]
  %v1604 = vld [vmem:[%s1575 + $0x70] sm:$0xf]
  %v1605 = vld [vmem:[%s1575 + $0x74] sm:$0xf]
  %v1606 = vld [vmem:[%s1575 + $0x78] sm:$0xf]
  %v1607 = vld [vmem:[%s1575 + $0x7c] sm:$0xf]
  %v1608 = vld [vmem:[%s1575 + $0x80] sm:$0xf]
  %v1609 = vld [vmem:[%s1575 + $0x84] sm:$0xf]
  %v1610 = vld [vmem:[%s1575 + $0x88] sm:$0xf]
  %v1611 = vld [vmem:[%s1575 + $0x8c] sm:$0xf]
  %v1612 = vld [vmem:[%s1575 + $0x90] sm:$0xf]
  %v1613 = vld [vmem:[%s1575 + $0x94] sm:$0xf]
  %v1614 = vld [vmem:[%s1575 + $0x98] sm:$0xf]
  %v1615 = vld [vmem:[%s1575 + $0x9c] sm:$0xf]
  %v1616 = vld [vmem:[%s1575 + $0xa0] sm:$0xf]
  %v1617 = vld [vmem:[%s1575 + $0xa4] sm:$0xf]
  %v1618 = vld [vmem:[%s1575 + $0xa8] sm:$0xf]
  %v1619 = vld [vmem:[%s1575 + $0xac] sm:$0xf]
  %v1620 = vld [vmem:[%s1575 + $0xb0] sm:$0xf]
  %v1621 = vld [vmem:[%s1575 + $0xb4] sm:$0xf]
  %v1622 = vld [vmem:[%s1575 + $0xb8] sm:$0xf]
  %v1623 = vld [vmem:[%s1575 + $0xbc] sm:$0xf]
  %v1624 = vld [vmem:[%s1575 + $0xc0] sm:$0xf]
  %v1674 = vunpack.c.l.b16 %v1576
  %v1675 = vunpack.c.l.b16 %v1577
  %v1676 = vunpack.c.l.b16 %v1578
  %v1677 = vunpack.c.l.b16 %v1579
  %v1678 = vunpack.c.l.b16 %v1580
  %v1679 = vunpack.c.l.b16 %v1581
  %v1680 = vunpack.c.l.b16 %v1582
  %v1681 = vunpack.c.l.b16 %v1583
  %v1682 = vunpack.c.l.b16 %v1584
  %v1683 = vunpack.c.l.b16 %v1585
  %v1684 = vunpack.c.l.b16 %v1586
  %v1685 = vunpack.c.l.b16 %v1587
  %v1686 = vunpack.c.l.b16 %v1588
  %v1687 = vunpack.c.l.b16 %v1589
  %v1688 = vunpack.c.l.b16 %v1590
  %v1689 = vunpack.c.l.b16 %v1591
  %v1690 = vunpack.c.l.b16 %v1592
  %v1691 = vunpack.c.l.b16 %v1593
  %v1692 = vunpack.c.l.b16 %v1594
  %v1693 = vunpack.c.l.b16 %v1595
  %v1694 = vunpack.c.l.b16 %v1596
  %v1695 = vunpack.c.l.b16 %v1597
  %v1696 = vunpack.c.l.b16 %v1598
  %v1697 = vunpack.c.l.b16 %v1599
  %v1698 = vunpack.c.l.b16 %v1600
  %v1699 = vunpack.c.l.b16 %v1601
  %v1700 = vunpack.c.l.b16 %v1602
  %v1701 = vunpack.c.l.b16 %v1603
  %v1702 = vunpack.c.l.b16 %v1604
  %v1703 = vunpack.c.l.b16 %v1605
  %v1704 = vunpack.c.l.b16 %v1606
  %v1705 = vunpack.c.l.b16 %v1607
  %v1706 = vunpack.c.l.b16 %v1608
  %v1707 = vunpack.c.l.b16 %v1609
  %v1708 = vunpack.c.l.b16 %v1610
  %v1709 = vunpack.c.l.b16 %v1611
  %v1710 = vunpack.c.l.b16 %v1612
  %v1711 = vunpack.c.l.b16 %v1613
  %v1712 = vunpack.c.l.b16 %v1614
  %v1713 = vunpack.c.l.b16 %v1615
  %v1714 = vunpack.c.l.b16 %v1616
  %v1715 = vunpack.c.l.b16 %v1617
  %v1716 = vunpack.c.l.b16 %v1618
  %v1717 = vunpack.c.l.b16 %v1619
  %v1718 = vunpack.c.l.b16 %v1620
  %v1719 = vunpack.c.l.b16 %v1621
  %v1720 = vunpack.c.l.b16 %v1622
  %v1721 = vunpack.c.l.b16 %v1623
  %v1722 = vunpack.c.l.b16 %v1624
  %v1723 = vpack.c.b16 %v1675, %v1674
  %v1724 = vpack.c.b16 %v1677, %v1676
  %v1725 = vpack.c.b16 %v1679, %v1678
  %v1726 = vpack.c.b16 %v1681, %v1680
  %v1727 = vpack.c.b16 %v1683, %v1682
  %v1728 = vpack.c.b16 %v1685, %v1684
  %v1729 = vpack.c.b16 %v1687, %v1686
  %v1730 = vpack.c.b16 %v1689, %v1688
  %v1731 = vpack.c.b16 %v1691, %v1690
  %v1732 = vpack.c.b16 %v1693, %v1692
  %v1733 = vpack.c.b16 %v1695, %v1694
  %v1734 = vpack.c.b16 %v1697, %v1696
  %v1735 = vpack.c.b16 %v1699, %v1698
  %v1736 = vpack.c.b16 %v1701, %v1700
  %v1737 = vpack.c.b16 %v1703, %v1702
  %v1738 = vpack.c.b16 %v1705, %v1704
  %v1739 = vpack.c.b16 %v1707, %v1706
  %v1740 = vpack.c.b16 %v1709, %v1708
  %v1741 = vpack.c.b16 %v1711, %v1710
  %v1742 = vpack.c.b16 %v1713, %v1712
  %v1743 = vpack.c.b16 %v1715, %v1714
  %v1744 = vpack.c.b16 %v1717, %v1716
  %v1745 = vpack.c.b16 %v1719, %v1718
  %v1746 = vpack.c.b16 %v1721, %v1720
  %v1747 = vpack.c.b16 %v1722, %v1722
  %v1749 = vsel %vm202, %v1723, 0
  %v1752 = vsel %vm202, %v1724, 0
  %v1755 = vsel %vm202, %v1725, 0
  %v1758 = vsel %vm202, %v1726, 0
  %v1761 = vsel %vm202, %v1727, 0
  %v1764 = vsel %vm202, %v1728, 0
  %v1767 = vsel %vm202, %v1729, 0
  %v1770 = vsel %vm202, %v1730, 0
  %v1773 = vsel %vm202, %v1731, 0
  %v1776 = vsel %vm202, %v1732, 0
  %v1779 = vsel %vm202, %v1733, 0
  %v1782 = vsel %vm202, %v1734, 0
  %v1785 = vsel %vm202, %v1735, 0
  %v1788 = vsel %vm202, %v1736, 0
  %v1791 = vsel %vm202, %v1737, 0
  %v1794 = vsel %vm202, %v1738, 0
  %v1797 = vsel %vm202, %v1739, 0
  %v1800 = vsel %vm202, %v1740, 0
  %v1803 = vsel %vm202, %v1741, 0
  %v1806 = vsel %vm202, %v1742, 0
  %v1809 = vsel %vm202, %v1743, 0
  %v1812 = vsel %vm202, %v1744, 0
  %v1815 = vsel %vm202, %v1745, 0
  %v1818 = vsel %vm202, %v1746, 0
  %v1821 = vsel %vm202, %v1747, 0
  %1823 = vmatprep.subr.bf16.mxu0 0
  %1824 = vmatpush1.bf16.msra.mxu0 %v199
  %1825 = vmatprep.subr.bf16.mxu0 0
  %1826 = vmatpush1.bf16.msra.mxu0 %v283
  %1827 = vmatprep.subr.bf16.mxu0 0
  %1828 = vmatpush1.bf16.msra.mxu0 0
  %1829 = vmatprep.subr.bf16.mxu0 0
  %1830 = vmatpush1.bf16.msra.mxu0 0
  %1831 = vmatprep.subr.bf16.mxu0 0
  %1832 = vmatpush1.bf16.msra.mxu0 0
  %1833 = vmatprep.subr.bf16.mxu0 0
  %1834 = vmatpush1.bf16.msra.mxu0 0
  %1835 = vmatprep.subr.bf16.mxu0 0
  %1836 = vmatpush1.bf16.msra.mxu0 0
  %1837 = vmatprep.subr.bf16.mxu0 0
  %1838 = vmatpush1.bf16.msra.mxu0 0
  %1839 = vmatprep.subr.bf16.mxu0 0
  %1840 = vmatpush1.bf16.msra.mxu0 0
  %1841 = vmatprep.subr.bf16.mxu0 0
  %1842 = vmatpush1.bf16.msra.mxu0 0
  %1843 = vmatprep.subr.bf16.mxu0 0
  %1844 = vmatpush1.bf16.msra.mxu0 0
  %1845 = vmatprep.subr.bf16.mxu0 0
  %1846 = vmatpush1.bf16.msra.mxu0 0
  %1847 = vmatprep.subr.bf16.mxu0 0
  %1848 = vmatpush1.bf16.msra.mxu0 0
  %1849 = vmatprep.subr.bf16.mxu0 0
  %1850 = vmatpush1.bf16.msra.mxu0 0
  %1851 = vmatprep.subr.bf16.mxu0 0
  %1852 = vmatpush1.bf16.msra.mxu0 0
  %1853 = vmatprep.subr.bf16.mxu0 0
  %1854 = vmatpush1.bf16.msra.mxu0 0
  %1855 = vmatprep.mubr.bf16.mxu0 0
  %1856 = vmatmul.mubr.bf16.gmra.mrb[0].mxu0 %v1749
  %v1857 = vpop.f32.mrb[0].mxu0
  %v1858 = vadd.f32 0.0, %v1857
  %v1859 = vpop.f32.mrb[0].mxu0
  %v1860 = vpop.f32.mrb[0].mxu0
  %v1861 = vadd.f32 0.0, %v1860
  %v1862 = vpop.f32.mrb[0].mxu0
  %1863 = vmatprep.mubr.bf16.mxu0 0
  %1864 = vmatmul.mubr.bf16.gmra.mrb[0].mxu0 %v1752
  %v1865 = vpop.f32.mrb[0].mxu0
  %v1866 = vadd.f32 0.0, %v1865
  %v1867 = vpop.f32.mrb[0].mxu0
  %v1868 = vpop.f32.mrb[0].mxu0
  %v1869 = vadd.f32 0.0, %v1868
  %v1870 = vpop.f32.mrb[0].mxu0
  %1871 = vmatprep.mubr.bf16.mxu0 0
  %1872 = vmatmul.mubr.bf16.gmra.mrb[0].mxu0 %v1755
  %v1873 = vpop.f32.mrb[0].mxu0
  %v1874 = vadd.f32 0.0, %v1873
  %v1875 = vpop.f32.mrb[0].mxu0
  %v1876 = vpop.f32.mrb[0].mxu0
  %v1877 = vadd.f32 0.0, %v1876
  %v1878 = vpop.f32.mrb[0].mxu0
  %1879 = vmatprep.mubr.bf16.mxu0 0
  %1880 = vmatmul.mubr.bf16.gmra.mrb[0].mxu0 %v1758
  %v1881 = vpop.f32.mrb[0].mxu0
  %v1882 = vadd.f32 0.0, %v1881
  %v1883 = vpop.f32.mrb[0].mxu0
  %v1884 = vpop.f32.mrb[0].mxu0
  %v1885 = vadd.f32 0.0, %v1884
  %v1886 = vpop.f32.mrb[0].mxu0
  %1887 = vmatprep.mubr.bf16.mxu0 0
  %1888 = vmatmul.mubr.bf16.gmra.mrb[0].mxu0 %v1761
  %v1889 = vpop.f32.mrb[0].mxu0
  %v1890 = vadd.f32 0.0, %v1889
  %v1891 = vpop.f32.mrb[0].mxu0
  %v1892 = vpop.f32.mrb[0].mxu0
  %v1893 = vadd.f32 0.0, %v1892
  %v1894 = vpop.f32.mrb[0].mxu0
  %1895 = vmatprep.mubr.bf16.mxu0 0
  %1896 = vmatmul.mubr.bf16.gmra.mrb[0].mxu0 %v1764
  %v1897 = vpop.f32.mrb[0].mxu0
  %v1898 = vadd.f32 0.0, %v1897
  %v1899 = vpop.f32.mrb[0].mxu0
  %v1900 = vpop.f32.mrb[0].mxu0
  %v1901 = vadd.f32 0.0, %v1900
  %v1902 = vpop.f32.mrb[0].mxu0
  %1903 = vmatprep.mubr.bf16.mxu0 0
  %1904 = vmatmul.mubr.bf16.gmra.mrb[0].mxu0 %v1767
  %v1905 = vpop.f32.mrb[0].mxu0
  %v1906 = vadd.f32 0.0, %v1905
  %v1907 = vpop.f32.mrb[0].mxu0
  %v1908 = vpop.f32.mrb[0].mxu0
  %v1909 = vadd.f32 0.0, %v1908
  %v1910 = vpop.f32.mrb[0].mxu0
  %1911 = vmatprep.mubr.bf16.mxu0 0
  %1912 = vmatmul.mubr.bf16.gmra.mrb[0].mxu0 %v1770
  %v1913 = vpop.f32.mrb[0].mxu0
  %v1914 = vadd.f32 0.0, %v1913
  %v1915 = vpop.f32.mrb[0].mxu0
  %v1916 = vpop.f32.mrb[0].mxu0
  %v1917 = vadd.f32 0.0, %v1916
  %v1918 = vpop.f32.mrb[0].mxu0
  %1919 = vmatprep.mubr.bf16.mxu0 0
  %1920 = vmatmul.mubr.bf16.gmra.mrb[0].mxu0 %v1773
  %v1921 = vpop.f32.mrb[0].mxu0
  %v1922 = vadd.f32 0.0, %v1921
  %v1923 = vpop.f32.mrb[0].mxu0
  %v1924 = vpop.f32.mrb[0].mxu0
  %v1925 = vadd.f32 0.0, %v1924
  %v1926 = vpop.f32.mrb[0].mxu0
  %1927 = vmatprep.mubr.bf16.mxu0 0
  %1928 = vmatmul.mubr.bf16.gmra.mrb[0].mxu0 %v1776
  %v1929 = vpop.f32.mrb[0].mxu0
  %v1930 = vadd.f32 0.0, %v1929
  %v1931 = vpop.f32.mrb[0].mxu0
  %v1932 = vpop.f32.mrb[0].mxu0
  %v1933 = vadd.f32 0.0, %v1932
  %v1934 = vpop.f32.mrb[0].mxu0
  %1935 = vmatprep.mubr.bf16.mxu0 0
  %1936 = vmatmul.mubr.bf16.gmra.mrb[0].mxu0 %v1779
  %v1937 = vpop.f32.mrb[0].mxu0
  %v1938 = vadd.f32 0.0, %v1937
  %v1939 = vpop.f32.mrb[0].mxu0
  %v1940 = vpop.f32.mrb[0].mxu0
  %v1941 = vadd.f32 0.0, %v1940
  %v1942 = vpop.f32.mrb[0].mxu0
  %1943 = vmatprep.mubr.bf16.mxu0 0
  %1944 = vmatmul.mubr.bf16.gmra.mrb[0].mxu0 %v1782
  %v1945 = vpop.f32.mrb[0].mxu0
  %v1946 = vadd.f32 0.0, %v1945
  %v1947 = vpop.f32.mrb[0].mxu0
  %v1948 = vpop.f32.mrb[0].mxu0
  %v1949 = vadd.f32 0.0, %v1948
  %v1950 = vpop.f32.mrb[0].mxu0
  %1951 = vmatprep.mubr.bf16.mxu0 0
  %1952 = vmatmul.mubr.bf16.gmra.mrb[0].mxu0 %v1785
  %v1953 = vpop.f32.mrb[0].mxu0
  %v1954 = vadd.f32 0.0, %v1953
  %v1955 = vpop.f32.mrb[0].mxu0
  %v1956 = vpop.f32.mrb[0].mxu0
  %v1957 = vadd.f32 0.0, %v1956
  %v1958 = vpop.f32.mrb[0].mxu0
  %1959 = vmatprep.mubr.bf16.mxu0 0
  %1960 = vmatmul.mubr.bf16.gmra.mrb[0].mxu0 %v1788
  %v1961 = vpop.f32.mrb[0].mxu0
  %v1962 = vadd.f32 0.0, %v1961
  %v1963 = vpop.f32.mrb[0].mxu0
  %v1964 = vpop.f32.mrb[0].mxu0
  %v1965 = vadd.f32 0.0, %v1964
  %v1966 = vpop.f32.mrb[0].mxu0
  %1967 = vmatprep.mubr.bf16.mxu0 0
  %1968 = vmatmul.mubr.bf16.gmra.mrb[0].mxu0 %v1791
  %v1969 = vpop.f32.mrb[0].mxu0
  %v1970 = vadd.f32 0.0, %v1969
  %v1971 = vpop.f32.mrb[0].mxu0
  %v1972 = vpop.f32.mrb[0].mxu0
  %v1973 = vadd.f32 0.0, %v1972
  %v1974 = vpop.f32.mrb[0].mxu0
  %1975 = vmatprep.mubr.bf16.mxu0 0
  %1976 = vmatmul.mubr.bf16.gmra.mrb[0].mxu0 %v1794
  %v1977 = vpop.f32.mrb[0].mxu0
  %v1978 = vadd.f32 0.0, %v1977
  %v1979 = vpop.f32.mrb[0].mxu0
  %v1980 = vpop.f32.mrb[0].mxu0
  %v1981 = vadd.f32 0.0, %v1980
  %v1982 = vpop.f32.mrb[0].mxu0
  %1983 = vmatprep.mubr.bf16.mxu0 0
  %1984 = vmatmul.mubr.bf16.gmra.mrb[0].mxu0 %v1797
  %v1985 = vpop.f32.mrb[0].mxu0
  %v1986 = vadd.f32 0.0, %v1985
  %v1987 = vpop.f32.mrb[0].mxu0
  %v1988 = vpop.f32.mrb[0].mxu0
  %v1989 = vadd.f32 0.0, %v1988
  %v1990 = vpop.f32.mrb[0].mxu0
  %1991 = vmatprep.mubr.bf16.mxu0 0
  %1992 = vmatmul.mubr.bf16.gmra.mrb[0].mxu0 %v1800
  %v1993 = vpop.f32.mrb[0].mxu0
  %v1994 = vadd.f32 0.0, %v1993
  %v1995 = vpop.f32.mrb[0].mxu0
  %v1996 = vpop.f32.mrb[0].mxu0
  %v1997 = vadd.f32 0.0, %v1996
  %v1998 = vpop.f32.mrb[0].mxu0
  %1999 = vmatprep.mubr.bf16.mxu0 0
  %2000 = vmatmul.mubr.bf16.gmra.mrb[0].mxu0 %v1803
  %v2001 = vpop.f32.mrb[0].mxu0
  %v2002 = vadd.f32 0.0, %v2001
  %v2003 = vpop.f32.mrb[0].mxu0
  %v2004 = vpop.f32.mrb[0].mxu0
  %v2005 = vadd.f32 0.0, %v2004
  %v2006 = vpop.f32.mrb[0].mxu0
  %2007 = vmatprep.mubr.bf16.mxu0 0
  %2008 = vmatmul.mubr.bf16.gmra.mrb[0].mxu0 %v1806
  %v2009 = vpop.f32.mrb[0].mxu0
  %v2010 = vadd.f32 0.0, %v2009
  %v2011 = vpop.f32.mrb[0].mxu0
  %v2012 = vpop.f32.mrb[0].mxu0
  %v2013 = vadd.f32 0.0, %v2012
  %v2014 = vpop.f32.mrb[0].mxu0
  %2015 = vmatprep.mubr.bf16.mxu0 0
  %2016 = vmatmul.mubr.bf16.gmra.mrb[0].mxu0 %v1809
  %v2017 = vpop.f32.mrb[0].mxu0
  %v2018 = vadd.f32 0.0, %v2017
  %v2019 = vpop.f32.mrb[0].mxu0
  %v2020 = vpop.f32.mrb[0].mxu0
  %v2021 = vadd.f32 0.0, %v2020
  %v2022 = vpop.f32.mrb[0].mxu0
  %2023 = vmatprep.mubr.bf16.mxu0 0
  %2024 = vmatmul.mubr.bf16.gmra.mrb[0].mxu0 %v1812
  %v2025 = vpop.f32.mrb[0].mxu0
  %v2026 = vadd.f32 0.0, %v2025
  %v2027 = vpop.f32.mrb[0].mxu0
  %v2028 = vpop.f32.mrb[0].mxu0
  %v2029 = vadd.f32 0.0, %v2028
  %v2030 = vpop.f32.mrb[0].mxu0
  %2031 = vmatprep.mubr.bf16.mxu0 0
  %2032 = vmatmul.mubr.bf16.gmra.mrb[0].mxu0 %v1815
  %v2033 = vpop.f32.mrb[0].mxu0
  %v2034 = vadd.f32 0.0, %v2033
  %v2035 = vpop.f32.mrb[0].mxu0
  %v2036 = vpop.f32.mrb[0].mxu0
  %v2037 = vadd.f32 0.0, %v2036
  %v2038 = vpop.f32.mrb[0].mxu0
  %2039 = vmatprep.mubr.bf16.mxu0 0
  %2040 = vmatmul.mubr.bf16.gmra.mrb[0].mxu0 %v1818
  %v2041 = vpop.f32.mrb[0].mxu0
  %v2042 = vadd.f32 0.0, %v2041
  %v2043 = vpop.f32.mrb[0].mxu0
  %v2044 = vpop.f32.mrb[0].mxu0
  %v2045 = vadd.f32 0.0, %v2044
  %v2046 = vpop.f32.mrb[0].mxu0
  %2047 = vmatprep.mubr.bf16.mxu0 0
  %2048 = vmatmul.mubr.bf16.gmra.mrb[0].mxu0 %v1821
  %v2049 = vpop.f32.mrb[0].mxu0
  %v2050 = vadd.f32 0.0, %v2049
  %v2051 = vpop.f32.mrb[0].mxu0
  %v2052 = vpop.f32.mrb[0].mxu0
  %v2053 = vpop.f32.mrb[0].mxu0
  %2054 = vdwg.mxu0
  %v2055 = vmax.f32 %v1526, %v1858
  %v2056 = vmax.f32 %v1527, %v1861
  %v2057 = vmax.f32 %v1528, %v1866
  %v2058 = vmax.f32 %v1529, %v1869
  %v2059 = vmax.f32 %v1530, %v1874
  %v2060 = vmax.f32 %v1531, %v1877
  %v2061 = vmax.f32 %v1532, %v1882
  %v2062 = vmax.f32 %v1533, %v1885
  %v2063 = vmax.f32 %v1534, %v1890
  %v2064 = vmax.f32 %v1535, %v1893
  %v2065 = vmax.f32 %v1536, %v1898
  %v2066 = vmax.f32 %v1537, %v1901
  %v2067 = vmax.f32 %v1538, %v1906
  %v2068 = vmax.f32 %v1539, %v1909
  %v2069 = vmax.f32 %v1540, %v1914
  %v2070 = vmax.f32 %v1541, %v1917
  %v2071 = vmax.f32 %v1542, %v1922
  %v2072 = vmax.f32 %v1543, %v1925
  %v2073 = vmax.f32 %v1544, %v1930
  %v2074 = vmax.f32 %v1545, %v1933
  %v2075 = vmax.f32 %v1546, %v1938
  %v2076 = vmax.f32 %v1547, %v1941
  %v2077 = vmax.f32 %v1548, %v1946
  %v2078 = vmax.f32 %v1549, %v1949
  %v2079 = vmax.f32 %v1550, %v1954
  %v2080 = vmax.f32 %v1551, %v1957
  %v2081 = vmax.f32 %v1552, %v1962
  %v2082 = vmax.f32 %v1553, %v1965
  %v2083 = vmax.f32 %v1554, %v1970
  %v2084 = vmax.f32 %v1555, %v1973
  %v2085 = vmax.f32 %v1556, %v1978
  %v2086 = vmax.f32 %v1557, %v1981
  %v2087 = vmax.f32 %v1558, %v1986
  %v2088 = vmax.f32 %v1559, %v1989
  %v2089 = vmax.f32 %v1560, %v1994
  %v2090 = vmax.f32 %v1561, %v1997
  %v2091 = vmax.f32 %v1562, %v2002
  %v2092 = vmax.f32 %v1563, %v2005
  %v2093 = vmax.f32 %v1564, %v2010
  %v2094 = vmax.f32 %v1565, %v2013
  %v2095 = vmax.f32 %v1566, %v2018
  %v2096 = vmax.f32 %v1567, %v2021
  %v2097 = vmax.f32 %v1568, %v2026
  %v2098 = vmax.f32 %v1569, %v2029
  %v2099 = vmax.f32 %v1570, %v2034
  %v2100 = vmax.f32 %v1571, %v2037
  %v2101 = vmax.f32 %v1572, %v2042
  %v2102 = vmax.f32 %v1573, %v2045
  %v2103 = vmax.f32 %v1574, %v2050
  %v2104 = vld [vmem:[%s2] sm:$0x1]
  %v2106 = vlaneseq
  %v2107 = vshrl.u32 %v2106, 7
  %v2108 = vsub.s32 0, %v2107
  %v2109 = vrot.slane %v2104, %v2108
  %v2111 = vadd.f32 %v2055, %v2109
  %v2112 = vadd.f32 %v2056, %v2109
  %v2113 = vadd.f32 %v2057, %v2109
  %v2114 = vadd.f32 %v2058, %v2109
  %v2115 = vadd.f32 %v2059, %v2109
  %v2116 = vadd.f32 %v2060, %v2109
  %v2117 = vadd.f32 %v2061, %v2109
  %v2118 = vadd.f32 %v2062, %v2109
  %v2119 = vadd.f32 %v2063, %v2109
  %v2120 = vadd.f32 %v2064, %v2109
  %v2121 = vadd.f32 %v2065, %v2109
  %v2122 = vadd.f32 %v2066, %v2109
  %v2123 = vadd.f32 %v2067, %v2109
  %v2124 = vadd.f32 %v2068, %v2109
  %v2125 = vadd.f32 %v2069, %v2109
  %v2126 = vadd.f32 %v2070, %v2109
  %v2127 = vadd.f32 %v2071, %v2109
  %v2128 = vadd.f32 %v2072, %v2109
  %v2129 = vadd.f32 %v2073, %v2109
  %v2130 = vadd.f32 %v2074, %v2109
  %v2131 = vadd.f32 %v2075, %v2109
  %v2132 = vadd.f32 %v2076, %v2109
  %v2133 = vadd.f32 %v2077, %v2109
  %v2134 = vadd.f32 %v2078, %v2109
  %v2135 = vadd.f32 %v2079, %v2109
  %v2136 = vadd.f32 %v2080, %v2109
  %v2137 = vadd.f32 %v2081, %v2109
  %v2138 = vadd.f32 %v2082, %v2109
  %v2139 = vadd.f32 %v2083, %v2109
  %v2140 = vadd.f32 %v2084, %v2109
  %v2141 = vadd.f32 %v2085, %v2109
  %v2142 = vadd.f32 %v2086, %v2109
  %v2143 = vadd.f32 %v2087, %v2109
  %v2144 = vadd.f32 %v2088, %v2109
  %v2145 = vadd.f32 %v2089, %v2109
  %v2146 = vadd.f32 %v2090, %v2109
  %v2147 = vadd.f32 %v2091, %v2109
  %v2148 = vadd.f32 %v2092, %v2109
  %v2149 = vadd.f32 %v2093, %v2109
  %v2150 = vadd.f32 %v2094, %v2109
  %v2151 = vadd.f32 %v2095, %v2109
  %v2152 = vadd.f32 %v2096, %v2109
  %v2153 = vadd.f32 %v2097, %v2109
  %v2154 = vadd.f32 %v2098, %v2109
  %v2155 = vadd.f32 %v2099, %v2109
  %v2156 = vadd.f32 %v2100, %v2109
  %v2157 = vadd.f32 %v2101, %v2109
  %v2158 = vadd.f32 %v2102, %v2109
  %v2159 = vadd.f32 %v2103, %v2109
  %v2160 = vmax.f32 %v2111, 0.0
  %v2161 = vmax.f32 %v2112, 0.0
  %v2162 = vmax.f32 %v2113, 0.0
  %v2163 = vmax.f32 %v2114, 0.0
  %v2164 = vmax.f32 %v2115, 0.0
  %v2165 = vmax.f32 %v2116, 0.0
  %v2166 = vmax.f32 %v2117, 0.0
  %v2167 = vmax.f32 %v2118, 0.0
  %v2168 = vmax.f32 %v2119, 0.0
  %v2169 = vmax.f32 %v2120, 0.0
  %v2170 = vmax.f32 %v2121, 0.0
  %v2171 = vmax.f32 %v2122, 0.0
  %v2172 = vmax.f32 %v2123, 0.0
  %v2173 = vmax.f32 %v2124, 0.0
  %v2174 = vmax.f32 %v2125, 0.0
  %v2175 = vmax.f32 %v2126, 0.0
  %v2176 = vmax.f32 %v2127, 0.0
  %v2177 = vmax.f32 %v2128, 0.0
  %v2178 = vmax.f32 %v2129, 0.0
  %v2179 = vmax.f32 %v2130, 0.0
  %v2180 = vmax.f32 %v2131, 0.0
  %v2181 = vmax.f32 %v2132, 0.0
  %v2182 = vmax.f32 %v2133, 0.0
  %v2183 = vmax.f32 %v2134, 0.0
  %v2184 = vmax.f32 %v2135, 0.0
  %v2185 = vmax.f32 %v2136, 0.0
  %v2186 = vmax.f32 %v2137, 0.0
  %v2187 = vmax.f32 %v2138, 0.0
  %v2188 = vmax.f32 %v2139, 0.0
  %v2189 = vmax.f32 %v2140, 0.0
  %v2190 = vmax.f32 %v2141, 0.0
  %v2191 = vmax.f32 %v2142, 0.0
  %v2192 = vmax.f32 %v2143, 0.0
  %v2193 = vmax.f32 %v2144, 0.0
  %v2194 = vmax.f32 %v2145, 0.0
  %v2195 = vmax.f32 %v2146, 0.0
  %v2196 = vmax.f32 %v2147, 0.0
  %v2197 = vmax.f32 %v2148, 0.0
  %v2198 = vmax.f32 %v2149, 0.0
  %v2199 = vmax.f32 %v2150, 0.0
  %v2200 = vmax.f32 %v2151, 0.0
  %v2201 = vmax.f32 %v2152, 0.0
  %v2202 = vmax.f32 %v2153, 0.0
  %v2203 = vmax.f32 %v2154, 0.0
  %v2204 = vmax.f32 %v2155, 0.0
  %v2205 = vmax.f32 %v2156, 0.0
  %v2206 = vmax.f32 %v2157, 0.0
  %v2207 = vmax.f32 %v2158, 0.0
  %v2208 = vmax.f32 %v2159, 0.0
  %v2209 = vpack.c.bf16 %v2161, %v2160
  %v2210 = vpack.c.bf16 %v2163, %v2162
  %v2211 = vpack.c.bf16 %v2165, %v2164
  %v2212 = vpack.c.bf16 %v2167, %v2166
  %v2213 = vpack.c.bf16 %v2169, %v2168
  %v2214 = vpack.c.bf16 %v2171, %v2170
  %v2215 = vpack.c.bf16 %v2173, %v2172
  %v2216 = vpack.c.bf16 %v2175, %v2174
  %v2217 = vpack.c.bf16 %v2177, %v2176
  %v2218 = vpack.c.bf16 %v2179, %v2178
  %v2219 = vpack.c.bf16 %v2181, %v2180
  %v2220 = vpack.c.bf16 %v2183, %v2182
  %v2221 = vpack.c.bf16 %v2185, %v2184
  %v2222 = vpack.c.bf16 %v2187, %v2186
  %v2223 = vpack.c.bf16 %v2189, %v2188
  %v2224 = vpack.c.bf16 %v2191, %v2190
  %v2225 = vpack.c.bf16 %v2193, %v2192
  %v2226 = vpack.c.bf16 %v2195, %v2194
  %v2227 = vpack.c.bf16 %v2197, %v2196
  %v2228 = vpack.c.bf16 %v2199, %v2198
  %v2229 = vpack.c.bf16 %v2201, %v2200
  %v2230 = vpack.c.bf16 %v2203, %v2202
  %v2231 = vpack.c.bf16 %v2205, %v2204
  %v2232 = vpack.c.bf16 %v2207, %v2206
  %v2233 = vpack.c.bf16 %v2208, %v2208
  %v2259 = vunpack.c.l.b16 %v2209
  %v2260 = vunpack.c.h.b16 %v2209
  %v2261 = vunpack.c.l.b16 %v2210
  %v2262 = vunpack.c.h.b16 %v2210
  %v2263 = vunpack.c.l.b16 %v2211
  %v2264 = vunpack.c.h.b16 %v2211
  %v2265 = vunpack.c.l.b16 %v2212
  %v2266 = vunpack.c.h.b16 %v2212
  %v2267 = vunpack.c.l.b16 %v2213
  %v2268 = vunpack.c.h.b16 %v2213
  %v2269 = vunpack.c.l.b16 %v2214
  %v2270 = vunpack.c.h.b16 %v2214
  %v2271 = vunpack.c.l.b16 %v2215
  %v2272 = vunpack.c.h.b16 %v2215
  %v2273 = vunpack.c.l.b16 %v2216
  %v2274 = vunpack.c.h.b16 %v2216
  %v2275 = vunpack.c.l.b16 %v2217
  %v2276 = vunpack.c.h.b16 %v2217
  %v2277 = vunpack.c.l.b16 %v2218
  %v2278 = vunpack.c.h.b16 %v2218
  %v2279 = vunpack.c.l.b16 %v2219
  %v2280 = vunpack.c.h.b16 %v2219
  %v2281 = vunpack.c.l.b16 %v2220
  %v2282 = vunpack.c.h.b16 %v2220
  %v2283 = vunpack.c.l.b16 %v2221
  %v2284 = vunpack.c.h.b16 %v2221
  %v2285 = vunpack.c.l.b16 %v2222
  %v2286 = vunpack.c.h.b16 %v2222
  %v2287 = vunpack.c.l.b16 %v2223
  %v2288 = vunpack.c.h.b16 %v2223
  %v2289 = vunpack.c.l.b16 %v2224
  %v2290 = vunpack.c.h.b16 %v2224
  %v2291 = vunpack.c.l.b16 %v2225
  %v2292 = vunpack.c.h.b16 %v2225
  %v2293 = vunpack.c.l.b16 %v2226
  %v2294 = vunpack.c.h.b16 %v2226
  %v2295 = vunpack.c.l.b16 %v2227
  %v2296 = vunpack.c.h.b16 %v2227
  %v2297 = vunpack.c.l.b16 %v2228
  %v2298 = vunpack.c.h.b16 %v2228
  %v2299 = vunpack.c.l.b16 %v2229
  %v2300 = vunpack.c.h.b16 %v2229
  %v2301 = vunpack.c.l.b16 %v2230
  %v2302 = vunpack.c.h.b16 %v2230
  %v2303 = vunpack.c.l.b16 %v2231
  %v2304 = vunpack.c.h.b16 %v2231
  %v2305 = vunpack.c.l.b16 %v2232
  %v2306 = vunpack.c.h.b16 %v2232
  %v2307 = vunpack.c.l.b16 %v2233
  %v2308 = vpack.c.b16 %v2259, %v2259
  %v2309 = vpack.c.b16 %v2260, %v2260
  %v2310 = vpack.c.b16 %v2261, %v2261
  %v2311 = vpack.c.b16 %v2262, %v2262
  %v2312 = vpack.c.b16 %v2263, %v2263
  %v2313 = vpack.c.b16 %v2264, %v2264
  %v2314 = vpack.c.b16 %v2265, %v2265
  %v2315 = vpack.c.b16 %v2266, %v2266
  %v2316 = vpack.c.b16 %v2267, %v2267
  %v2317 = vpack.c.b16 %v2268, %v2268
  %v2318 = vpack.c.b16 %v2269, %v2269
  %v2319 = vpack.c.b16 %v2270, %v2270
  %v2320 = vpack.c.b16 %v2271, %v2271
  %v2321 = vpack.c.b16 %v2272, %v2272
  %v2322 = vpack.c.b16 %v2273, %v2273
  %v2323 = vpack.c.b16 %v2274, %v2274
  %v2324 = vpack.c.b16 %v2275, %v2275
  %v2325 = vpack.c.b16 %v2276, %v2276
  %v2326 = vpack.c.b16 %v2277, %v2277
  %v2327 = vpack.c.b16 %v2278, %v2278
  %v2328 = vpack.c.b16 %v2279, %v2279
  %v2329 = vpack.c.b16 %v2280, %v2280
  %v2330 = vpack.c.b16 %v2281, %v2281
  %v2331 = vpack.c.b16 %v2282, %v2282
  %v2332 = vpack.c.b16 %v2283, %v2283
  %v2333 = vpack.c.b16 %v2284, %v2284
  %v2334 = vpack.c.b16 %v2285, %v2285
  %v2335 = vpack.c.b16 %v2286, %v2286
  %v2336 = vpack.c.b16 %v2287, %v2287
  %v2337 = vpack.c.b16 %v2288, %v2288
  %v2338 = vpack.c.b16 %v2289, %v2289
  %v2339 = vpack.c.b16 %v2290, %v2290
  %v2340 = vpack.c.b16 %v2291, %v2291
  %v2341 = vpack.c.b16 %v2292, %v2292
  %v2342 = vpack.c.b16 %v2293, %v2293
  %v2343 = vpack.c.b16 %v2294, %v2294
  %v2344 = vpack.c.b16 %v2295, %v2295
  %v2345 = vpack.c.b16 %v2296, %v2296
  %v2346 = vpack.c.b16 %v2297, %v2297
  %v2347 = vpack.c.b16 %v2298, %v2298
  %v2348 = vpack.c.b16 %v2299, %v2299
  %v2349 = vpack.c.b16 %v2300, %v2300
  %v2350 = vpack.c.b16 %v2301, %v2301
  %v2351 = vpack.c.b16 %v2302, %v2302
  %v2352 = vpack.c.b16 %v2303, %v2303
  %v2353 = vpack.c.b16 %v2304, %v2304
  %v2354 = vpack.c.b16 %v2305, %v2305
  %v2355 = vpack.c.b16 %v2306, %v2306
  %v2356 = vpack.c.b16 %v2307, %v2307
  %2406 = vst [vmem:[%s3] sm:$0xf] %v2308
  %2407 = vst [vmem:[%s3 + $0x4] sm:$0xf] %v2309
  %2408 = vst [vmem:[%s3 + $0x8] sm:$0xf] %v2310
  %2409 = vst [vmem:[%s3 + $0xc] sm:$0xf] %v2311
  %2410 = vst [vmem:[%s3 + $0x10] sm:$0xf] %v2312
  %2411 = vst [vmem:[%s3 + $0x14] sm:$0xf] %v2313
  %2412 = vst [vmem:[%s3 + $0x18] sm:$0xf] %v2314
  %2413 = vst [vmem:[%s3 + $0x1c] sm:$0xf] %v2315
  %2414 = vst [vmem:[%s3 + $0x20] sm:$0xf] %v2316
  %2415 = vst [vmem:[%s3 + $0x24] sm:$0xf] %v2317
  %2416 = vst [vmem:[%s3 + $0x28] sm:$0xf] %v2318
  %2417 = vst [vmem:[%s3 + $0x2c] sm:$0xf] %v2319
  %2418 = vst [vmem:[%s3 + $0x30] sm:$0xf] %v2320
  %2419 = vst [vmem:[%s3 + $0x34] sm:$0xf] %v2321
  %2420 = vst [vmem:[%s3 + $0x38] sm:$0xf] %v2322
  %2421 = vst [vmem:[%s3 + $0x3c] sm:$0xf] %v2323
  %2422 = vst [vmem:[%s3 + $0x40] sm:$0xf] %v2324
  %2423 = vst [vmem:[%s3 + $0x44] sm:$0xf] %v2325
  %2424 = vst [vmem:[%s3 + $0x48] sm:$0xf] %v2326
  %2425 = vst [vmem:[%s3 + $0x4c] sm:$0xf] %v2327
  %2426 = vst [vmem:[%s3 + $0x50] sm:$0xf] %v2328
  %2427 = vst [vmem:[%s3 + $0x54] sm:$0xf] %v2329
  %2428 = vst [vmem:[%s3 + $0x58] sm:$0xf] %v2330
  %2429 = vst [vmem:[%s3 + $0x5c] sm:$0xf] %v2331
  %2430 = vst [vmem:[%s3 + $0x60] sm:$0xf] %v2332
  %2431 = vst [vmem:[%s3 + $0x64] sm:$0xf] %v2333
  %2432 = vst [vmem:[%s3 + $0x68] sm:$0xf] %v2334
  %2433 = vst [vmem:[%s3 + $0x6c] sm:$0xf] %v2335
  %2434 = vst [vmem:[%s3 + $0x70] sm:$0xf] %v2336
  %2435 = vst [vmem:[%s3 + $0x74] sm:$0xf] %v2337
  %2436 = vst [vmem:[%s3 + $0x78] sm:$0xf] %v2338
  %2437 = vst [vmem:[%s3 + $0x7c] sm:$0xf] %v2339
  %2438 = vst [vmem:[%s3 + $0x80] sm:$0xf] %v2340
  %2439 = vst [vmem:[%s3 + $0x84] sm:$0xf] %v2341
  %2440 = vst [vmem:[%s3 + $0x88] sm:$0xf] %v2342
  %2441 = vst [vmem:[%s3 + $0x8c] sm:$0xf] %v2343
  %2442 = vst [vmem:[%s3 + $0x90] sm:$0xf] %v2344
  %2443 = vst [vmem:[%s3 + $0x94] sm:$0xf] %v2345
  %2444 = vst [vmem:[%s3 + $0x98] sm:$0xf] %v2346
  %2445 = vst [vmem:[%s3 + $0x9c] sm:$0xf] %v2347
  %2446 = vst [vmem:[%s3 + $0xa0] sm:$0xf] %v2348
  %2447 = vst [vmem:[%s3 + $0xa4] sm:$0xf] %v2349
  %2448 = vst [vmem:[%s3 + $0xa8] sm:$0xf] %v2350
  %2449 = vst [vmem:[%s3 + $0xac] sm:$0xf] %v2351
  %2450 = vst [vmem:[%s3 + $0xb0] sm:$0xf] %v2352
  %2451 = vst [vmem:[%s3 + $0xb4] sm:$0xf] %v2353
  %2452 = vst [vmem:[%s3 + $0xb8] sm:$0xf] %v2354
  %2453 = vst [vmem:[%s3 + $0xbc] sm:$0xf] %v2355
  %2454 = vst [vmem:[%s3 + $0xc0] sm:$0xf] %v2356
  // Predicated region
  $region14: #{extended_cnn_forward.4} parent=0 // pred_check
    _
  $region15: #{extended_cnn_forward.4} parent=0 // pred_check_branch
    %2456 = sbr.rel (0) target = $region17
  $region16: #{extended_cnn_forward.4} parent=0 // pred_region
    _
  $region17: #{extended_cnn_forward.4} parent=0 // pred_fallthru
    _
  // Predicated region
  $region18: #{extended_cnn_forward.4} parent=0 // pred_check
    _
  $region19: #{extended_cnn_forward.4} parent=0 // pred_check_branch
    %2458 = sbr.rel (0) target = $region21
  $region20: #{extended_cnn_forward.4} parent=0 // pred_region
    _
  $region21: #{extended_cnn_forward.4} parent=0 // pred_fallthru
    _

// kernel: extended_cnn_forward.5
$region0: #{extended_cnn_forward.5}
  #allocation0 [shape = 'u32[]', space=smem, size = 0x4, offset = 0x4, fixed_abs, tag = 'smem constant byte address 0x4 - core index']
  #allocation1 [shape = 'u32[144,128]{1,0:T(1,128)}', space=vmem, size = 0x12000, scoped, tag = 'internal scratch']
  %s0 = inlined_call_operand.vmem [shape: bf16[4,98,400], index: 0, kind: input, shape index: {}]
  %s1 = inlined_call_operand.vmem [shape: bf16[400,128], index: 1, kind: input, shape index: {}]
  %s2 = inlined_call_operand.vmem [shape: f32[1,128], index: 2, kind: input, shape index: {}]
  %s3 = inlined_call_operand.vmem [shape: bf16[98,128], index: 3, kind: output, shape index: {}]
  %s4 = sld [smem:[#allocation0]]
  $region22: #{extended_cnn_forward.5} parent=0
    _
  %s6 = ssub.s32 1, %s4
  %s7 = scalar_select 0, %s6, %s4
  // Predicated region
  $region2: #{extended_cnn_forward.5} parent=0 // pred_check
    _
  $region3: #{extended_cnn_forward.5} parent=0 // pred_check_branch
    %9 = sbr.rel (0) target = $region5
  $region4: #{extended_cnn_forward.5} parent=0 // pred_region
    _
  $region5: #{extended_cnn_forward.5} parent=0 // pred_fallthru
    _
  // Predicated region
  $region6: #{extended_cnn_forward.5} parent=0 // pred_check
    _
  $region7: #{extended_cnn_forward.5} parent=0 // pred_check_branch
    %11 = sbr.rel (0) target = $region9
  $region8: #{extended_cnn_forward.5} parent=0 // pred_region
    _
  $region9: #{extended_cnn_forward.5} parent=0 // pred_fallthru
    _
  // Predicated region
  $region10: #{extended_cnn_forward.5} parent=0 // pred_check
    _
  $region11: #{extended_cnn_forward.5} parent=0 // pred_check_branch
    %13 = sbr.rel (0) target = $region13
  $region12: #{extended_cnn_forward.5} parent=0 // pred_region
    _
  $region13: #{extended_cnn_forward.5} parent=0 // pred_fallthru
    _
  %v15 = vld [vmem:[%s1] sm:$0xf]
  %v16 = vld [vmem:[%s1 + $0x4] sm:$0xf]
  %v17 = vld [vmem:[%s1 + $0x8] sm:$0xf]
  %v18 = vld [vmem:[%s1 + $0xc] sm:$0xf]
  %v19 = vld [vmem:[%s1 + $0x10] sm:$0xf]
  %v20 = vld [vmem:[%s1 + $0x14] sm:$0xf]
  %v21 = vld [vmem:[%s1 + $0x18] sm:$0xf]
  %v22 = vld [vmem:[%s1 + $0x1c] sm:$0xf]
  %v23 = vld [vmem:[%s1 + $0x20] sm:$0xf]
  %v24 = vld [vmem:[%s1 + $0x24] sm:$0xf]
  %v25 = vld [vmem:[%s1 + $0x28] sm:$0xf]
  %v26 = vld [vmem:[%s1 + $0x2c] sm:$0xf]
  %v27 = vld [vmem:[%s1 + $0x30] sm:$0xf]
  %v28 = vld [vmem:[%s1 + $0x34] sm:$0xf]
  %v29 = vld [vmem:[%s1 + $0x38] sm:$0xf]
  %v30 = vld [vmem:[%s1 + $0x3c] sm:$0xf]
  %v31 = vld [vmem:[%s1 + $0x40] sm:$0xf]
  %v32 = vld [vmem:[%s1 + $0x44] sm:$0xf]
  %v33 = vld [vmem:[%s1 + $0x48] sm:$0xf]
  %v34 = vld [vmem:[%s1 + $0x4c] sm:$0xf]
  %v35 = vld [vmem:[%s1 + $0x50] sm:$0xf]
  %v36 = vld [vmem:[%s1 + $0x54] sm:$0xf]
  %v37 = vld [vmem:[%s1 + $0x58] sm:$0xf]
  %v38 = vld [vmem:[%s1 + $0x5c] sm:$0xf]
  %v39 = vld [vmem:[%s1 + $0x60] sm:$0xf]
  %v40 = vld [vmem:[%s1 + $0x64] sm:$0xf]
  %v41 = vld [vmem:[%s1 + $0x68] sm:$0xf]
  %v42 = vld [vmem:[%s1 + $0x6c] sm:$0xf]
  %v43 = vld [vmem:[%s1 + $0x70] sm:$0xf]
  %v44 = vld [vmem:[%s1 + $0x74] sm:$0xf]
  %v45 = vld [vmem:[%s1 + $0x78] sm:$0xf]
  %v46 = vld [vmem:[%s1 + $0x7c] sm:$0xf]
  %v47 = vld [vmem:[%s1 + $0x80] sm:$0xf]
  %v48 = vld [vmem:[%s1 + $0x84] sm:$0xf]
  %v49 = vld [vmem:[%s1 + $0x88] sm:$0xf]
  %v50 = vld [vmem:[%s1 + $0x8c] sm:$0xf]
  %v51 = vld [vmem:[%s1 + $0x90] sm:$0xf]
  %v52 = vld [vmem:[%s1 + $0x94] sm:$0xf]
  %v53 = vld [vmem:[%s1 + $0x98] sm:$0xf]
  %v54 = vld [vmem:[%s1 + $0x9c] sm:$0xf]
  %v55 = vld [vmem:[%s1 + $0xa0] sm:$0xf]
  %v56 = vld [vmem:[%s1 + $0xa4] sm:$0xf]
  %v57 = vld [vmem:[%s1 + $0xa8] sm:$0xf]
  %v58 = vld [vmem:[%s1 + $0xac] sm:$0xf]
  %v59 = vld [vmem:[%s1 + $0xb0] sm:$0xf]
  %v60 = vld [vmem:[%s1 + $0xb4] sm:$0xf]
  %v61 = vld [vmem:[%s1 + $0xb8] sm:$0xf]
  %v62 = vld [vmem:[%s1 + $0xbc] sm:$0xf]
  %v63 = vld [vmem:[%s1 + $0xc0] sm:$0xf]
  %v64 = vld [vmem:[%s1 + $0xc4] sm:$0xf]
  %v65 = vld [vmem:[%s0] sm:$0xff]
  %v66 = vld [vmem:[%s0 + $0x8] sm:$0xff]
  %v67 = vld [vmem:[%s0 + $0x10] sm:$0xff]
  %v68 = vld [vmem:[%s0 + $0x18] sm:$0xff]
  %v69 = vld [vmem:[%s0 + $0x20] sm:$0xff]
  %v70 = vld [vmem:[%s0 + $0x28] sm:$0xff]
  %v71 = vld [vmem:[%s0 + $0x30] sm:$0xff]
  %v72 = vld [vmem:[%s0 + $0x38] sm:$0xff]
  %v73 = vld [vmem:[%s0 + $0x40] sm:$0xff]
  %v74 = vld [vmem:[%s0 + $0x48] sm:$0xff]
  %v75 = vld [vmem:[%s0 + $0x50] sm:$0xff]
  %v76 = vld [vmem:[%s0 + $0x58] sm:$0xff]
  %v77 = vld [vmem:[%s0 + $0x60] sm:$0xff]
  %v78 = vld [vmem:[%s0 + $0x68] sm:$0xff]
  %v79 = vld [vmem:[%s0 + $0x70] sm:$0xff]
  %v80 = vld [vmem:[%s0 + $0x78] sm:$0xff]
  %v81 = vld [vmem:[%s0 + $0x80] sm:$0xff]
  %v82 = vld [vmem:[%s0 + $0x88] sm:$0xff]
  %v83 = vld [vmem:[%s0 + $0x90] sm:$0xff]
  %v84 = vld [vmem:[%s0 + $0x98] sm:$0xff]
  %v85 = vld [vmem:[%s0 + $0xa0] sm:$0xff]
  %v86 = vld [vmem:[%s0 + $0xa8] sm:$0xff]
  %v87 = vld [vmem:[%s0 + $0xb0] sm:$0xff]
  %v88 = vld [vmem:[%s0 + $0xb8] sm:$0xff]
  %v89 = vld [vmem:[%s0 + $0xc0] sm:$0x11]
  %v90 = vld [vmem:[%s0 + $0xc8] sm:$0x11]
  %v117 = vunpack.c.l.b16 %v65
  %v118 = vunpack.c.h.b16 %v65
  %v119 = vunpack.c.l.b16 %v66
  %v120 = vunpack.c.h.b16 %v66
  %v121 = vunpack.c.l.b16 %v67
  %v122 = vunpack.c.h.b16 %v67
  %v123 = vunpack.c.l.b16 %v68
  %v124 = vunpack.c.h.b16 %v68
  %v125 = vunpack.c.l.b16 %v69
  %v126 = vunpack.c.h.b16 %v69
  %v127 = vunpack.c.l.b16 %v70
  %v128 = vunpack.c.h.b16 %v70
  %v129 = vunpack.c.l.b16 %v71
  %v130 = vunpack.c.h.b16 %v71
  %v131 = vunpack.c.l.b16 %v72
  %v132 = vunpack.c.h.b16 %v72
  %v133 = vunpack.c.l.b16 %v73
  %v134 = vunpack.c.h.b16 %v73
  %v135 = vunpack.c.l.b16 %v74
  %v136 = vunpack.c.h.b16 %v74
  %v137 = vunpack.c.l.b16 %v75
  %v138 = vunpack.c.h.b16 %v75
  %v139 = vunpack.c.l.b16 %v76
  %v140 = vunpack.c.h.b16 %v76
  %v141 = vunpack.c.l.b16 %v77
  %v142 = vunpack.c.h.b16 %v77
  %v143 = vunpack.c.l.b16 %v78
  %v144 = vunpack.c.h.b16 %v78
  %v145 = vunpack.c.l.b16 %v79
  %v146 = vunpack.c.h.b16 %v79
  %v147 = vunpack.c.l.b16 %v80
  %v148 = vunpack.c.h.b16 %v80
  %v149 = vunpack.c.l.b16 %v81
  %v150 = vunpack.c.h.b16 %v81
  %v151 = vunpack.c.l.b16 %v82
  %v152 = vunpack.c.h.b16 %v82
  %v153 = vunpack.c.l.b16 %v83
  %v154 = vunpack.c.h.b16 %v83
  %v155 = vunpack.c.l.b16 %v84
  %v156 = vunpack.c.h.b16 %v84
  %v157 = vunpack.c.l.b16 %v85
  %v158 = vunpack.c.h.b16 %v85
  %v159 = vunpack.c.l.b16 %v86
  %v160 = vunpack.c.h.b16 %v86
  %v161 = vunpack.c.l.b16 %v87
  %v162 = vunpack.c.h.b16 %v87
  %v163 = vunpack.c.l.b16 %v88
  %v164 = vunpack.c.h.b16 %v88
  %v165 = vunpack.c.l.b16 %v89
  %v166 = vunpack.c.h.b16 %v89
  %v167 = vunpack.c.l.b16 %v90
  %v168 = vunpack.c.h.b16 %v90
  %v169 = vpack.c.b16 %v121, %v117
  %v170 = vpack.c.b16 %v122, %v118
  %v171 = vpack.c.b16 %v123, %v119
  %v172 = vpack.c.b16 %v124, %v120
  %v173 = vpack.c.b16 %v129, %v125
  %v174 = vpack.c.b16 %v130, %v126
  %v175 = vpack.c.b16 %v131, %v127
  %v176 = vpack.c.b16 %v132, %v128
  %v177 = vpack.c.b16 %v137, %v133
  %v178 = vpack.c.b16 %v138, %v134
  %v179 = vpack.c.b16 %v139, %v135
  %v180 = vpack.c.b16 %v140, %v136
  %v181 = vpack.c.b16 %v145, %v141
  %v182 = vpack.c.b16 %v146, %v142
  %v183 = vpack.c.b16 %v147, %v143
  %v184 = vpack.c.b16 %v148, %v144
  %v185 = vpack.c.b16 %v153, %v149
  %v186 = vpack.c.b16 %v154, %v150
  %v187 = vpack.c.b16 %v155, %v151
  %v188 = vpack.c.b16 %v156, %v152
  %v189 = vpack.c.b16 %v161, %v157
  %v190 = vpack.c.b16 %v162, %v158
  %v191 = vpack.c.b16 %v163, %v159
  %v192 = vpack.c.b16 %v164, %v160
  %v193 = vpack.c.b16 %v165, %v165
  %v194 = vpack.c.b16 %v166, %v166
  %v195 = vpack.c.b16 %v167, %v167
  %v196 = vpack.c.b16 %v168, %v168
  %v268 = vunpack.c.l.b16 %v15
  %v269 = vunpack.c.l.b16 %v16
  %v270 = vunpack.c.l.b16 %v17
  %v271 = vunpack.c.l.b16 %v18
  %v272 = vunpack.c.l.b16 %v19
  %v273 = vunpack.c.l.b16 %v20
  %v274 = vunpack.c.l.b16 %v21
  %v275 = vunpack.c.l.b16 %v22
  %v276 = vunpack.c.l.b16 %v23
  %v277 = vunpack.c.l.b16 %v24
  %v278 = vunpack.c.l.b16 %v25
  %v279 = vunpack.c.l.b16 %v26
  %v280 = vunpack.c.l.b16 %v27
  %v281 = vunpack.c.l.b16 %v28
  %v282 = vunpack.c.l.b16 %v29
  %v283 = vunpack.c.l.b16 %v30
  %v284 = vunpack.c.l.b16 %v31
  %v285 = vunpack.c.l.b16 %v32
  %v286 = vunpack.c.l.b16 %v33
  %v287 = vunpack.c.l.b16 %v34
  %v288 = vunpack.c.l.b16 %v35
  %v289 = vunpack.c.l.b16 %v36
  %v290 = vunpack.c.l.b16 %v37
  %v291 = vunpack.c.l.b16 %v38
  %v292 = vunpack.c.l.b16 %v39
  %v293 = vunpack.c.l.b16 %v40
  %v294 = vunpack.c.l.b16 %v41
  %v295 = vunpack.c.l.b16 %v42
  %v296 = vunpack.c.l.b16 %v43
  %v297 = vunpack.c.l.b16 %v44
  %v298 = vunpack.c.l.b16 %v45
  %v299 = vunpack.c.l.b16 %v46
  %v300 = vunpack.c.l.b16 %v47
  %v301 = vunpack.c.l.b16 %v48
  %v302 = vunpack.c.l.b16 %v49
  %v303 = vunpack.c.l.b16 %v50
  %v304 = vunpack.c.l.b16 %v51
  %v305 = vunpack.c.l.b16 %v52
  %v306 = vunpack.c.l.b16 %v53
  %v307 = vunpack.c.l.b16 %v54
  %v308 = vunpack.c.l.b16 %v55
  %v309 = vunpack.c.l.b16 %v56
  %v310 = vunpack.c.l.b16 %v57
  %v311 = vunpack.c.l.b16 %v58
  %v312 = vunpack.c.l.b16 %v59
  %v313 = vunpack.c.l.b16 %v60
  %v314 = vunpack.c.l.b16 %v61
  %v315 = vunpack.c.l.b16 %v62
  %v316 = vunpack.c.l.b16 %v63
  %v317 = vunpack.c.l.b16 %v64
  %v318 = vpack.c.b16 %v269, %v268
  %v319 = vpack.c.b16 %v271, %v270
  %v320 = vpack.c.b16 %v273, %v272
  %v321 = vpack.c.b16 %v275, %v274
  %v322 = vpack.c.b16 %v277, %v276
  %v323 = vpack.c.b16 %v279, %v278
  %v324 = vpack.c.b16 %v281, %v280
  %v325 = vpack.c.b16 %v283, %v282
  %v326 = vpack.c.b16 %v285, %v284
  %v327 = vpack.c.b16 %v287, %v286
  %v328 = vpack.c.b16 %v289, %v288
  %v329 = vpack.c.b16 %v291, %v290
  %v330 = vpack.c.b16 %v293, %v292
  %v331 = vpack.c.b16 %v295, %v294
  %v332 = vpack.c.b16 %v297, %v296
  %v333 = vpack.c.b16 %v299, %v298
  %v334 = vpack.c.b16 %v301, %v300
  %v335 = vpack.c.b16 %v303, %v302
  %v336 = vpack.c.b16 %v305, %v304
  %v337 = vpack.c.b16 %v307, %v306
  %v338 = vpack.c.b16 %v309, %v308
  %v339 = vpack.c.b16 %v311, %v310
  %v340 = vpack.c.b16 %v313, %v312
  %v341 = vpack.c.b16 %v315, %v314
  %v342 = vpack.c.b16 %v317, %v316
  %vm368 = vcmask 130048
  %v370 = vsel %vm368, %v172, 0
  %v373 = vsel %vm368, %v176, 0
  %v376 = vsel %vm368, %v180, 0
  %v379 = vsel %vm368, %v184, 0
  %v382 = vsel %vm368, %v188, 0
  %v385 = vsel %vm368, %v192, 0
  %v388 = vsel %vm368, %v196, 0
  %390 = vmatprep.subr.bf16.mxu0 0
  %391 = vmatpush1.bf16.msra.mxu0 %v318
  %392 = vmatprep.subr.bf16.mxu0 0
  %393 = vmatpush1.bf16.msra.mxu0 %v319
  %394 = vmatprep.subr.bf16.mxu0 0
  %395 = vmatpush1.bf16.msra.mxu0 %v320
  %396 = vmatprep.subr.bf16.mxu0 0
  %397 = vmatpush1.bf16.msra.mxu0 %v321
  %398 = vmatprep.subr.bf16.mxu0 0
  %399 = vmatpush1.bf16.msra.mxu0 %v322
  %400 = vmatprep.subr.bf16.mxu0 0
  %401 = vmatpush1.bf16.msra.mxu0 %v323
  %402 = vmatprep.subr.bf16.mxu0 0
  %403 = vmatpush1.bf16.msra.mxu0 %v324
  %404 = vmatprep.subr.bf16.mxu0 0
  %405 = vmatpush1.bf16.msra.mxu0 %v325
  %406 = vmatprep.subr.bf16.mxu0 0
  %407 = vmatpush1.bf16.msra.mxu0 %v326
  %408 = vmatprep.subr.bf16.mxu0 0
  %409 = vmatpush1.bf16.msra.mxu0 %v327
  %410 = vmatprep.subr.bf16.mxu0 0
  %411 = vmatpush1.bf16.msra.mxu0 %v328
  %412 = vmatprep.subr.bf16.mxu0 0
  %413 = vmatpush1.bf16.msra.mxu0 %v329
  %414 = vmatprep.subr.bf16.mxu0 0
  %415 = vmatpush1.bf16.msra.mxu0 %v330
  %416 = vmatprep.subr.bf16.mxu0 0
  %417 = vmatpush1.bf16.msra.mxu0 %v331
  %418 = vmatprep.subr.bf16.mxu0 0
  %419 = vmatpush1.bf16.msra.mxu0 %v332
  %420 = vmatprep.subr.bf16.mxu0 0
  %421 = vmatpush1.bf16.msra.mxu0 %v333
  %422 = vmatprep.mubr.bf16.mxu0 %v170
  %423 = vmatmul.mubr.bf16.gmra.mrb[0].mxu0 %v169
  %v424 = vpop.f32.mrb[0].mxu0
  %v425 = vadd.f32 0.0, %v424
  %v426 = vpop.f32.mrb[0].mxu0
  %v427 = vpop.f32.mrb[0].mxu0
  %v428 = vadd.f32 0.0, %v427
  %v429 = vpop.f32.mrb[0].mxu0
  %430 = vmatprep.mubr.bf16.mxu0 %v174
  %431 = vmatmul.mubr.bf16.gmra.mrb[0].mxu0 %v173
  %v432 = vpop.f32.mrb[0].mxu0
  %v433 = vadd.f32 0.0, %v432
  %v434 = vpop.f32.mrb[0].mxu0
  %v435 = vpop.f32.mrb[0].mxu0
  %v436 = vadd.f32 0.0, %v435
  %v437 = vpop.f32.mrb[0].mxu0
  %438 = vmatprep.mubr.bf16.mxu0 %v178
  %439 = vmatmul.mubr.bf16.gmra.mrb[0].mxu0 %v177
  %v440 = vpop.f32.mrb[0].mxu0
  %v441 = vadd.f32 0.0, %v440
  %v442 = vpop.f32.mrb[0].mxu0
  %v443 = vpop.f32.mrb[0].mxu0
  %v444 = vadd.f32 0.0, %v443
  %v445 = vpop.f32.mrb[0].mxu0
  %446 = vmatprep.mubr.bf16.mxu0 %v182
  %447 = vmatmul.mubr.bf16.gmra.mrb[0].mxu0 %v181
  %v448 = vpop.f32.mrb[0].mxu0
  %v449 = vadd.f32 0.0, %v448
  %v450 = vpop.f32.mrb[0].mxu0
  %v451 = vpop.f32.mrb[0].mxu0
  %v452 = vadd.f32 0.0, %v451
  %v453 = vpop.f32.mrb[0].mxu0
  %454 = vmatprep.mubr.bf16.mxu0 %v186
  %455 = vmatmul.mubr.bf16.gmra.mrb[0].mxu0 %v185
  %v456 = vpop.f32.mrb[0].mxu0
  %v457 = vadd.f32 0.0, %v456
  %v458 = vpop.f32.mrb[0].mxu0
  %v459 = vpop.f32.mrb[0].mxu0
  %v460 = vadd.f32 0.0, %v459
  %v461 = vpop.f32.mrb[0].mxu0
  %462 = vmatprep.mubr.bf16.mxu0 %v190
  %463 = vmatmul.mubr.bf16.gmra.mrb[0].mxu0 %v189
  %v464 = vpop.f32.mrb[0].mxu0
  %v465 = vadd.f32 0.0, %v464
  %v466 = vpop.f32.mrb[0].mxu0
  %v467 = vpop.f32.mrb[0].mxu0
  %v468 = vadd.f32 0.0, %v467
  %v469 = vpop.f32.mrb[0].mxu0
  %470 = vmatprep.mubr.bf16.mxu0 %v194
  %471 = vmatmul.mubr.bf16.gmra.mrb[0].mxu0 %v193
  %v472 = vpop.f32.mrb[0].mxu0
  %v473 = vadd.f32 0.0, %v472
  %v474 = vpop.f32.mrb[0].mxu0
  %v475 = vpop.f32.mrb[0].mxu0
  %v476 = vpop.f32.mrb[0].mxu0
  %477 = vdwg.mxu0
  %478 = vmatprep.subr.bf16.mxu0 0
  %479 = vmatpush1.bf16.msra.mxu0 %v334
  %480 = vmatprep.subr.bf16.mxu0 0
  %481 = vmatpush1.bf16.msra.mxu0 %v335
  %482 = vmatprep.subr.bf16.mxu0 0
  %483 = vmatpush1.bf16.msra.mxu0 %v336
  %484 = vmatprep.subr.bf16.mxu0 0
  %485 = vmatpush1.bf16.msra.mxu0 %v337
  %486 = vmatprep.subr.bf16.mxu0 0
  %487 = vmatpush1.bf16.msra.mxu0 %v338
  %488 = vmatprep.subr.bf16.mxu0 0
  %489 = vmatpush1.bf16.msra.mxu0 %v339
  %490 = vmatprep.subr.bf16.mxu0 0
  %491 = vmatpush1.bf16.msra.mxu0 %v340
  %492 = vmatprep.subr.bf16.mxu0 0
  %493 = vmatpush1.bf16.msra.mxu0 %v341
  %494 = vmatprep.subr.bf16.mxu0 0
  %495 = vmatpush1.bf16.msra.mxu0 %v342
  %496 = vmatprep.subr.bf16.mxu0 0
  %497 = vmatpush1.bf16.msra.mxu0 0
  %498 = vmatprep.subr.bf16.mxu0 0
  %499 = vmatpush1.bf16.msra.mxu0 0
  %500 = vmatprep.subr.bf16.mxu0 0
  %501 = vmatpush1.bf16.msra.mxu0 0
  %502 = vmatprep.subr.bf16.mxu0 0
  %503 = vmatpush1.bf16.msra.mxu0 0
  %504 = vmatprep.subr.bf16.mxu0 0
  %505 = vmatpush1.bf16.msra.mxu0 0
  %506 = vmatprep.subr.bf16.mxu0 0
  %507 = vmatpush1.bf16.msra.mxu0 0
  %508 = vmatprep.subr.bf16.mxu0 0
  %509 = vmatpush1.bf16.msra.mxu0 0
  %510 = vmatprep.mubr.bf16.mxu0 %v370
  %511 = vmatmul.mubr.bf16.gmra.mrb[0].mxu0 %v171
  %v512 = vpop.f32.mrb[0].mxu0
  %v513 = vadd.f32 %v425, %v512
  %v514 = vpop.f32.mrb[0].mxu0
  %v515 = vpop.f32.mrb[0].mxu0
  %v516 = vadd.f32 %v428, %v515
  %v517 = vpop.f32.mrb[0].mxu0
  %518 = vmatprep.mubr.bf16.mxu0 %v373
  %519 = vmatmul.mubr.bf16.gmra.mrb[0].mxu0 %v175
  %v520 = vpop.f32.mrb[0].mxu0
  %v521 = vadd.f32 %v433, %v520
  %v522 = vpop.f32.mrb[0].mxu0
  %v523 = vpop.f32.mrb[0].mxu0
  %v524 = vadd.f32 %v436, %v523
  %v525 = vpop.f32.mrb[0].mxu0
  %526 = vmatprep.mubr.bf16.mxu0 %v376
  %527 = vmatmul.mubr.bf16.gmra.mrb[0].mxu0 %v179
  %v528 = vpop.f32.mrb[0].mxu0
  %v529 = vadd.f32 %v441, %v528
  %v530 = vpop.f32.mrb[0].mxu0
  %v531 = vpop.f32.mrb[0].mxu0
  %v532 = vadd.f32 %v444, %v531
  %v533 = vpop.f32.mrb[0].mxu0
  %534 = vmatprep.mubr.bf16.mxu0 %v379
  %535 = vmatmul.mubr.bf16.gmra.mrb[0].mxu0 %v183
  %v536 = vpop.f32.mrb[0].mxu0
  %v537 = vadd.f32 %v449, %v536
  %v538 = vpop.f32.mrb[0].mxu0
  %v539 = vpop.f32.mrb[0].mxu0
  %v540 = vadd.f32 %v452, %v539
  %v541 = vpop.f32.mrb[0].mxu0
  %542 = vmatprep.mubr.bf16.mxu0 %v382
  %543 = vmatmul.mubr.bf16.gmra.mrb[0].mxu0 %v187
  %v544 = vpop.f32.mrb[0].mxu0
  %v545 = vadd.f32 %v457, %v544
  %v546 = vpop.f32.mrb[0].mxu0
  %v547 = vpop.f32.mrb[0].mxu0
  %v548 = vadd.f32 %v460, %v547
  %v549 = vpop.f32.mrb[0].mxu0
  %550 = vmatprep.mubr.bf16.mxu0 %v385
  %551 = vmatmul.mubr.bf16.gmra.mrb[0].mxu0 %v191
  %v552 = vpop.f32.mrb[0].mxu0
  %v553 = vadd.f32 %v465, %v552
  %v554 = vpop.f32.mrb[0].mxu0
  %v555 = vpop.f32.mrb[0].mxu0
  %v556 = vadd.f32 %v468, %v555
  %v557 = vpop.f32.mrb[0].mxu0
  %558 = vmatprep.mubr.bf16.mxu0 %v388
  %559 = vmatmul.mubr.bf16.gmra.mrb[0].mxu0 %v195
  %v560 = vpop.f32.mrb[0].mxu0
  %v561 = vadd.f32 %v473, %v560
  %v562 = vpop.f32.mrb[0].mxu0
  %v563 = vpop.f32.mrb[0].mxu0
  %v564 = vpop.f32.mrb[0].mxu0
  %565 = vdwg.mxu0
  %s566 = scalar_lea.vmem %s0, 208
  %v567 = vld [vmem:[%s566] sm:$0xff]
  %v568 = vld [vmem:[%s566 + $0x8] sm:$0xff]
  %v569 = vld [vmem:[%s566 + $0x10] sm:$0xff]
  %v570 = vld [vmem:[%s566 + $0x18] sm:$0xff]
  %v571 = vld [vmem:[%s566 + $0x20] sm:$0xff]
  %v572 = vld [vmem:[%s566 + $0x28] sm:$0xff]
  %v573 = vld [vmem:[%s566 + $0x30] sm:$0xff]
  %v574 = vld [vmem:[%s566 + $0x38] sm:$0xff]
  %v575 = vld [vmem:[%s566 + $0x40] sm:$0xff]
  %v576 = vld [vmem:[%s566 + $0x48] sm:$0xff]
  %v577 = vld [vmem:[%s566 + $0x50] sm:$0xff]
  %v578 = vld [vmem:[%s566 + $0x58] sm:$0xff]
  %v579 = vld [vmem:[%s566 + $0x60] sm:$0xff]
  %v580 = vld [vmem:[%s566 + $0x68] sm:$0xff]
  %v581 = vld [vmem:[%s566 + $0x70] sm:$0xff]
  %v582 = vld [vmem:[%s566 + $0x78] sm:$0xff]
  %v583 = vld [vmem:[%s566 + $0x80] sm:$0xff]
  %v584 = vld [vmem:[%s566 + $0x88] sm:$0xff]
  %v585 = vld [vmem:[%s566 + $0x90] sm:$0xff]
  %v586 = vld [vmem:[%s566 + $0x98] sm:$0xff]
  %v587 = vld [vmem:[%s566 + $0xa0] sm:$0xff]
  %v588 = vld [vmem:[%s566 + $0xa8] sm:$0xff]
  %v589 = vld [vmem:[%s566 + $0xb0] sm:$0xff]
  %v590 = vld [vmem:[%s566 + $0xb8] sm:$0xff]
  %v591 = vld [vmem:[%s566 + $0xc0] sm:$0x11]
  %v592 = vld [vmem:[%s566 + $0xc8] sm:$0x11]
  %v619 = vunpack.c.l.b16 %v567
  %v620 = vunpack.c.h.b16 %v567
  %v621 = vunpack.c.l.b16 %v568
  %v622 = vunpack.c.h.b16 %v568
  %v623 = vunpack.c.l.b16 %v569
  %v624 = vunpack.c.h.b16 %v569
  %v625 = vunpack.c.l.b16 %v570
  %v626 = vunpack.c.h.b16 %v570
  %v627 = vunpack.c.l.b16 %v571
  %v628 = vunpack.c.h.b16 %v571
  %v629 = vunpack.c.l.b16 %v572
  %v630 = vunpack.c.h.b16 %v572
  %v631 = vunpack.c.l.b16 %v573
  %v632 = vunpack.c.h.b16 %v573
  %v633 = vunpack.c.l.b16 %v574
  %v634 = vunpack.c.h.b16 %v574
  %v635 = vunpack.c.l.b16 %v575
  %v636 = vunpack.c.h.b16 %v575
  %v637 = vunpack.c.l.b16 %v576
  %v638 = vunpack.c.h.b16 %v576
  %v639 = vunpack.c.l.b16 %v577
  %v640 = vunpack.c.h.b16 %v577
  %v641 = vunpack.c.l.b16 %v578
  %v642 = vunpack.c.h.b16 %v578
  %v643 = vunpack.c.l.b16 %v579
  %v644 = vunpack.c.h.b16 %v579
  %v645 = vunpack.c.l.b16 %v580
  %v646 = vunpack.c.h.b16 %v580
  %v647 = vunpack.c.l.b16 %v581
  %v648 = vunpack.c.h.b16 %v581
  %v649 = vunpack.c.l.b16 %v582
  %v650 = vunpack.c.h.b16 %v582
  %v651 = vunpack.c.l.b16 %v583
  %v652 = vunpack.c.h.b16 %v583
  %v653 = vunpack.c.l.b16 %v584
  %v654 = vunpack.c.h.b16 %v584
  %v655 = vunpack.c.l.b16 %v585
  %v656 = vunpack.c.h.b16 %v585
  %v657 = vunpack.c.l.b16 %v586
  %v658 = vunpack.c.h.b16 %v586
  %v659 = vunpack.c.l.b16 %v587
  %v660 = vunpack.c.h.b16 %v587
  %v661 = vunpack.c.l.b16 %v588
  %v662 = vunpack.c.h.b16 %v588
  %v663 = vunpack.c.l.b16 %v589
  %v664 = vunpack.c.h.b16 %v589
  %v665 = vunpack.c.l.b16 %v590
  %v666 = vunpack.c.h.b16 %v590
  %v667 = vunpack.c.l.b16 %v591
  %v668 = vunpack.c.h.b16 %v591
  %v669 = vunpack.c.l.b16 %v592
  %v670 = vunpack.c.h.b16 %v592
  %v671 = vpack.c.b16 %v623, %v619
  %v672 = vpack.c.b16 %v624, %v620
  %v673 = vpack.c.b16 %v625, %v621
  %v674 = vpack.c.b16 %v626, %v622
  %v675 = vpack.c.b16 %v631, %v627
  %v676 = vpack.c.b16 %v632, %v628
  %v677 = vpack.c.b16 %v633, %v629
  %v678 = vpack.c.b16 %v634, %v630
  %v679 = vpack.c.b16 %v639, %v635
  %v680 = vpack.c.b16 %v640, %v636
  %v681 = vpack.c.b16 %v641, %v637
  %v682 = vpack.c.b16 %v642, %v638
  %v683 = vpack.c.b16 %v647, %v643
  %v684 = vpack.c.b16 %v648, %v644
  %v685 = vpack.c.b16 %v649, %v645
  %v686 = vpack.c.b16 %v650, %v646
  %v687 = vpack.c.b16 %v655, %v651
  %v688 = vpack.c.b16 %v656, %v652
  %v689 = vpack.c.b16 %v657, %v653
  %v690 = vpack.c.b16 %v658, %v654
  %v691 = vpack.c.b16 %v663, %v659
  %v692 = vpack.c.b16 %v664, %v660
  %v693 = vpack.c.b16 %v665, %v661
  %v694 = vpack.c.b16 %v666, %v662
  %v695 = vpack.c.b16 %v667, %v667
  %v696 = vpack.c.b16 %v668, %v668
  %v697 = vpack.c.b16 %v669, %v669
  %v698 = vpack.c.b16 %v670, %v670
  %v721 = vsel %vm368, %v674, 0
  %v724 = vsel %vm368, %v678, 0
  %v727 = vsel %vm368, %v682, 0
  %v730 = vsel %vm368, %v686, 0
  %v733 = vsel %vm368, %v690, 0
  %v736 = vsel %vm368, %v694, 0
  %v739 = vsel %vm368, %v698, 0
  %741 = vmatprep.subr.bf16.mxu0 0
  %742 = vmatpush1.bf16.msra.mxu0 %v318
  %743 = vmatprep.subr.bf16.mxu0 0
  %744 = vmatpush1.bf16.msra.mxu0 %v319
  %745 = vmatprep.subr.bf16.mxu0 0
  %746 = vmatpush1.bf16.msra.mxu0 %v320
  %747 = vmatprep.subr.bf16.mxu0 0
  %748 = vmatpush1.bf16.msra.mxu0 %v321
  %749 = vmatprep.subr.bf16.mxu0 0
  %750 = vmatpush1.bf16.msra.mxu0 %v322
  %751 = vmatprep.subr.bf16.mxu0 0
  %752 = vmatpush1.bf16.msra.mxu0 %v323
  %753 = vmatprep.subr.bf16.mxu0 0
  %754 = vmatpush1.bf16.msra.mxu0 %v324
  %755 = vmatprep.subr.bf16.mxu0 0
  %756 = vmatpush1.bf16.msra.mxu0 %v325
  %757 = vmatprep.subr.bf16.mxu0 0
  %758 = vmatpush1.bf16.msra.mxu0 %v326
  %759 = vmatprep.subr.bf16.mxu0 0
  %760 = vmatpush1.bf16.msra.mxu0 %v327
  %761 = vmatprep.subr.bf16.mxu0 0
  %762 = vmatpush1.bf16.msra.mxu0 %v328
  %763 = vmatprep.subr.bf16.mxu0 0
  %764 = vmatpush1.bf16.msra.mxu0 %v329
  %765 = vmatprep.subr.bf16.mxu0 0
  %766 = vmatpush1.bf16.msra.mxu0 %v330
  %767 = vmatprep.subr.bf16.mxu0 0
  %768 = vmatpush1.bf16.msra.mxu0 %v331
  %769 = vmatprep.subr.bf16.mxu0 0
  %770 = vmatpush1.bf16.msra.mxu0 %v332
  %771 = vmatprep.subr.bf16.mxu0 0
  %772 = vmatpush1.bf16.msra.mxu0 %v333
  %773 = vmatprep.mubr.bf16.mxu0 %v672
  %774 = vmatmul.mubr.bf16.gmra.mrb[0].mxu0 %v671
  %v775 = vpop.f32.mrb[0].mxu0
  %v776 = vadd.f32 0.0, %v775
  %v777 = vpop.f32.mrb[0].mxu0
  %v778 = vpop.f32.mrb[0].mxu0
  %v779 = vadd.f32 0.0, %v778
  %v780 = vpop.f32.mrb[0].mxu0
  %781 = vmatprep.mubr.bf16.mxu0 %v676
  %782 = vmatmul.mubr.bf16.gmra.mrb[0].mxu0 %v675
  %v783 = vpop.f32.mrb[0].mxu0
  %v784 = vadd.f32 0.0, %v783
  %v785 = vpop.f32.mrb[0].mxu0
  %v786 = vpop.f32.mrb[0].mxu0
  %v787 = vadd.f32 0.0, %v786
  %v788 = vpop.f32.mrb[0].mxu0
  %789 = vmatprep.mubr.bf16.mxu0 %v680
  %790 = vmatmul.mubr.bf16.gmra.mrb[0].mxu0 %v679
  %v791 = vpop.f32.mrb[0].mxu0
  %v792 = vadd.f32 0.0, %v791
  %v793 = vpop.f32.mrb[0].mxu0
  %v794 = vpop.f32.mrb[0].mxu0
  %v795 = vadd.f32 0.0, %v794
  %v796 = vpop.f32.mrb[0].mxu0
  %797 = vmatprep.mubr.bf16.mxu0 %v684
  %798 = vmatmul.mubr.bf16.gmra.mrb[0].mxu0 %v683
  %v799 = vpop.f32.mrb[0].mxu0
  %v800 = vadd.f32 0.0, %v799
  %v801 = vpop.f32.mrb[0].mxu0
  %v802 = vpop.f32.mrb[0].mxu0
  %v803 = vadd.f32 0.0, %v802
  %v804 = vpop.f32.mrb[0].mxu0
  %805 = vmatprep.mubr.bf16.mxu0 %v688
  %806 = vmatmul.mubr.bf16.gmra.mrb[0].mxu0 %v687
  %v807 = vpop.f32.mrb[0].mxu0
  %v808 = vadd.f32 0.0, %v807
  %v809 = vpop.f32.mrb[0].mxu0
  %v810 = vpop.f32.mrb[0].mxu0
  %v811 = vadd.f32 0.0, %v810
  %v812 = vpop.f32.mrb[0].mxu0
  %813 = vmatprep.mubr.bf16.mxu0 %v692
  %814 = vmatmul.mubr.bf16.gmra.mrb[0].mxu0 %v691
  %v815 = vpop.f32.mrb[0].mxu0
  %v816 = vadd.f32 0.0, %v815
  %v817 = vpop.f32.mrb[0].mxu0
  %v818 = vpop.f32.mrb[0].mxu0
  %v819 = vadd.f32 0.0, %v818
  %v820 = vpop.f32.mrb[0].mxu0
  %821 = vmatprep.mubr.bf16.mxu0 %v696
  %822 = vmatmul.mubr.bf16.gmra.mrb[0].mxu0 %v695
  %v823 = vpop.f32.mrb[0].mxu0
  %v824 = vadd.f32 0.0, %v823
  %v825 = vpop.f32.mrb[0].mxu0
  %v826 = vpop.f32.mrb[0].mxu0
  %v827 = vpop.f32.mrb[0].mxu0
  %828 = vdwg.mxu0
  %829 = vmatprep.subr.bf16.mxu0 0
  %830 = vmatpush1.bf16.msra.mxu0 %v334
  %831 = vmatprep.subr.bf16.mxu0 0
  %832 = vmatpush1.bf16.msra.mxu0 %v335
  %833 = vmatprep.subr.bf16.mxu0 0
  %834 = vmatpush1.bf16.msra.mxu0 %v336
  %835 = vmatprep.subr.bf16.mxu0 0
  %836 = vmatpush1.bf16.msra.mxu0 %v337
  %837 = vmatprep.subr.bf16.mxu0 0
  %838 = vmatpush1.bf16.msra.mxu0 %v338
  %839 = vmatprep.subr.bf16.mxu0 0
  %840 = vmatpush1.bf16.msra.mxu0 %v339
  %841 = vmatprep.subr.bf16.mxu0 0
  %842 = vmatpush1.bf16.msra.mxu0 %v340
  %843 = vmatprep.subr.bf16.mxu0 0
  %844 = vmatpush1.bf16.msra.mxu0 %v341
  %845 = vmatprep.subr.bf16.mxu0 0
  %846 = vmatpush1.bf16.msra.mxu0 %v342
  %847 = vmatprep.subr.bf16.mxu0 0
  %848 = vmatpush1.bf16.msra.mxu0 0
  %849 = vmatprep.subr.bf16.mxu0 0
  %850 = vmatpush1.bf16.msra.mxu0 0
  %851 = vmatprep.subr.bf16.mxu0 0
  %852 = vmatpush1.bf16.msra.mxu0 0
  %853 = vmatprep.subr.bf16.mxu0 0
  %854 = vmatpush1.bf16.msra.mxu0 0
  %855 = vmatprep.subr.bf16.mxu0 0
  %856 = vmatpush1.bf16.msra.mxu0 0
  %857 = vmatprep.subr.bf16.mxu0 0
  %858 = vmatpush1.bf16.msra.mxu0 0
  %859 = vmatprep.subr.bf16.mxu0 0
  %860 = vmatpush1.bf16.msra.mxu0 0
  %861 = vmatprep.mubr.bf16.mxu0 %v721
  %862 = vmatmul.mubr.bf16.gmra.mrb[0].mxu0 %v673
  %v863 = vpop.f32.mrb[0].mxu0
  %v864 = vadd.f32 %v776, %v863
  %v865 = vpop.f32.mrb[0].mxu0
  %v866 = vpop.f32.mrb[0].mxu0
  %v867 = vadd.f32 %v779, %v866
  %v868 = vpop.f32.mrb[0].mxu0
  %869 = vmatprep.mubr.bf16.mxu0 %v724
  %870 = vmatmul.mubr.bf16.gmra.mrb[0].mxu0 %v677
  %v871 = vpop.f32.mrb[0].mxu0
  %v872 = vadd.f32 %v784, %v871
  %v873 = vpop.f32.mrb[0].mxu0
  %v874 = vpop.f32.mrb[0].mxu0
  %v875 = vadd.f32 %v787, %v874
  %v876 = vpop.f32.mrb[0].mxu0
  %877 = vmatprep.mubr.bf16.mxu0 %v727
  %878 = vmatmul.mubr.bf16.gmra.mrb[0].mxu0 %v681
  %v879 = vpop.f32.mrb[0].mxu0
  %v880 = vadd.f32 %v792, %v879
  %v881 = vpop.f32.mrb[0].mxu0
  %v882 = vpop.f32.mrb[0].mxu0
  %v883 = vadd.f32 %v795, %v882
  %v884 = vpop.f32.mrb[0].mxu0
  %885 = vmatprep.mubr.bf16.mxu0 %v730
  %886 = vmatmul.mubr.bf16.gmra.mrb[0].mxu0 %v685
  %v887 = vpop.f32.mrb[0].mxu0
  %v888 = vadd.f32 %v800, %v887
  %v889 = vpop.f32.mrb[0].mxu0
  %v890 = vpop.f32.mrb[0].mxu0
  %v891 = vadd.f32 %v803, %v890
  %v892 = vpop.f32.mrb[0].mxu0
  %893 = vmatprep.mubr.bf16.mxu0 %v733
  %894 = vmatmul.mubr.bf16.gmra.mrb[0].mxu0 %v689
  %v895 = vpop.f32.mrb[0].mxu0
  %v896 = vadd.f32 %v808, %v895
  %v897 = vpop.f32.mrb[0].mxu0
  %v898 = vpop.f32.mrb[0].mxu0
  %v899 = vadd.f32 %v811, %v898
  %v900 = vpop.f32.mrb[0].mxu0
  %901 = vmatprep.mubr.bf16.mxu0 %v736
  %902 = vmatmul.mubr.bf16.gmra.mrb[0].mxu0 %v693
  %v903 = vpop.f32.mrb[0].mxu0
  %v904 = vadd.f32 %v816, %v903
  %v905 = vpop.f32.mrb[0].mxu0
  %v906 = vpop.f32.mrb[0].mxu0
  %v907 = vadd.f32 %v819, %v906
  %v908 = vpop.f32.mrb[0].mxu0
  %909 = vmatprep.mubr.bf16.mxu0 %v739
  %910 = vmatmul.mubr.bf16.gmra.mrb[0].mxu0 %v697
  %v911 = vpop.f32.mrb[0].mxu0
  %v912 = vadd.f32 %v824, %v911
  %v913 = vpop.f32.mrb[0].mxu0
  %v914 = vpop.f32.mrb[0].mxu0
  %v915 = vpop.f32.mrb[0].mxu0
  %916 = vdwg.mxu0
  %v917 = vmax.f32 %v513, %v864
  %v918 = vmax.f32 %v516, %v867
  %v919 = vmax.f32 %v521, %v872
  %v920 = vmax.f32 %v524, %v875
  %v921 = vmax.f32 %v529, %v880
  %v922 = vmax.f32 %v532, %v883
  %v923 = vmax.f32 %v537, %v888
  %v924 = vmax.f32 %v540, %v891
  %v925 = vmax.f32 %v545, %v896
  %v926 = vmax.f32 %v548, %v899
  %v927 = vmax.f32 %v553, %v904
  %v928 = vmax.f32 %v556, %v907
  %v929 = vmax.f32 %v561, %v912
  %s930 = scalar_lea.vmem %s0, 416
  %v931 = vld [vmem:[%s930] sm:$0xff]
  %v932 = vld [vmem:[%s930 + $0x8] sm:$0xff]
  %v933 = vld [vmem:[%s930 + $0x10] sm:$0xff]
  %v934 = vld [vmem:[%s930 + $0x18] sm:$0xff]
  %v935 = vld [vmem:[%s930 + $0x20] sm:$0xff]
  %v936 = vld [vmem:[%s930 + $0x28] sm:$0xff]
  %v937 = vld [vmem:[%s930 + $0x30] sm:$0xff]
  %v938 = vld [vmem:[%s930 + $0x38] sm:$0xff]
  %v939 = vld [vmem:[%s930 + $0x40] sm:$0xff]
  %v940 = vld [vmem:[%s930 + $0x48] sm:$0xff]
  %v941 = vld [vmem:[%s930 + $0x50] sm:$0xff]
  %v942 = vld [vmem:[%s930 + $0x58] sm:$0xff]
  %v943 = vld [vmem:[%s930 + $0x60] sm:$0xff]
  %v944 = vld [vmem:[%s930 + $0x68] sm:$0xff]
  %v945 = vld [vmem:[%s930 + $0x70] sm:$0xff]
  %v946 = vld [vmem:[%s930 + $0x78] sm:$0xff]
  %v947 = vld [vmem:[%s930 + $0x80] sm:$0xff]
  %v948 = vld [vmem:[%s930 + $0x88] sm:$0xff]
  %v949 = vld [vmem:[%s930 + $0x90] sm:$0xff]
  %v950 = vld [vmem:[%s930 + $0x98] sm:$0xff]
  %v951 = vld [vmem:[%s930 + $0xa0] sm:$0xff]
  %v952 = vld [vmem:[%s930 + $0xa8] sm:$0xff]
  %v953 = vld [vmem:[%s930 + $0xb0] sm:$0xff]
  %v954 = vld [vmem:[%s930 + $0xb8] sm:$0xff]
  %v955 = vld [vmem:[%s930 + $0xc0] sm:$0x11]
  %v956 = vld [vmem:[%s930 + $0xc8] sm:$0x11]
  %v983 = vunpack.c.l.b16 %v931
  %v984 = vunpack.c.h.b16 %v931
  %v985 = vunpack.c.l.b16 %v932
  %v986 = vunpack.c.h.b16 %v932
  %v987 = vunpack.c.l.b16 %v933
  %v988 = vunpack.c.h.b16 %v933
  %v989 = vunpack.c.l.b16 %v934
  %v990 = vunpack.c.h.b16 %v934
  %v991 = vunpack.c.l.b16 %v935
  %v992 = vunpack.c.h.b16 %v935
  %v993 = vunpack.c.l.b16 %v936
  %v994 = vunpack.c.h.b16 %v936
  %v995 = vunpack.c.l.b16 %v937
  %v996 = vunpack.c.h.b16 %v937
  %v997 = vunpack.c.l.b16 %v938
  %v998 = vunpack.c.h.b16 %v938
  %v999 = vunpack.c.l.b16 %v939
  %v1000 = vunpack.c.h.b16 %v939
  %v1001 = vunpack.c.l.b16 %v940
  %v1002 = vunpack.c.h.b16 %v940
  %v1003 = vunpack.c.l.b16 %v941
  %v1004 = vunpack.c.h.b16 %v941
  %v1005 = vunpack.c.l.b16 %v942
  %v1006 = vunpack.c.h.b16 %v942
  %v1007 = vunpack.c.l.b16 %v943
  %v1008 = vunpack.c.h.b16 %v943
  %v1009 = vunpack.c.l.b16 %v944
  %v1010 = vunpack.c.h.b16 %v944
  %v1011 = vunpack.c.l.b16 %v945
  %v1012 = vunpack.c.h.b16 %v945
  %v1013 = vunpack.c.l.b16 %v946
  %v1014 = vunpack.c.h.b16 %v946
  %v1015 = vunpack.c.l.b16 %v947
  %v1016 = vunpack.c.h.b16 %v947
  %v1017 = vunpack.c.l.b16 %v948
  %v1018 = vunpack.c.h.b16 %v948
  %v1019 = vunpack.c.l.b16 %v949
  %v1020 = vunpack.c.h.b16 %v949
  %v1021 = vunpack.c.l.b16 %v950
  %v1022 = vunpack.c.h.b16 %v950
  %v1023 = vunpack.c.l.b16 %v951
  %v1024 = vunpack.c.h.b16 %v951
  %v1025 = vunpack.c.l.b16 %v952
  %v1026 = vunpack.c.h.b16 %v952
  %v1027 = vunpack.c.l.b16 %v953
  %v1028 = vunpack.c.h.b16 %v953
  %v1029 = vunpack.c.l.b16 %v954
  %v1030 = vunpack.c.h.b16 %v954
  %v1031 = vunpack.c.l.b16 %v955
  %v1032 = vunpack.c.h.b16 %v955
  %v1033 = vunpack.c.l.b16 %v956
  %v1034 = vunpack.c.h.b16 %v956
  %v1035 = vpack.c.b16 %v987, %v983
  %v1036 = vpack.c.b16 %v988, %v984
  %v1037 = vpack.c.b16 %v989, %v985
  %v1038 = vpack.c.b16 %v990, %v986
  %v1039 = vpack.c.b16 %v995, %v991
  %v1040 = vpack.c.b16 %v996, %v992
  %v1041 = vpack.c.b16 %v997, %v993
  %v1042 = vpack.c.b16 %v998, %v994
  %v1043 = vpack.c.b16 %v1003, %v999
  %v1044 = vpack.c.b16 %v1004, %v1000
  %v1045 = vpack.c.b16 %v1005, %v1001
  %v1046 = vpack.c.b16 %v1006, %v1002
  %v1047 = vpack.c.b16 %v1011, %v1007
  %v1048 = vpack.c.b16 %v1012, %v1008
  %v1049 = vpack.c.b16 %v1013, %v1009
  %v1050 = vpack.c.b16 %v1014, %v1010
  %v1051 = vpack.c.b16 %v1019, %v1015
  %v1052 = vpack.c.b16 %v1020, %v1016
  %v1053 = vpack.c.b16 %v1021, %v1017
  %v1054 = vpack.c.b16 %v1022, %v1018
  %v1055 = vpack.c.b16 %v1027, %v1023
  %v1056 = vpack.c.b16 %v1028, %v1024
  %v1057 = vpack.c.b16 %v1029, %v1025
  %v1058 = vpack.c.b16 %v1030, %v1026
  %v1059 = vpack.c.b16 %v1031, %v1031
  %v1060 = vpack.c.b16 %v1032, %v1032
  %v1061 = vpack.c.b16 %v1033, %v1033
  %v1062 = vpack.c.b16 %v1034, %v1034
  %v1085 = vsel %vm368, %v1038, 0
  %v1088 = vsel %vm368, %v1042, 0
  %v1091 = vsel %vm368, %v1046, 0
  %v1094 = vsel %vm368, %v1050, 0
  %v1097 = vsel %vm368, %v1054, 0
  %v1100 = vsel %vm368, %v1058, 0
  %v1103 = vsel %vm368, %v1062, 0
  %1105 = vmatprep.subr.bf16.mxu0 0
  %1106 = vmatpush1.bf16.msra.mxu0 %v318
  %1107 = vmatprep.subr.bf16.mxu0 0
  %1108 = vmatpush1.bf16.msra.mxu0 %v319
  %1109 = vmatprep.subr.bf16.mxu0 0
  %1110 = vmatpush1.bf16.msra.mxu0 %v320
  %1111 = vmatprep.subr.bf16.mxu0 0
  %1112 = vmatpush1.bf16.msra.mxu0 %v321
  %1113 = vmatprep.subr.bf16.mxu0 0
  %1114 = vmatpush1.bf16.msra.mxu0 %v322
  %1115 = vmatprep.subr.bf16.mxu0 0
  %1116 = vmatpush1.bf16.msra.mxu0 %v323
  %1117 = vmatprep.subr.bf16.mxu0 0
  %1118 = vmatpush1.bf16.msra.mxu0 %v324
  %1119 = vmatprep.subr.bf16.mxu0 0
  %1120 = vmatpush1.bf16.msra.mxu0 %v325
  %1121 = vmatprep.subr.bf16.mxu0 0
  %1122 = vmatpush1.bf16.msra.mxu0 %v326
  %1123 = vmatprep.subr.bf16.mxu0 0
  %1124 = vmatpush1.bf16.msra.mxu0 %v327
  %1125 = vmatprep.subr.bf16.mxu0 0
  %1126 = vmatpush1.bf16.msra.mxu0 %v328
  %1127 = vmatprep.subr.bf16.mxu0 0
  %1128 = vmatpush1.bf16.msra.mxu0 %v329
  %1129 = vmatprep.subr.bf16.mxu0 0
  %1130 = vmatpush1.bf16.msra.mxu0 %v330
  %1131 = vmatprep.subr.bf16.mxu0 0
  %1132 = vmatpush1.bf16.msra.mxu0 %v331
  %1133 = vmatprep.subr.bf16.mxu0 0
  %1134 = vmatpush1.bf16.msra.mxu0 %v332
  %1135 = vmatprep.subr.bf16.mxu0 0
  %1136 = vmatpush1.bf16.msra.mxu0 %v333
  %1137 = vmatprep.mubr.bf16.mxu0 %v1036
  %1138 = vmatmul.mubr.bf16.gmra.mrb[0].mxu0 %v1035
  %v1139 = vpop.f32.mrb[0].mxu0
  %v1140 = vadd.f32 0.0, %v1139
  %v1141 = vpop.f32.mrb[0].mxu0
  %v1142 = vpop.f32.mrb[0].mxu0
  %v1143 = vadd.f32 0.0, %v1142
  %v1144 = vpop.f32.mrb[0].mxu0
  %1145 = vmatprep.mubr.bf16.mxu0 %v1040
  %1146 = vmatmul.mubr.bf16.gmra.mrb[0].mxu0 %v1039
  %v1147 = vpop.f32.mrb[0].mxu0
  %v1148 = vadd.f32 0.0, %v1147
  %v1149 = vpop.f32.mrb[0].mxu0
  %v1150 = vpop.f32.mrb[0].mxu0
  %v1151 = vadd.f32 0.0, %v1150
  %v1152 = vpop.f32.mrb[0].mxu0
  %1153 = vmatprep.mubr.bf16.mxu0 %v1044
  %1154 = vmatmul.mubr.bf16.gmra.mrb[0].mxu0 %v1043
  %v1155 = vpop.f32.mrb[0].mxu0
  %v1156 = vadd.f32 0.0, %v1155
  %v1157 = vpop.f32.mrb[0].mxu0
  %v1158 = vpop.f32.mrb[0].mxu0
  %v1159 = vadd.f32 0.0, %v1158
  %v1160 = vpop.f32.mrb[0].mxu0
  %1161 = vmatprep.mubr.bf16.mxu0 %v1048
  %1162 = vmatmul.mubr.bf16.gmra.mrb[0].mxu0 %v1047
  %v1163 = vpop.f32.mrb[0].mxu0
  %v1164 = vadd.f32 0.0, %v1163
  %v1165 = vpop.f32.mrb[0].mxu0
  %v1166 = vpop.f32.mrb[0].mxu0
  %v1167 = vadd.f32 0.0, %v1166
  %v1168 = vpop.f32.mrb[0].mxu0
  %1169 = vmatprep.mubr.bf16.mxu0 %v1052
  %1170 = vmatmul.mubr.bf16.gmra.mrb[0].mxu0 %v1051
  %v1171 = vpop.f32.mrb[0].mxu0
  %v1172 = vadd.f32 0.0, %v1171
  %v1173 = vpop.f32.mrb[0].mxu0
  %v1174 = vpop.f32.mrb[0].mxu0
  %v1175 = vadd.f32 0.0, %v1174
  %v1176 = vpop.f32.mrb[0].mxu0
  %1177 = vmatprep.mubr.bf16.mxu0 %v1056
  %1178 = vmatmul.mubr.bf16.gmra.mrb[0].mxu0 %v1055
  %v1179 = vpop.f32.mrb[0].mxu0
  %v1180 = vadd.f32 0.0, %v1179
  %v1181 = vpop.f32.mrb[0].mxu0
  %v1182 = vpop.f32.mrb[0].mxu0
  %v1183 = vadd.f32 0.0, %v1182
  %v1184 = vpop.f32.mrb[0].mxu0
  %1185 = vmatprep.mubr.bf16.mxu0 %v1060
  %1186 = vmatmul.mubr.bf16.gmra.mrb[0].mxu0 %v1059
  %v1187 = vpop.f32.mrb[0].mxu0
  %v1188 = vadd.f32 0.0, %v1187
  %v1189 = vpop.f32.mrb[0].mxu0
  %v1190 = vpop.f32.mrb[0].mxu0
  %v1191 = vpop.f32.mrb[0].mxu0
  %1192 = vdwg.mxu0
  %1193 = vmatprep.subr.bf16.mxu0 0
  %1194 = vmatpush1.bf16.msra.mxu0 %v334
  %1195 = vmatprep.subr.bf16.mxu0 0
  %1196 = vmatpush1.bf16.msra.mxu0 %v335
  %1197 = vmatprep.subr.bf16.mxu0 0
  %1198 = vmatpush1.bf16.msra.mxu0 %v336
  %1199 = vmatprep.subr.bf16.mxu0 0
  %1200 = vmatpush1.bf16.msra.mxu0 %v337
  %1201 = vmatprep.subr.bf16.mxu0 0
  %1202 = vmatpush1.bf16.msra.mxu0 %v338
  %1203 = vmatprep.subr.bf16.mxu0 0
  %1204 = vmatpush1.bf16.msra.mxu0 %v339
  %1205 = vmatprep.subr.bf16.mxu0 0
  %1206 = vmatpush1.bf16.msra.mxu0 %v340
  %1207 = vmatprep.subr.bf16.mxu0 0
  %1208 = vmatpush1.bf16.msra.mxu0 %v341
  %1209 = vmatprep.subr.bf16.mxu0 0
  %1210 = vmatpush1.bf16.msra.mxu0 %v342
  %1211 = vmatprep.subr.bf16.mxu0 0
  %1212 = vmatpush1.bf16.msra.mxu0 0
  %1213 = vmatprep.subr.bf16.mxu0 0
  %1214 = vmatpush1.bf16.msra.mxu0 0
  %1215 = vmatprep.subr.bf16.mxu0 0
  %1216 = vmatpush1.bf16.msra.mxu0 0
  %1217 = vmatprep.subr.bf16.mxu0 0
  %1218 = vmatpush1.bf16.msra.mxu0 0
  %1219 = vmatprep.subr.bf16.mxu0 0
  %1220 = vmatpush1.bf16.msra.mxu0 0
  %1221 = vmatprep.subr.bf16.mxu0 0
  %1222 = vmatpush1.bf16.msra.mxu0 0
  %1223 = vmatprep.subr.bf16.mxu0 0
  %1224 = vmatpush1.bf16.msra.mxu0 0
  %1225 = vmatprep.mubr.bf16.mxu0 %v1085
  %1226 = vmatmul.mubr.bf16.gmra.mrb[0].mxu0 %v1037
  %v1227 = vpop.f32.mrb[0].mxu0
  %v1228 = vadd.f32 %v1140, %v1227
  %v1229 = vpop.f32.mrb[0].mxu0
  %v1230 = vpop.f32.mrb[0].mxu0
  %v1231 = vadd.f32 %v1143, %v1230
  %v1232 = vpop.f32.mrb[0].mxu0
  %1233 = vmatprep.mubr.bf16.mxu0 %v1088
  %1234 = vmatmul.mubr.bf16.gmra.mrb[0].mxu0 %v1041
  %v1235 = vpop.f32.mrb[0].mxu0
  %v1236 = vadd.f32 %v1148, %v1235
  %v1237 = vpop.f32.mrb[0].mxu0
  %v1238 = vpop.f32.mrb[0].mxu0
  %v1239 = vadd.f32 %v1151, %v1238
  %v1240 = vpop.f32.mrb[0].mxu0
  %1241 = vmatprep.mubr.bf16.mxu0 %v1091
  %1242 = vmatmul.mubr.bf16.gmra.mrb[0].mxu0 %v1045
  %v1243 = vpop.f32.mrb[0].mxu0
  %v1244 = vadd.f32 %v1156, %v1243
  %v1245 = vpop.f32.mrb[0].mxu0
  %v1246 = vpop.f32.mrb[0].mxu0
  %v1247 = vadd.f32 %v1159, %v1246
  %v1248 = vpop.f32.mrb[0].mxu0
  %1249 = vmatprep.mubr.bf16.mxu0 %v1094
  %1250 = vmatmul.mubr.bf16.gmra.mrb[0].mxu0 %v1049
  %v1251 = vpop.f32.mrb[0].mxu0
  %v1252 = vadd.f32 %v1164, %v1251
  %v1253 = vpop.f32.mrb[0].mxu0
  %v1254 = vpop.f32.mrb[0].mxu0
  %v1255 = vadd.f32 %v1167, %v1254
  %v1256 = vpop.f32.mrb[0].mxu0
  %1257 = vmatprep.mubr.bf16.mxu0 %v1097
  %1258 = vmatmul.mubr.bf16.gmra.mrb[0].mxu0 %v1053
  %v1259 = vpop.f32.mrb[0].mxu0
  %v1260 = vadd.f32 %v1172, %v1259
  %v1261 = vpop.f32.mrb[0].mxu0
  %v1262 = vpop.f32.mrb[0].mxu0
  %v1263 = vadd.f32 %v1175, %v1262
  %v1264 = vpop.f32.mrb[0].mxu0
  %1265 = vmatprep.mubr.bf16.mxu0 %v1100
  %1266 = vmatmul.mubr.bf16.gmra.mrb[0].mxu0 %v1057
  %v1267 = vpop.f32.mrb[0].mxu0
  %v1268 = vadd.f32 %v1180, %v1267
  %v1269 = vpop.f32.mrb[0].mxu0
  %v1270 = vpop.f32.mrb[0].mxu0
  %v1271 = vadd.f32 %v1183, %v1270
  %v1272 = vpop.f32.mrb[0].mxu0
  %1273 = vmatprep.mubr.bf16.mxu0 %v1103
  %1274 = vmatmul.mubr.bf16.gmra.mrb[0].mxu0 %v1061
  %v1275 = vpop.f32.mrb[0].mxu0
  %v1276 = vadd.f32 %v1188, %v1275
  %v1277 = vpop.f32.mrb[0].mxu0
  %v1278 = vpop.f32.mrb[0].mxu0
  %v1279 = vpop.f32.mrb[0].mxu0
  %1280 = vdwg.mxu0
  %v1281 = vmax.f32 %v917, %v1228
  %v1282 = vmax.f32 %v918, %v1231
  %v1283 = vmax.f32 %v919, %v1236
  %v1284 = vmax.f32 %v920, %v1239
  %v1285 = vmax.f32 %v921, %v1244
  %v1286 = vmax.f32 %v922, %v1247
  %v1287 = vmax.f32 %v923, %v1252
  %v1288 = vmax.f32 %v924, %v1255
  %v1289 = vmax.f32 %v925, %v1260
  %v1290 = vmax.f32 %v926, %v1263
  %v1291 = vmax.f32 %v927, %v1268
  %v1292 = vmax.f32 %v928, %v1271
  %v1293 = vmax.f32 %v929, %v1276
  %s1294 = scalar_lea.vmem %s0, 624
  %v1295 = vld [vmem:[%s1294] sm:$0xff]
  %v1296 = vld [vmem:[%s1294 + $0x8] sm:$0xff]
  %v1297 = vld [vmem:[%s1294 + $0x10] sm:$0xff]
  %v1298 = vld [vmem:[%s1294 + $0x18] sm:$0xff]
  %v1299 = vld [vmem:[%s1294 + $0x20] sm:$0xff]
  %v1300 = vld [vmem:[%s1294 + $0x28] sm:$0xff]
  %v1301 = vld [vmem:[%s1294 + $0x30] sm:$0xff]
  %v1302 = vld [vmem:[%s1294 + $0x38] sm:$0xff]
  %v1303 = vld [vmem:[%s1294 + $0x40] sm:$0xff]
  %v1304 = vld [vmem:[%s1294 + $0x48] sm:$0xff]
  %v1305 = vld [vmem:[%s1294 + $0x50] sm:$0xff]
  %v1306 = vld [vmem:[%s1294 + $0x58] sm:$0xff]
  %v1307 = vld [vmem:[%s1294 + $0x60] sm:$0xff]
  %v1308 = vld [vmem:[%s1294 + $0x68] sm:$0xff]
  %v1309 = vld [vmem:[%s1294 + $0x70] sm:$0xff]
  %v1310 = vld [vmem:[%s1294 + $0x78] sm:$0xff]
  %v1311 = vld [vmem:[%s1294 + $0x80] sm:$0xff]
  %v1312 = vld [vmem:[%s1294 + $0x88] sm:$0xff]
  %v1313 = vld [vmem:[%s1294 + $0x90] sm:$0xff]
  %v1314 = vld [vmem:[%s1294 + $0x98] sm:$0xff]
  %v1315 = vld [vmem:[%s1294 + $0xa0] sm:$0xff]
  %v1316 = vld [vmem:[%s1294 + $0xa8] sm:$0xff]
  %v1317 = vld [vmem:[%s1294 + $0xb0] sm:$0xff]
  %v1318 = vld [vmem:[%s1294 + $0xb8] sm:$0xff]
  %v1319 = vld [vmem:[%s1294 + $0xc0] sm:$0x11]
  %v1320 = vld [vmem:[%s1294 + $0xc8] sm:$0x11]
  %v1347 = vunpack.c.l.b16 %v1295
  %v1348 = vunpack.c.h.b16 %v1295
  %v1349 = vunpack.c.l.b16 %v1296
  %v1350 = vunpack.c.h.b16 %v1296
  %v1351 = vunpack.c.l.b16 %v1297
  %v1352 = vunpack.c.h.b16 %v1297
  %v1353 = vunpack.c.l.b16 %v1298
  %v1354 = vunpack.c.h.b16 %v1298
  %v1355 = vunpack.c.l.b16 %v1299
  %v1356 = vunpack.c.h.b16 %v1299
  %v1357 = vunpack.c.l.b16 %v1300
  %v1358 = vunpack.c.h.b16 %v1300
  %v1359 = vunpack.c.l.b16 %v1301
  %v1360 = vunpack.c.h.b16 %v1301
  %v1361 = vunpack.c.l.b16 %v1302
  %v1362 = vunpack.c.h.b16 %v1302
  %v1363 = vunpack.c.l.b16 %v1303
  %v1364 = vunpack.c.h.b16 %v1303
  %v1365 = vunpack.c.l.b16 %v1304
  %v1366 = vunpack.c.h.b16 %v1304
  %v1367 = vunpack.c.l.b16 %v1305
  %v1368 = vunpack.c.h.b16 %v1305
  %v1369 = vunpack.c.l.b16 %v1306
  %v1370 = vunpack.c.h.b16 %v1306
  %v1371 = vunpack.c.l.b16 %v1307
  %v1372 = vunpack.c.h.b16 %v1307
  %v1373 = vunpack.c.l.b16 %v1308
  %v1374 = vunpack.c.h.b16 %v1308
  %v1375 = vunpack.c.l.b16 %v1309
  %v1376 = vunpack.c.h.b16 %v1309
  %v1377 = vunpack.c.l.b16 %v1310
  %v1378 = vunpack.c.h.b16 %v1310
  %v1379 = vunpack.c.l.b16 %v1311
  %v1380 = vunpack.c.h.b16 %v1311
  %v1381 = vunpack.c.l.b16 %v1312
  %v1382 = vunpack.c.h.b16 %v1312
  %v1383 = vunpack.c.l.b16 %v1313
  %v1384 = vunpack.c.h.b16 %v1313
  %v1385 = vunpack.c.l.b16 %v1314
  %v1386 = vunpack.c.h.b16 %v1314
  %v1387 = vunpack.c.l.b16 %v1315
  %v1388 = vunpack.c.h.b16 %v1315
  %v1389 = vunpack.c.l.b16 %v1316
  %v1390 = vunpack.c.h.b16 %v1316
  %v1391 = vunpack.c.l.b16 %v1317
  %v1392 = vunpack.c.h.b16 %v1317
  %v1393 = vunpack.c.l.b16 %v1318
  %v1394 = vunpack.c.h.b16 %v1318
  %v1395 = vunpack.c.l.b16 %v1319
  %v1396 = vunpack.c.h.b16 %v1319
  %v1397 = vunpack.c.l.b16 %v1320
  %v1398 = vunpack.c.h.b16 %v1320
  %v1399 = vpack.c.b16 %v1351, %v1347
  %v1400 = vpack.c.b16 %v1352, %v1348
  %v1401 = vpack.c.b16 %v1353, %v1349
  %v1402 = vpack.c.b16 %v1354, %v1350
  %v1403 = vpack.c.b16 %v1359, %v1355
  %v1404 = vpack.c.b16 %v1360, %v1356
  %v1405 = vpack.c.b16 %v1361, %v1357
  %v1406 = vpack.c.b16 %v1362, %v1358
  %v1407 = vpack.c.b16 %v1367, %v1363
  %v1408 = vpack.c.b16 %v1368, %v1364
  %v1409 = vpack.c.b16 %v1369, %v1365
  %v1410 = vpack.c.b16 %v1370, %v1366
  %v1411 = vpack.c.b16 %v1375, %v1371
  %v1412 = vpack.c.b16 %v1376, %v1372
  %v1413 = vpack.c.b16 %v1377, %v1373
  %v1414 = vpack.c.b16 %v1378, %v1374
  %v1415 = vpack.c.b16 %v1383, %v1379
  %v1416 = vpack.c.b16 %v1384, %v1380
  %v1417 = vpack.c.b16 %v1385, %v1381
  %v1418 = vpack.c.b16 %v1386, %v1382
  %v1419 = vpack.c.b16 %v1391, %v1387
  %v1420 = vpack.c.b16 %v1392, %v1388
  %v1421 = vpack.c.b16 %v1393, %v1389
  %v1422 = vpack.c.b16 %v1394, %v1390
  %v1423 = vpack.c.b16 %v1395, %v1395
  %v1424 = vpack.c.b16 %v1396, %v1396
  %v1425 = vpack.c.b16 %v1397, %v1397
  %v1426 = vpack.c.b16 %v1398, %v1398
  %v1449 = vsel %vm368, %v1402, 0
  %v1452 = vsel %vm368, %v1406, 0
  %v1455 = vsel %vm368, %v1410, 0
  %v1458 = vsel %vm368, %v1414, 0
  %v1461 = vsel %vm368, %v1418, 0
  %v1464 = vsel %vm368, %v1422, 0
  %v1467 = vsel %vm368, %v1426, 0
  %1469 = vmatprep.subr.bf16.mxu0 0
  %1470 = vmatpush1.bf16.msra.mxu0 %v318
  %1471 = vmatprep.subr.bf16.mxu0 0
  %1472 = vmatpush1.bf16.msra.mxu0 %v319
  %1473 = vmatprep.subr.bf16.mxu0 0
  %1474 = vmatpush1.bf16.msra.mxu0 %v320
  %1475 = vmatprep.subr.bf16.mxu0 0
  %1476 = vmatpush1.bf16.msra.mxu0 %v321
  %1477 = vmatprep.subr.bf16.mxu0 0
  %1478 = vmatpush1.bf16.msra.mxu0 %v322
  %1479 = vmatprep.subr.bf16.mxu0 0
  %1480 = vmatpush1.bf16.msra.mxu0 %v323
  %1481 = vmatprep.subr.bf16.mxu0 0
  %1482 = vmatpush1.bf16.msra.mxu0 %v324
  %1483 = vmatprep.subr.bf16.mxu0 0
  %1484 = vmatpush1.bf16.msra.mxu0 %v325
  %1485 = vmatprep.subr.bf16.mxu0 0
  %1486 = vmatpush1.bf16.msra.mxu0 %v326
  %1487 = vmatprep.subr.bf16.mxu0 0
  %1488 = vmatpush1.bf16.msra.mxu0 %v327
  %1489 = vmatprep.subr.bf16.mxu0 0
  %1490 = vmatpush1.bf16.msra.mxu0 %v328
  %1491 = vmatprep.subr.bf16.mxu0 0
  %1492 = vmatpush1.bf16.msra.mxu0 %v329
  %1493 = vmatprep.subr.bf16.mxu0 0
  %1494 = vmatpush1.bf16.msra.mxu0 %v330
  %1495 = vmatprep.subr.bf16.mxu0 0
  %1496 = vmatpush1.bf16.msra.mxu0 %v331
  %1497 = vmatprep.subr.bf16.mxu0 0
  %1498 = vmatpush1.bf16.msra.mxu0 %v332
  %1499 = vmatprep.subr.bf16.mxu0 0
  %1500 = vmatpush1.bf16.msra.mxu0 %v333
  %1501 = vmatprep.mubr.bf16.mxu0 %v1400
  %1502 = vmatmul.mubr.bf16.gmra.mrb[0].mxu0 %v1399
  %v1503 = vpop.f32.mrb[0].mxu0
  %v1504 = vadd.f32 0.0, %v1503
  %v1505 = vpop.f32.mrb[0].mxu0
  %v1506 = vpop.f32.mrb[0].mxu0
  %v1507 = vadd.f32 0.0, %v1506
  %v1508 = vpop.f32.mrb[0].mxu0
  %1509 = vmatprep.mubr.bf16.mxu0 %v1404
  %1510 = vmatmul.mubr.bf16.gmra.mrb[0].mxu0 %v1403
  %v1511 = vpop.f32.mrb[0].mxu0
  %v1512 = vadd.f32 0.0, %v1511
  %v1513 = vpop.f32.mrb[0].mxu0
  %v1514 = vpop.f32.mrb[0].mxu0
  %v1515 = vadd.f32 0.0, %v1514
  %v1516 = vpop.f32.mrb[0].mxu0
  %1517 = vmatprep.mubr.bf16.mxu0 %v1408
  %1518 = vmatmul.mubr.bf16.gmra.mrb[0].mxu0 %v1407
  %v1519 = vpop.f32.mrb[0].mxu0
  %v1520 = vadd.f32 0.0, %v1519
  %v1521 = vpop.f32.mrb[0].mxu0
  %v1522 = vpop.f32.mrb[0].mxu0
  %v1523 = vadd.f32 0.0, %v1522
  %v1524 = vpop.f32.mrb[0].mxu0
  %1525 = vmatprep.mubr.bf16.mxu0 %v1412
  %1526 = vmatmul.mubr.bf16.gmra.mrb[0].mxu0 %v1411
  %v1527 = vpop.f32.mrb[0].mxu0
  %v1528 = vadd.f32 0.0, %v1527
  %v1529 = vpop.f32.mrb[0].mxu0
  %v1530 = vpop.f32.mrb[0].mxu0
  %v1531 = vadd.f32 0.0, %v1530
  %v1532 = vpop.f32.mrb[0].mxu0
  %1533 = vmatprep.mubr.bf16.mxu0 %v1416
  %1534 = vmatmul.mubr.bf16.gmra.mrb[0].mxu0 %v1415
  %v1535 = vpop.f32.mrb[0].mxu0
  %v1536 = vadd.f32 0.0, %v1535
  %v1537 = vpop.f32.mrb[0].mxu0
  %v1538 = vpop.f32.mrb[0].mxu0
  %v1539 = vadd.f32 0.0, %v1538
  %v1540 = vpop.f32.mrb[0].mxu0
  %1541 = vmatprep.mubr.bf16.mxu0 %v1420
  %1542 = vmatmul.mubr.bf16.gmra.mrb[0].mxu0 %v1419
  %v1543 = vpop.f32.mrb[0].mxu0
  %v1544 = vadd.f32 0.0, %v1543
  %v1545 = vpop.f32.mrb[0].mxu0
  %v1546 = vpop.f32.mrb[0].mxu0
  %v1547 = vadd.f32 0.0, %v1546
  %v1548 = vpop.f32.mrb[0].mxu0
  %1549 = vmatprep.mubr.bf16.mxu0 %v1424
  %1550 = vmatmul.mubr.bf16.gmra.mrb[0].mxu0 %v1423
  %v1551 = vpop.f32.mrb[0].mxu0
  %v1552 = vadd.f32 0.0, %v1551
  %v1553 = vpop.f32.mrb[0].mxu0
  %v1554 = vpop.f32.mrb[0].mxu0
  %v1555 = vpop.f32.mrb[0].mxu0
  %1556 = vdwg.mxu0
  %1557 = vmatprep.subr.bf16.mxu0 0
  %1558 = vmatpush1.bf16.msra.mxu0 %v334
  %1559 = vmatprep.subr.bf16.mxu0 0
  %1560 = vmatpush1.bf16.msra.mxu0 %v335
  %1561 = vmatprep.subr.bf16.mxu0 0
  %1562 = vmatpush1.bf16.msra.mxu0 %v336
  %1563 = vmatprep.subr.bf16.mxu0 0
  %1564 = vmatpush1.bf16.msra.mxu0 %v337
  %1565 = vmatprep.subr.bf16.mxu0 0
  %1566 = vmatpush1.bf16.msra.mxu0 %v338
  %1567 = vmatprep.subr.bf16.mxu0 0
  %1568 = vmatpush1.bf16.msra.mxu0 %v339
  %1569 = vmatprep.subr.bf16.mxu0 0
  %1570 = vmatpush1.bf16.msra.mxu0 %v340
  %1571 = vmatprep.subr.bf16.mxu0 0
  %1572 = vmatpush1.bf16.msra.mxu0 %v341
  %1573 = vmatprep.subr.bf16.mxu0 0
  %1574 = vmatpush1.bf16.msra.mxu0 %v342
  %1575 = vmatprep.subr.bf16.mxu0 0
  %1576 = vmatpush1.bf16.msra.mxu0 0
  %1577 = vmatprep.subr.bf16.mxu0 0
  %1578 = vmatpush1.bf16.msra.mxu0 0
  %1579 = vmatprep.subr.bf16.mxu0 0
  %1580 = vmatpush1.bf16.msra.mxu0 0
  %1581 = vmatprep.subr.bf16.mxu0 0
  %1582 = vmatpush1.bf16.msra.mxu0 0
  %1583 = vmatprep.subr.bf16.mxu0 0
  %1584 = vmatpush1.bf16.msra.mxu0 0
  %1585 = vmatprep.subr.bf16.mxu0 0
  %1586 = vmatpush1.bf16.msra.mxu0 0
  %1587 = vmatprep.subr.bf16.mxu0 0
  %1588 = vmatpush1.bf16.msra.mxu0 0
  %1589 = vmatprep.mubr.bf16.mxu0 %v1449
  %1590 = vmatmul.mubr.bf16.gmra.mrb[0].mxu0 %v1401
  %v1591 = vpop.f32.mrb[0].mxu0
  %v1592 = vadd.f32 %v1504, %v1591
  %v1593 = vpop.f32.mrb[0].mxu0
  %v1594 = vpop.f32.mrb[0].mxu0
  %v1595 = vadd.f32 %v1507, %v1594
  %v1596 = vpop.f32.mrb[0].mxu0
  %1597 = vmatprep.mubr.bf16.mxu0 %v1452
  %1598 = vmatmul.mubr.bf16.gmra.mrb[0].mxu0 %v1405
  %v1599 = vpop.f32.mrb[0].mxu0
  %v1600 = vadd.f32 %v1512, %v1599
  %v1601 = vpop.f32.mrb[0].mxu0
  %v1602 = vpop.f32.mrb[0].mxu0
  %v1603 = vadd.f32 %v1515, %v1602
  %v1604 = vpop.f32.mrb[0].mxu0
  %1605 = vmatprep.mubr.bf16.mxu0 %v1455
  %1606 = vmatmul.mubr.bf16.gmra.mrb[0].mxu0 %v1409
  %v1607 = vpop.f32.mrb[0].mxu0
  %v1608 = vadd.f32 %v1520, %v1607
  %v1609 = vpop.f32.mrb[0].mxu0
  %v1610 = vpop.f32.mrb[0].mxu0
  %v1611 = vadd.f32 %v1523, %v1610
  %v1612 = vpop.f32.mrb[0].mxu0
  %1613 = vmatprep.mubr.bf16.mxu0 %v1458
  %1614 = vmatmul.mubr.bf16.gmra.mrb[0].mxu0 %v1413
  %v1615 = vpop.f32.mrb[0].mxu0
  %v1616 = vadd.f32 %v1528, %v1615
  %v1617 = vpop.f32.mrb[0].mxu0
  %v1618 = vpop.f32.mrb[0].mxu0
  %v1619 = vadd.f32 %v1531, %v1618
  %v1620 = vpop.f32.mrb[0].mxu0
  %1621 = vmatprep.mubr.bf16.mxu0 %v1461
  %1622 = vmatmul.mubr.bf16.gmra.mrb[0].mxu0 %v1417
  %v1623 = vpop.f32.mrb[0].mxu0
  %v1624 = vadd.f32 %v1536, %v1623
  %v1625 = vpop.f32.mrb[0].mxu0
  %v1626 = vpop.f32.mrb[0].mxu0
  %v1627 = vadd.f32 %v1539, %v1626
  %v1628 = vpop.f32.mrb[0].mxu0
  %1629 = vmatprep.mubr.bf16.mxu0 %v1464
  %1630 = vmatmul.mubr.bf16.gmra.mrb[0].mxu0 %v1421
  %v1631 = vpop.f32.mrb[0].mxu0
  %v1632 = vadd.f32 %v1544, %v1631
  %v1633 = vpop.f32.mrb[0].mxu0
  %v1634 = vpop.f32.mrb[0].mxu0
  %v1635 = vadd.f32 %v1547, %v1634
  %v1636 = vpop.f32.mrb[0].mxu0
  %1637 = vmatprep.mubr.bf16.mxu0 %v1467
  %1638 = vmatmul.mubr.bf16.gmra.mrb[0].mxu0 %v1425
  %v1639 = vpop.f32.mrb[0].mxu0
  %v1640 = vadd.f32 %v1552, %v1639
  %v1641 = vpop.f32.mrb[0].mxu0
  %v1642 = vpop.f32.mrb[0].mxu0
  %v1643 = vpop.f32.mrb[0].mxu0
  %1644 = vdwg.mxu0
  %v1645 = vmax.f32 %v1281, %v1592
  %v1646 = vmax.f32 %v1282, %v1595
  %v1647 = vmax.f32 %v1283, %v1600
  %v1648 = vmax.f32 %v1284, %v1603
  %v1649 = vmax.f32 %v1285, %v1608
  %v1650 = vmax.f32 %v1286, %v1611
  %v1651 = vmax.f32 %v1287, %v1616
  %v1652 = vmax.f32 %v1288, %v1619
  %v1653 = vmax.f32 %v1289, %v1624
  %v1654 = vmax.f32 %v1290, %v1627
  %v1655 = vmax.f32 %v1291, %v1632
  %v1656 = vmax.f32 %v1292, %v1635
  %v1657 = vmax.f32 %v1293, %v1640
  %v1658 = vld [vmem:[%s2] sm:$0x1]
  %v1660 = vlaneseq
  %v1661 = vshrl.u32 %v1660, 7
  %v1662 = vsub.s32 0, %v1661
  %v1663 = vrot.slane %v1658, %v1662
  %v1665 = vadd.f32 %v1645, %v1663
  %v1666 = vadd.f32 %v1646, %v1663
  %v1667 = vadd.f32 %v1647, %v1663
  %v1668 = vadd.f32 %v1648, %v1663
  %v1669 = vadd.f32 %v1649, %v1663
  %v1670 = vadd.f32 %v1650, %v1663
  %v1671 = vadd.f32 %v1651, %v1663
  %v1672 = vadd.f32 %v1652, %v1663
  %v1673 = vadd.f32 %v1653, %v1663
  %v1674 = vadd.f32 %v1654, %v1663
  %v1675 = vadd.f32 %v1655, %v1663
  %v1676 = vadd.f32 %v1656, %v1663
  %v1677 = vadd.f32 %v1657, %v1663
  %v1678 = vmax.f32 %v1665, 0.0
  %v1679 = vmax.f32 %v1666, 0.0
  %v1680 = vmax.f32 %v1667, 0.0
  %v1681 = vmax.f32 %v1668, 0.0
  %v1682 = vmax.f32 %v1669, 0.0
  %v1683 = vmax.f32 %v1670, 0.0
  %v1684 = vmax.f32 %v1671, 0.0
  %v1685 = vmax.f32 %v1672, 0.0
  %v1686 = vmax.f32 %v1673, 0.0
  %v1687 = vmax.f32 %v1674, 0.0
  %v1688 = vmax.f32 %v1675, 0.0
  %v1689 = vmax.f32 %v1676, 0.0
  %v1690 = vmax.f32 %v1677, 0.0
  %v1691 = vpack.c.bf16 %v1679, %v1678
  %v1692 = vpack.c.bf16 %v1681, %v1680
  %v1693 = vpack.c.bf16 %v1683, %v1682
  %v1694 = vpack.c.bf16 %v1685, %v1684
  %v1695 = vpack.c.bf16 %v1687, %v1686
  %v1696 = vpack.c.bf16 %v1689, %v1688
  %v1697 = vpack.c.bf16 %v1690, %v1690
  %v1705 = vunpack.c.l.b16 %v1691
  %v1706 = vunpack.c.h.b16 %v1691
  %v1707 = vunpack.c.l.b16 %v1692
  %v1708 = vunpack.c.h.b16 %v1692
  %v1709 = vunpack.c.l.b16 %v1693
  %v1710 = vunpack.c.h.b16 %v1693
  %v1711 = vunpack.c.l.b16 %v1694
  %v1712 = vunpack.c.h.b16 %v1694
  %v1713 = vunpack.c.l.b16 %v1695
  %v1714 = vunpack.c.h.b16 %v1695
  %v1715 = vunpack.c.l.b16 %v1696
  %v1716 = vunpack.c.h.b16 %v1696
  %v1717 = vunpack.c.l.b16 %v1697
  %v1718 = vpack.c.b16 %v1705, %v1705
  %v1719 = vpack.c.b16 %v1706, %v1706
  %v1720 = vpack.c.b16 %v1707, %v1707
  %v1721 = vpack.c.b16 %v1708, %v1708
  %v1722 = vpack.c.b16 %v1709, %v1709
  %v1723 = vpack.c.b16 %v1710, %v1710
  %v1724 = vpack.c.b16 %v1711, %v1711
  %v1725 = vpack.c.b16 %v1712, %v1712
  %v1726 = vpack.c.b16 %v1713, %v1713
  %v1727 = vpack.c.b16 %v1714, %v1714
  %v1728 = vpack.c.b16 %v1715, %v1715
  %v1729 = vpack.c.b16 %v1716, %v1716
  %v1730 = vpack.c.b16 %v1717, %v1717
  %1744 = vst [vmem:[%s3] sm:$0xf] %v1718
  %1745 = vst [vmem:[%s3 + $0x4] sm:$0xf] %v1719
  %1746 = vst [vmem:[%s3 + $0x8] sm:$0xf] %v1720
  %1747 = vst [vmem:[%s3 + $0xc] sm:$0xf] %v1721
  %1748 = vst [vmem:[%s3 + $0x10] sm:$0xf] %v1722
  %1749 = vst [vmem:[%s3 + $0x14] sm:$0xf] %v1723
  %1750 = vst [vmem:[%s3 + $0x18] sm:$0xf] %v1724
  %1751 = vst [vmem:[%s3 + $0x1c] sm:$0xf] %v1725
  %1752 = vst [vmem:[%s3 + $0x20] sm:$0xf] %v1726
  %1753 = vst [vmem:[%s3 + $0x24] sm:$0xf] %v1727
  %1754 = vst [vmem:[%s3 + $0x28] sm:$0xf] %v1728
  %1755 = vst [vmem:[%s3 + $0x2c] sm:$0xf] %v1729
  %1756 = vst [vmem:[%s3 + $0x30] sm:$0x1] %v1730
  // Predicated region
  $region14: #{extended_cnn_forward.5} parent=0 // pred_check
    _
  $region15: #{extended_cnn_forward.5} parent=0 // pred_check_branch
    %1758 = sbr.rel (0) target = $region17
  $region16: #{extended_cnn_forward.5} parent=0 // pred_region
    _
  $region17: #{extended_cnn_forward.5} parent=0 // pred_fallthru
    _
  // Predicated region
  $region18: #{extended_cnn_forward.5} parent=0 // pred_check
    _
  $region19: #{extended_cnn_forward.5} parent=0 // pred_check_branch
    %1760 = sbr.rel (0) target = $region21
  $region20: #{extended_cnn_forward.5} parent=0 // pred_region
    _
  $region21: #{extended_cnn_forward.5} parent=0 // pred_fallthru
    _

// kernel: extended_cnn_forward.6
$region0: #{extended_cnn_forward.6}
  #allocation0 [shape = 'u32[]', space=smem, size = 0x4, offset = 0x4, fixed_abs, tag = 'smem constant byte address 0x4 - core index']
  #allocation1 [shape = 'u32[144,128]{1,0:T(1,128)}', space=vmem, size = 0x12000, scoped, tag = 'internal scratch']
  %s0 = inlined_call_operand.vmem [shape: bf16[4,18,288], index: 0, kind: input, shape index: {}]
  %s1 = inlined_call_operand.vmem [shape: bf16[288,128], index: 1, kind: input, shape index: {}]
  %s2 = inlined_call_operand.vmem [shape: f32[1,128], index: 2, kind: input, shape index: {}]
  %s3 = inlined_call_operand.vmem [shape: bf16[18,128], index: 3, kind: output, shape index: {}]
  %s4 = sld [smem:[#allocation0]]
  $region22: #{extended_cnn_forward.6} parent=0
    _
  %s6 = ssub.s32 1, %s4
  %s7 = scalar_select 0, %s6, %s4
  // Predicated region
  $region2: #{extended_cnn_forward.6} parent=0 // pred_check
    _
  $region3: #{extended_cnn_forward.6} parent=0 // pred_check_branch
    %9 = sbr.rel (0) target = $region5
  $region4: #{extended_cnn_forward.6} parent=0 // pred_region
    _
  $region5: #{extended_cnn_forward.6} parent=0 // pred_fallthru
    _
  // Predicated region
  $region6: #{extended_cnn_forward.6} parent=0 // pred_check
    _
  $region7: #{extended_cnn_forward.6} parent=0 // pred_check_branch
    %11 = sbr.rel (0) target = $region9
  $region8: #{extended_cnn_forward.6} parent=0 // pred_region
    _
  $region9: #{extended_cnn_forward.6} parent=0 // pred_fallthru
    _
  // Predicated region
  $region10: #{extended_cnn_forward.6} parent=0 // pred_check
    _
  $region11: #{extended_cnn_forward.6} parent=0 // pred_check_branch
    %13 = sbr.rel (0) target = $region13
  $region12: #{extended_cnn_forward.6} parent=0 // pred_region
    _
  $region13: #{extended_cnn_forward.6} parent=0 // pred_fallthru
    _
  %v15 = vld [vmem:[%s1] sm:$0xf]
  %v16 = vld [vmem:[%s1 + $0x4] sm:$0xf]
  %v17 = vld [vmem:[%s1 + $0x8] sm:$0xf]
  %v18 = vld [vmem:[%s1 + $0xc] sm:$0xf]
  %v19 = vld [vmem:[%s1 + $0x10] sm:$0xf]
  %v20 = vld [vmem:[%s1 + $0x14] sm:$0xf]
  %v21 = vld [vmem:[%s1 + $0x18] sm:$0xf]
  %v22 = vld [vmem:[%s1 + $0x1c] sm:$0xf]
  %v23 = vld [vmem:[%s1 + $0x20] sm:$0xf]
  %v24 = vld [vmem:[%s1 + $0x24] sm:$0xf]
  %v25 = vld [vmem:[%s1 + $0x28] sm:$0xf]
  %v26 = vld [vmem:[%s1 + $0x2c] sm:$0xf]
  %v27 = vld [vmem:[%s1 + $0x30] sm:$0xf]
  %v28 = vld [vmem:[%s1 + $0x34] sm:$0xf]
  %v29 = vld [vmem:[%s1 + $0x38] sm:$0xf]
  %v30 = vld [vmem:[%s1 + $0x3c] sm:$0xf]
  %v31 = vld [vmem:[%s1 + $0x40] sm:$0xf]
  %v32 = vld [vmem:[%s1 + $0x44] sm:$0xf]
  %v33 = vld [vmem:[%s1 + $0x48] sm:$0xf]
  %v34 = vld [vmem:[%s1 + $0x4c] sm:$0xf]
  %v35 = vld [vmem:[%s1 + $0x50] sm:$0xf]
  %v36 = vld [vmem:[%s1 + $0x54] sm:$0xf]
  %v37 = vld [vmem:[%s1 + $0x58] sm:$0xf]
  %v38 = vld [vmem:[%s1 + $0x5c] sm:$0xf]
  %v39 = vld [vmem:[%s1 + $0x60] sm:$0xf]
  %v40 = vld [vmem:[%s1 + $0x64] sm:$0xf]
  %v41 = vld [vmem:[%s1 + $0x68] sm:$0xf]
  %v42 = vld [vmem:[%s1 + $0x6c] sm:$0xf]
  %v43 = vld [vmem:[%s1 + $0x70] sm:$0xf]
  %v44 = vld [vmem:[%s1 + $0x74] sm:$0xf]
  %v45 = vld [vmem:[%s1 + $0x78] sm:$0xf]
  %v46 = vld [vmem:[%s1 + $0x7c] sm:$0xf]
  %v47 = vld [vmem:[%s1 + $0x80] sm:$0xf]
  %v48 = vld [vmem:[%s1 + $0x84] sm:$0xf]
  %v49 = vld [vmem:[%s1 + $0x88] sm:$0xf]
  %v50 = vld [vmem:[%s1 + $0x8c] sm:$0xf]
  %v51 = vld [vmem:[%s0] sm:$0xff]
  %v52 = vld [vmem:[%s0 + $0x8] sm:$0xf]
  %v53 = vld [vmem:[%s0 + $0xc] sm:$0xff]
  %v54 = vld [vmem:[%s0 + $0x14] sm:$0xf]
  %v55 = vld [vmem:[%s0 + $0x18] sm:$0x11]
  %v56 = vld [vmem:[%s0 + $0x20] sm:$0x1]
  %v63 = vunpack.c.l.b16 %v51
  %v64 = vunpack.c.h.b16 %v51
  %v65 = vunpack.c.l.b16 %v52
  %v66 = vunpack.c.l.b16 %v53
  %v67 = vunpack.c.h.b16 %v53
  %v68 = vunpack.c.l.b16 %v54
  %v69 = vunpack.c.l.b16 %v55
  %v70 = vunpack.c.h.b16 %v55
  %v71 = vunpack.c.l.b16 %v56
  %v72 = vpack.c.b16 %v66, %v63
  %v73 = vpack.c.b16 %v67, %v64
  %v74 = vpack.c.b16 %v68, %v65
  %v75 = vpack.c.b16 %v69, %v69
  %v76 = vpack.c.b16 %v70, %v70
  %v77 = vpack.c.b16 %v71, %v71
  %v118 = vunpack.c.l.b16 %v15
  %v119 = vunpack.c.l.b16 %v16
  %v120 = vunpack.c.l.b16 %v17
  %v121 = vunpack.c.l.b16 %v18
  %v122 = vunpack.c.l.b16 %v19
  %v123 = vunpack.c.l.b16 %v20
  %v124 = vunpack.c.l.b16 %v21
  %v125 = vunpack.c.l.b16 %v22
  %v126 = vunpack.c.l.b16 %v23
  %v127 = vunpack.c.l.b16 %v24
  %v128 = vunpack.c.l.b16 %v25
  %v129 = vunpack.c.l.b16 %v26
  %v130 = vunpack.c.l.b16 %v27
  %v131 = vunpack.c.l.b16 %v28
  %v132 = vunpack.c.l.b16 %v29
  %v133 = vunpack.c.l.b16 %v30
  %v134 = vunpack.c.l.b16 %v31
  %v135 = vunpack.c.l.b16 %v32
  %v136 = vunpack.c.l.b16 %v33
  %v137 = vunpack.c.l.b16 %v34
  %v138 = vunpack.c.l.b16 %v35
  %v139 = vunpack.c.l.b16 %v36
  %v140 = vunpack.c.l.b16 %v37
  %v141 = vunpack.c.l.b16 %v38
  %v142 = vunpack.c.l.b16 %v39
  %v143 = vunpack.c.l.b16 %v40
  %v144 = vunpack.c.l.b16 %v41
  %v145 = vunpack.c.l.b16 %v42
  %v146 = vunpack.c.l.b16 %v43
  %v147 = vunpack.c.l.b16 %v44
  %v148 = vunpack.c.l.b16 %v45
  %v149 = vunpack.c.l.b16 %v46
  %v150 = vunpack.c.l.b16 %v47
  %v151 = vunpack.c.l.b16 %v48
  %v152 = vunpack.c.l.b16 %v49
  %v153 = vunpack.c.l.b16 %v50
  %v154 = vpack.c.b16 %v119, %v118
  %v155 = vpack.c.b16 %v121, %v120
  %v156 = vpack.c.b16 %v123, %v122
  %v157 = vpack.c.b16 %v125, %v124
  %v158 = vpack.c.b16 %v127, %v126
  %v159 = vpack.c.b16 %v129, %v128
  %v160 = vpack.c.b16 %v131, %v130
  %v161 = vpack.c.b16 %v133, %v132
  %v162 = vpack.c.b16 %v135, %v134
  %v163 = vpack.c.b16 %v137, %v136
  %v164 = vpack.c.b16 %v139, %v138
  %v165 = vpack.c.b16 %v141, %v140
  %v166 = vpack.c.b16 %v143, %v142
  %v167 = vpack.c.b16 %v145, %v144
  %v168 = vpack.c.b16 %v147, %v146
  %v169 = vpack.c.b16 %v149, %v148
  %v170 = vpack.c.b16 %v151, %v150
  %v171 = vpack.c.b16 %v153, %v152
  %vm190 = vcmask 261120
  %v192 = vsel %vm190, %v74, 0
  %v195 = vsel %vm190, %v77, 0
  %197 = vmatprep.subr.bf16.mxu0 0
  %198 = vmatpush1.bf16.msra.mxu0 %v154
  %199 = vmatprep.subr.bf16.mxu0 0
  %200 = vmatpush1.bf16.msra.mxu0 %v155
  %201 = vmatprep.subr.bf16.mxu0 0
  %202 = vmatpush1.bf16.msra.mxu0 %v156
  %203 = vmatprep.subr.bf16.mxu0 0
  %204 = vmatpush1.bf16.msra.mxu0 %v157
  %205 = vmatprep.subr.bf16.mxu0 0
  %206 = vmatpush1.bf16.msra.mxu0 %v158
  %207 = vmatprep.subr.bf16.mxu0 0
  %208 = vmatpush1.bf16.msra.mxu0 %v159
  %209 = vmatprep.subr.bf16.mxu0 0
  %210 = vmatpush1.bf16.msra.mxu0 %v160
  %211 = vmatprep.subr.bf16.mxu0 0
  %212 = vmatpush1.bf16.msra.mxu0 %v161
  %213 = vmatprep.subr.bf16.mxu0 0
  %214 = vmatpush1.bf16.msra.mxu0 %v162
  %215 = vmatprep.subr.bf16.mxu0 0
  %216 = vmatpush1.bf16.msra.mxu0 %v163
  %217 = vmatprep.subr.bf16.mxu0 0
  %218 = vmatpush1.bf16.msra.mxu0 %v164
  %219 = vmatprep.subr.bf16.mxu0 0
  %220 = vmatpush1.bf16.msra.mxu0 %v165
  %221 = vmatprep.subr.bf16.mxu0 0
  %222 = vmatpush1.bf16.msra.mxu0 %v166
  %223 = vmatprep.subr.bf16.mxu0 0
  %224 = vmatpush1.bf16.msra.mxu0 %v167
  %225 = vmatprep.subr.bf16.mxu0 0
  %226 = vmatpush1.bf16.msra.mxu0 %v168
  %227 = vmatprep.subr.bf16.mxu0 0
  %228 = vmatpush1.bf16.msra.mxu0 %v169
  %229 = vmatprep.mubr.bf16.mxu0 %v73
  %230 = vmatmul.mubr.bf16.gmra.mrb[0].mxu0 %v72
  %v231 = vpop.f32.mrb[0].mxu0
  %v232 = vadd.f32 0.0, %v231
  %v233 = vpop.f32.mrb[0].mxu0
  %v234 = vpop.f32.mrb[0].mxu0
  %v235 = vadd.f32 0.0, %v234
  %v236 = vpop.f32.mrb[0].mxu0
  %237 = vmatprep.mubr.bf16.mxu0 %v76
  %238 = vmatmul.mubr.bf16.gmra.mrb[0].mxu0 %v75
  %v239 = vpop.f32.mrb[0].mxu0
  %v240 = vadd.f32 0.0, %v239
  %v241 = vpop.f32.mrb[0].mxu0
  %v242 = vpop.f32.mrb[0].mxu0
  %v243 = vpop.f32.mrb[0].mxu0
  %244 = vdwg.mxu0
  %245 = vmatprep.subr.bf16.mxu0 0
  %246 = vmatpush1.bf16.msra.mxu0 %v170
  %247 = vmatprep.subr.bf16.mxu0 0
  %248 = vmatpush1.bf16.msra.mxu0 %v171
  %249 = vmatprep.subr.bf16.mxu0 0
  %250 = vmatpush1.bf16.msra.mxu0 0
  %251 = vmatprep.subr.bf16.mxu0 0
  %252 = vmatpush1.bf16.msra.mxu0 0
  %253 = vmatprep.subr.bf16.mxu0 0
  %254 = vmatpush1.bf16.msra.mxu0 0
  %255 = vmatprep.subr.bf16.mxu0 0
  %256 = vmatpush1.bf16.msra.mxu0 0
  %257 = vmatprep.subr.bf16.mxu0 0
  %258 = vmatpush1.bf16.msra.mxu0 0
  %259 = vmatprep.subr.bf16.mxu0 0
  %260 = vmatpush1.bf16.msra.mxu0 0
  %261 = vmatprep.subr.bf16.mxu0 0
  %262 = vmatpush1.bf16.msra.mxu0 0
  %263 = vmatprep.subr.bf16.mxu0 0
  %264 = vmatpush1.bf16.msra.mxu0 0
  %265 = vmatprep.subr.bf16.mxu0 0
  %266 = vmatpush1.bf16.msra.mxu0 0
  %267 = vmatprep.subr.bf16.mxu0 0
  %268 = vmatpush1.bf16.msra.mxu0 0
  %269 = vmatprep.subr.bf16.mxu0 0
  %270 = vmatpush1.bf16.msra.mxu0 0
  %271 = vmatprep.subr.bf16.mxu0 0
  %272 = vmatpush1.bf16.msra.mxu0 0
  %273 = vmatprep.subr.bf16.mxu0 0
  %274 = vmatpush1.bf16.msra.mxu0 0
  %275 = vmatprep.subr.bf16.mxu0 0
  %276 = vmatpush1.bf16.msra.mxu0 0
  %277 = vmatprep.mubr.bf16.mxu0 0
  %278 = vmatmul.mubr.bf16.gmra.mrb[0].mxu0 %v192
  %v279 = vpop.f32.mrb[0].mxu0
  %v280 = vadd.f32 %v232, %v279
  %v281 = vpop.f32.mrb[0].mxu0
  %v282 = vpop.f32.mrb[0].mxu0
  %v283 = vadd.f32 %v235, %v282
  %v284 = vpop.f32.mrb[0].mxu0
  %285 = vmatprep.mubr.bf16.mxu0 0
  %286 = vmatmul.mubr.bf16.gmra.mrb[0].mxu0 %v195
  %v287 = vpop.f32.mrb[0].mxu0
  %v288 = vadd.f32 %v240, %v287
  %v289 = vpop.f32.mrb[0].mxu0
  %v290 = vpop.f32.mrb[0].mxu0
  %v291 = vpop.f32.mrb[0].mxu0
  %292 = vdwg.mxu0
  %s293 = scalar_lea.vmem %s0, 36
  %v294 = vld [vmem:[%s293] sm:$0xff]
  %v295 = vld [vmem:[%s293 + $0x8] sm:$0xf]
  %v296 = vld [vmem:[%s293 + $0xc] sm:$0xff]
  %v297 = vld [vmem:[%s293 + $0x14] sm:$0xf]
  %v298 = vld [vmem:[%s293 + $0x18] sm:$0x11]
  %v299 = vld [vmem:[%s293 + $0x20] sm:$0x1]
  %v306 = vunpack.c.l.b16 %v294
  %v307 = vunpack.c.h.b16 %v294
  %v308 = vunpack.c.l.b16 %v295
  %v309 = vunpack.c.l.b16 %v296
  %v310 = vunpack.c.h.b16 %v296
  %v311 = vunpack.c.l.b16 %v297
  %v312 = vunpack.c.l.b16 %v298
  %v313 = vunpack.c.h.b16 %v298
  %v314 = vunpack.c.l.b16 %v299
  %v315 = vpack.c.b16 %v309, %v306
  %v316 = vpack.c.b16 %v310, %v307
  %v317 = vpack.c.b16 %v311, %v308
  %v318 = vpack.c.b16 %v312, %v312
  %v319 = vpack.c.b16 %v313, %v313
  %v320 = vpack.c.b16 %v314, %v314
  %v326 = vsel %vm190, %v317, 0
  %v329 = vsel %vm190, %v320, 0
  %331 = vmatprep.subr.bf16.mxu0 0
  %332 = vmatpush1.bf16.msra.mxu0 %v154
  %333 = vmatprep.subr.bf16.mxu0 0
  %334 = vmatpush1.bf16.msra.mxu0 %v155
  %335 = vmatprep.subr.bf16.mxu0 0
  %336 = vmatpush1.bf16.msra.mxu0 %v156
  %337 = vmatprep.subr.bf16.mxu0 0
  %338 = vmatpush1.bf16.msra.mxu0 %v157
  %339 = vmatprep.subr.bf16.mxu0 0
  %340 = vmatpush1.bf16.msra.mxu0 %v158
  %341 = vmatprep.subr.bf16.mxu0 0
  %342 = vmatpush1.bf16.msra.mxu0 %v159
  %343 = vmatprep.subr.bf16.mxu0 0
  %344 = vmatpush1.bf16.msra.mxu0 %v160
  %345 = vmatprep.subr.bf16.mxu0 0
  %346 = vmatpush1.bf16.msra.mxu0 %v161
  %347 = vmatprep.subr.bf16.mxu0 0
  %348 = vmatpush1.bf16.msra.mxu0 %v162
  %349 = vmatprep.subr.bf16.mxu0 0
  %350 = vmatpush1.bf16.msra.mxu0 %v163
  %351 = vmatprep.subr.bf16.mxu0 0
  %352 = vmatpush1.bf16.msra.mxu0 %v164
  %353 = vmatprep.subr.bf16.mxu0 0
  %354 = vmatpush1.bf16.msra.mxu0 %v165
  %355 = vmatprep.subr.bf16.mxu0 0
  %356 = vmatpush1.bf16.msra.mxu0 %v166
  %357 = vmatprep.subr.bf16.mxu0 0
  %358 = vmatpush1.bf16.msra.mxu0 %v167
  %359 = vmatprep.subr.bf16.mxu0 0
  %360 = vmatpush1.bf16.msra.mxu0 %v168
  %361 = vmatprep.subr.bf16.mxu0 0
  %362 = vmatpush1.bf16.msra.mxu0 %v169
  %363 = vmatprep.mubr.bf16.mxu0 %v316
  %364 = vmatmul.mubr.bf16.gmra.mrb[0].mxu0 %v315
  %v365 = vpop.f32.mrb[0].mxu0
  %v366 = vadd.f32 0.0, %v365
  %v367 = vpop.f32.mrb[0].mxu0
  %v368 = vpop.f32.mrb[0].mxu0
  %v369 = vadd.f32 0.0, %v368
  %v370 = vpop.f32.mrb[0].mxu0
  %371 = vmatprep.mubr.bf16.mxu0 %v319
  %372 = vmatmul.mubr.bf16.gmra.mrb[0].mxu0 %v318
  %v373 = vpop.f32.mrb[0].mxu0
  %v374 = vadd.f32 0.0, %v373
  %v375 = vpop.f32.mrb[0].mxu0
  %v376 = vpop.f32.mrb[0].mxu0
  %v377 = vpop.f32.mrb[0].mxu0
  %378 = vdwg.mxu0
  %379 = vmatprep.subr.bf16.mxu0 0
  %380 = vmatpush1.bf16.msra.mxu0 %v170
  %381 = vmatprep.subr.bf16.mxu0 0
  %382 = vmatpush1.bf16.msra.mxu0 %v171
  %383 = vmatprep.subr.bf16.mxu0 0
  %384 = vmatpush1.bf16.msra.mxu0 0
  %385 = vmatprep.subr.bf16.mxu0 0
  %386 = vmatpush1.bf16.msra.mxu0 0
  %387 = vmatprep.subr.bf16.mxu0 0
  %388 = vmatpush1.bf16.msra.mxu0 0
  %389 = vmatprep.subr.bf16.mxu0 0
  %390 = vmatpush1.bf16.msra.mxu0 0
  %391 = vmatprep.subr.bf16.mxu0 0
  %392 = vmatpush1.bf16.msra.mxu0 0
  %393 = vmatprep.subr.bf16.mxu0 0
  %394 = vmatpush1.bf16.msra.mxu0 0
  %395 = vmatprep.subr.bf16.mxu0 0
  %396 = vmatpush1.bf16.msra.mxu0 0
  %397 = vmatprep.subr.bf16.mxu0 0
  %398 = vmatpush1.bf16.msra.mxu0 0
  %399 = vmatprep.subr.bf16.mxu0 0
  %400 = vmatpush1.bf16.msra.mxu0 0
  %401 = vmatprep.subr.bf16.mxu0 0
  %402 = vmatpush1.bf16.msra.mxu0 0
  %403 = vmatprep.subr.bf16.mxu0 0
  %404 = vmatpush1.bf16.msra.mxu0 0
  %405 = vmatprep.subr.bf16.mxu0 0
  %406 = vmatpush1.bf16.msra.mxu0 0
  %407 = vmatprep.subr.bf16.mxu0 0
  %408 = vmatpush1.bf16.msra.mxu0 0
  %409 = vmatprep.subr.bf16.mxu0 0
  %410 = vmatpush1.bf16.msra.mxu0 0
  %411 = vmatprep.mubr.bf16.mxu0 0
  %412 = vmatmul.mubr.bf16.gmra.mrb[0].mxu0 %v326
  %v413 = vpop.f32.mrb[0].mxu0
  %v414 = vadd.f32 %v366, %v413
  %v415 = vpop.f32.mrb[0].mxu0
  %v416 = vpop.f32.mrb[0].mxu0
  %v417 = vadd.f32 %v369, %v416
  %v418 = vpop.f32.mrb[0].mxu0
  %419 = vmatprep.mubr.bf16.mxu0 0
  %420 = vmatmul.mubr.bf16.gmra.mrb[0].mxu0 %v329
  %v421 = vpop.f32.mrb[0].mxu0
  %v422 = vadd.f32 %v374, %v421
  %v423 = vpop.f32.mrb[0].mxu0
  %v424 = vpop.f32.mrb[0].mxu0
  %v425 = vpop.f32.mrb[0].mxu0
  %426 = vdwg.mxu0
  %v427 = vmax.f32 %v280, %v414
  %v428 = vmax.f32 %v283, %v417
  %v429 = vmax.f32 %v288, %v422
  %s430 = scalar_lea.vmem %s0, 72
  %v431 = vld [vmem:[%s430] sm:$0xff]
  %v432 = vld [vmem:[%s430 + $0x8] sm:$0xf]
  %v433 = vld [vmem:[%s430 + $0xc] sm:$0xff]
  %v434 = vld [vmem:[%s430 + $0x14] sm:$0xf]
  %v435 = vld [vmem:[%s430 + $0x18] sm:$0x11]
  %v436 = vld [vmem:[%s430 + $0x20] sm:$0x1]
  %v443 = vunpack.c.l.b16 %v431
  %v444 = vunpack.c.h.b16 %v431
  %v445 = vunpack.c.l.b16 %v432
  %v446 = vunpack.c.l.b16 %v433
  %v447 = vunpack.c.h.b16 %v433
  %v448 = vunpack.c.l.b16 %v434
  %v449 = vunpack.c.l.b16 %v435
  %v450 = vunpack.c.h.b16 %v435
  %v451 = vunpack.c.l.b16 %v436
  %v452 = vpack.c.b16 %v446, %v443
  %v453 = vpack.c.b16 %v447, %v444
  %v454 = vpack.c.b16 %v448, %v445
  %v455 = vpack.c.b16 %v449, %v449
  %v456 = vpack.c.b16 %v450, %v450
  %v457 = vpack.c.b16 %v451, %v451
  %v463 = vsel %vm190, %v454, 0
  %v466 = vsel %vm190, %v457, 0
  %468 = vmatprep.subr.bf16.mxu0 0
  %469 = vmatpush1.bf16.msra.mxu0 %v154
  %470 = vmatprep.subr.bf16.mxu0 0
  %471 = vmatpush1.bf16.msra.mxu0 %v155
  %472 = vmatprep.subr.bf16.mxu0 0
  %473 = vmatpush1.bf16.msra.mxu0 %v156
  %474 = vmatprep.subr.bf16.mxu0 0
  %475 = vmatpush1.bf16.msra.mxu0 %v157
  %476 = vmatprep.subr.bf16.mxu0 0
  %477 = vmatpush1.bf16.msra.mxu0 %v158
  %478 = vmatprep.subr.bf16.mxu0 0
  %479 = vmatpush1.bf16.msra.mxu0 %v159
  %480 = vmatprep.subr.bf16.mxu0 0
  %481 = vmatpush1.bf16.msra.mxu0 %v160
  %482 = vmatprep.subr.bf16.mxu0 0
  %483 = vmatpush1.bf16.msra.mxu0 %v161
  %484 = vmatprep.subr.bf16.mxu0 0
  %485 = vmatpush1.bf16.msra.mxu0 %v162
  %486 = vmatprep.subr.bf16.mxu0 0
  %487 = vmatpush1.bf16.msra.mxu0 %v163
  %488 = vmatprep.subr.bf16.mxu0 0
  %489 = vmatpush1.bf16.msra.mxu0 %v164
  %490 = vmatprep.subr.bf16.mxu0 0
  %491 = vmatpush1.bf16.msra.mxu0 %v165
  %492 = vmatprep.subr.bf16.mxu0 0
  %493 = vmatpush1.bf16.msra.mxu0 %v166
  %494 = vmatprep.subr.bf16.mxu0 0
  %495 = vmatpush1.bf16.msra.mxu0 %v167
  %496 = vmatprep.subr.bf16.mxu0 0
  %497 = vmatpush1.bf16.msra.mxu0 %v168
  %498 = vmatprep.subr.bf16.mxu0 0
  %499 = vmatpush1.bf16.msra.mxu0 %v169
  %500 = vmatprep.mubr.bf16.mxu0 %v453
  %501 = vmatmul.mubr.bf16.gmra.mrb[0].mxu0 %v452
  %v502 = vpop.f32.mrb[0].mxu0
  %v503 = vadd.f32 0.0, %v502
  %v504 = vpop.f32.mrb[0].mxu0
  %v505 = vpop.f32.mrb[0].mxu0
  %v506 = vadd.f32 0.0, %v505
  %v507 = vpop.f32.mrb[0].mxu0
  %508 = vmatprep.mubr.bf16.mxu0 %v456
  %509 = vmatmul.mubr.bf16.gmra.mrb[0].mxu0 %v455
  %v510 = vpop.f32.mrb[0].mxu0
  %v511 = vadd.f32 0.0, %v510
  %v512 = vpop.f32.mrb[0].mxu0
  %v513 = vpop.f32.mrb[0].mxu0
  %v514 = vpop.f32.mrb[0].mxu0
  %515 = vdwg.mxu0
  %516 = vmatprep.subr.bf16.mxu0 0
  %517 = vmatpush1.bf16.msra.mxu0 %v170
  %518 = vmatprep.subr.bf16.mxu0 0
  %519 = vmatpush1.bf16.msra.mxu0 %v171
  %520 = vmatprep.subr.bf16.mxu0 0
  %521 = vmatpush1.bf16.msra.mxu0 0
  %522 = vmatprep.subr.bf16.mxu0 0
  %523 = vmatpush1.bf16.msra.mxu0 0
  %524 = vmatprep.subr.bf16.mxu0 0
  %525 = vmatpush1.bf16.msra.mxu0 0
  %526 = vmatprep.subr.bf16.mxu0 0
  %527 = vmatpush1.bf16.msra.mxu0 0
  %528 = vmatprep.subr.bf16.mxu0 0
  %529 = vmatpush1.bf16.msra.mxu0 0
  %530 = vmatprep.subr.bf16.mxu0 0
  %531 = vmatpush1.bf16.msra.mxu0 0
  %532 = vmatprep.subr.bf16.mxu0 0
  %533 = vmatpush1.bf16.msra.mxu0 0
  %534 = vmatprep.subr.bf16.mxu0 0
  %535 = vmatpush1.bf16.msra.mxu0 0
  %536 = vmatprep.subr.bf16.mxu0 0
  %537 = vmatpush1.bf16.msra.mxu0 0
  %538 = vmatprep.subr.bf16.mxu0 0
  %539 = vmatpush1.bf16.msra.mxu0 0
  %540 = vmatprep.subr.bf16.mxu0 0
  %541 = vmatpush1.bf16.msra.mxu0 0
  %542 = vmatprep.subr.bf16.mxu0 0
  %543 = vmatpush1.bf16.msra.mxu0 0
  %544 = vmatprep.subr.bf16.mxu0 0
  %545 = vmatpush1.bf16.msra.mxu0 0
  %546 = vmatprep.subr.bf16.mxu0 0
  %547 = vmatpush1.bf16.msra.mxu0 0
  %548 = vmatprep.mubr.bf16.mxu0 0
  %549 = vmatmul.mubr.bf16.gmra.mrb[0].mxu0 %v463
  %v550 = vpop.f32.mrb[0].mxu0
  %v551 = vadd.f32 %v503, %v550
  %v552 = vpop.f32.mrb[0].mxu0
  %v553 = vpop.f32.mrb[0].mxu0
  %v554 = vadd.f32 %v506, %v553
  %v555 = vpop.f32.mrb[0].mxu0
  %556 = vmatprep.mubr.bf16.mxu0 0
  %557 = vmatmul.mubr.bf16.gmra.mrb[0].mxu0 %v466
  %v558 = vpop.f32.mrb[0].mxu0
  %v559 = vadd.f32 %v511, %v558
  %v560 = vpop.f32.mrb[0].mxu0
  %v561 = vpop.f32.mrb[0].mxu0
  %v562 = vpop.f32.mrb[0].mxu0
  %563 = vdwg.mxu0
  %v564 = vmax.f32 %v427, %v551
  %v565 = vmax.f32 %v428, %v554
  %v566 = vmax.f32 %v429, %v559
  %s567 = scalar_lea.vmem %s0, 108
  %v568 = vld [vmem:[%s567] sm:$0xff]
  %v569 = vld [vmem:[%s567 + $0x8] sm:$0xf]
  %v570 = vld [vmem:[%s567 + $0xc] sm:$0xff]
  %v571 = vld [vmem:[%s567 + $0x14] sm:$0xf]
  %v572 = vld [vmem:[%s567 + $0x18] sm:$0x11]
  %v573 = vld [vmem:[%s567 + $0x20] sm:$0x1]
  %v580 = vunpack.c.l.b16 %v568
  %v581 = vunpack.c.h.b16 %v568
  %v582 = vunpack.c.l.b16 %v569
  %v583 = vunpack.c.l.b16 %v570
  %v584 = vunpack.c.h.b16 %v570
  %v585 = vunpack.c.l.b16 %v571
  %v586 = vunpack.c.l.b16 %v572
  %v587 = vunpack.c.h.b16 %v572
  %v588 = vunpack.c.l.b16 %v573
  %v589 = vpack.c.b16 %v583, %v580
  %v590 = vpack.c.b16 %v584, %v581
  %v591 = vpack.c.b16 %v585, %v582
  %v592 = vpack.c.b16 %v586, %v586
  %v593 = vpack.c.b16 %v587, %v587
  %v594 = vpack.c.b16 %v588, %v588
  %v600 = vsel %vm190, %v591, 0
  %v603 = vsel %vm190, %v594, 0
  %605 = vmatprep.subr.bf16.mxu0 0
  %606 = vmatpush1.bf16.msra.mxu0 %v154
  %607 = vmatprep.subr.bf16.mxu0 0
  %608 = vmatpush1.bf16.msra.mxu0 %v155
  %609 = vmatprep.subr.bf16.mxu0 0
  %610 = vmatpush1.bf16.msra.mxu0 %v156
  %611 = vmatprep.subr.bf16.mxu0 0
  %612 = vmatpush1.bf16.msra.mxu0 %v157
  %613 = vmatprep.subr.bf16.mxu0 0
  %614 = vmatpush1.bf16.msra.mxu0 %v158
  %615 = vmatprep.subr.bf16.mxu0 0
  %616 = vmatpush1.bf16.msra.mxu0 %v159
  %617 = vmatprep.subr.bf16.mxu0 0
  %618 = vmatpush1.bf16.msra.mxu0 %v160
  %619 = vmatprep.subr.bf16.mxu0 0
  %620 = vmatpush1.bf16.msra.mxu0 %v161
  %621 = vmatprep.subr.bf16.mxu0 0
  %622 = vmatpush1.bf16.msra.mxu0 %v162
  %623 = vmatprep.subr.bf16.mxu0 0
  %624 = vmatpush1.bf16.msra.mxu0 %v163
  %625 = vmatprep.subr.bf16.mxu0 0
  %626 = vmatpush1.bf16.msra.mxu0 %v164
  %627 = vmatprep.subr.bf16.mxu0 0
  %628 = vmatpush1.bf16.msra.mxu0 %v165
  %629 = vmatprep.subr.bf16.mxu0 0
  %630 = vmatpush1.bf16.msra.mxu0 %v166
  %631 = vmatprep.subr.bf16.mxu0 0
  %632 = vmatpush1.bf16.msra.mxu0 %v167
  %633 = vmatprep.subr.bf16.mxu0 0
  %634 = vmatpush1.bf16.msra.mxu0 %v168
  %635 = vmatprep.subr.bf16.mxu0 0
  %636 = vmatpush1.bf16.msra.mxu0 %v169
  %637 = vmatprep.mubr.bf16.mxu0 %v590
  %638 = vmatmul.mubr.bf16.gmra.mrb[0].mxu0 %v589
  %v639 = vpop.f32.mrb[0].mxu0
  %v640 = vadd.f32 0.0, %v639
  %v641 = vpop.f32.mrb[0].mxu0
  %v642 = vpop.f32.mrb[0].mxu0
  %v643 = vadd.f32 0.0, %v642
  %v644 = vpop.f32.mrb[0].mxu0
  %645 = vmatprep.mubr.bf16.mxu0 %v593
  %646 = vmatmul.mubr.bf16.gmra.mrb[0].mxu0 %v592
  %v647 = vpop.f32.mrb[0].mxu0
  %v648 = vadd.f32 0.0, %v647
  %v649 = vpop.f32.mrb[0].mxu0
  %v650 = vpop.f32.mrb[0].mxu0
  %v651 = vpop.f32.mrb[0].mxu0
  %652 = vdwg.mxu0
  %653 = vmatprep.subr.bf16.mxu0 0
  %654 = vmatpush1.bf16.msra.mxu0 %v170
  %655 = vmatprep.subr.bf16.mxu0 0
  %656 = vmatpush1.bf16.msra.mxu0 %v171
  %657 = vmatprep.subr.bf16.mxu0 0
  %658 = vmatpush1.bf16.msra.mxu0 0
  %659 = vmatprep.subr.bf16.mxu0 0
  %660 = vmatpush1.bf16.msra.mxu0 0
  %661 = vmatprep.subr.bf16.mxu0 0
  %662 = vmatpush1.bf16.msra.mxu0 0
  %663 = vmatprep.subr.bf16.mxu0 0
  %664 = vmatpush1.bf16.msra.mxu0 0
  %665 = vmatprep.subr.bf16.mxu0 0
  %666 = vmatpush1.bf16.msra.mxu0 0
  %667 = vmatprep.subr.bf16.mxu0 0
  %668 = vmatpush1.bf16.msra.mxu0 0
  %669 = vmatprep.subr.bf16.mxu0 0
  %670 = vmatpush1.bf16.msra.mxu0 0
  %671 = vmatprep.subr.bf16.mxu0 0
  %672 = vmatpush1.bf16.msra.mxu0 0
  %673 = vmatprep.subr.bf16.mxu0 0
  %674 = vmatpush1.bf16.msra.mxu0 0
  %675 = vmatprep.subr.bf16.mxu0 0
  %676 = vmatpush1.bf16.msra.mxu0 0
  %677 = vmatprep.subr.bf16.mxu0 0
  %678 = vmatpush1.bf16.msra.mxu0 0
  %679 = vmatprep.subr.bf16.mxu0 0
  %680 = vmatpush1.bf16.msra.mxu0 0
  %681 = vmatprep.subr.bf16.mxu0 0
  %682 = vmatpush1.bf16.msra.mxu0 0
  %683 = vmatprep.subr.bf16.mxu0 0
  %684 = vmatpush1.bf16.msra.mxu0 0
  %685 = vmatprep.mubr.bf16.mxu0 0
  %686 = vmatmul.mubr.bf16.gmra.mrb[0].mxu0 %v600
  %v687 = vpop.f32.mrb[0].mxu0
  %v688 = vadd.f32 %v640, %v687
  %v689 = vpop.f32.mrb[0].mxu0
  %v690 = vpop.f32.mrb[0].mxu0
  %v691 = vadd.f32 %v643, %v690
  %v692 = vpop.f32.mrb[0].mxu0
  %693 = vmatprep.mubr.bf16.mxu0 0
  %694 = vmatmul.mubr.bf16.gmra.mrb[0].mxu0 %v603
  %v695 = vpop.f32.mrb[0].mxu0
  %v696 = vadd.f32 %v648, %v695
  %v697 = vpop.f32.mrb[0].mxu0
  %v698 = vpop.f32.mrb[0].mxu0
  %v699 = vpop.f32.mrb[0].mxu0
  %700 = vdwg.mxu0
  %v701 = vmax.f32 %v564, %v688
  %v702 = vmax.f32 %v565, %v691
  %v703 = vmax.f32 %v566, %v696
  %v704 = vld [vmem:[%s2] sm:$0x1]
  %v706 = vlaneseq
  %v707 = vshrl.u32 %v706, 7
  %v708 = vsub.s32 0, %v707
  %v709 = vrot.slane %v704, %v708
  %v711 = vadd.f32 %v701, %v709
  %v712 = vadd.f32 %v702, %v709
  %v713 = vadd.f32 %v703, %v709
  %v714 = vmax.f32 %v711, 0.0
  %v715 = vmax.f32 %v712, 0.0
  %v716 = vmax.f32 %v713, 0.0
  %v717 = vpack.c.bf16 %v715, %v714
  %v718 = vpack.c.bf16 %v716, %v716
  %v721 = vunpack.c.l.b16 %v717
  %v722 = vunpack.c.h.b16 %v717
  %v723 = vunpack.c.l.b16 %v718
  %v724 = vpack.c.b16 %v721, %v721
  %v725 = vpack.c.b16 %v722, %v722
  %v726 = vpack.c.b16 %v723, %v723
  %730 = vst [vmem:[%s3] sm:$0xf] %v724
  %731 = vst [vmem:[%s3 + $0x4] sm:$0xf] %v725
  %732 = vst [vmem:[%s3 + $0x8] sm:$0x1] %v726
  // Predicated region
  $region14: #{extended_cnn_forward.6} parent=0 // pred_check
    _
  $region15: #{extended_cnn_forward.6} parent=0 // pred_check_branch
    %734 = sbr.rel (0) target = $region17
  $region16: #{extended_cnn_forward.6} parent=0 // pred_region
    _
  $region17: #{extended_cnn_forward.6} parent=0 // pred_fallthru
    _
  // Predicated region
  $region18: #{extended_cnn_forward.6} parent=0 // pred_check
    _
  $region19: #{extended_cnn_forward.6} parent=0 // pred_check_branch
    %736 = sbr.rel (0) target = $region21
  $region20: #{extended_cnn_forward.6} parent=0 // pred_region
    _
  $region21: #{extended_cnn_forward.6} parent=0 // pred_fallthru
    _

// kernel: extended_cnn_forward.7
$region0: #{extended_cnn_forward.7}
  #allocation0 [shape = 'u32[]', space=smem, size = 0x4, offset = 0x4, fixed_abs, tag = 'smem constant byte address 0x4 - core index']
  #allocation1 [shape = 'u32[144,128]{1,0:T(1,128)}', space=vmem, size = 0x12000, scoped, tag = 'internal scratch']
  %s0 = inlined_call_operand.vmem [shape: bf16[2,1152], index: 0, kind: input, shape index: {}]
  %s1 = inlined_call_operand.vmem [shape: bf16[1152,256], index: 1, kind: input, shape index: {}]
  %s2 = inlined_call_operand.vmem [shape: f32[1,256], index: 2, kind: input, shape index: {}]
  %s3 = inlined_call_operand.vmem [shape: bf16[256,128], index: 3, kind: input, shape index: {}]
  %s4 = inlined_call_operand.vmem [shape: f32[1,128], index: 4, kind: input, shape index: {}]
  %s5 = inlined_call_operand.vmem [shape: bf16[128,128], index: 5, kind: input, shape index: {}]
  %s6 = inlined_call_operand.vmem [shape: f32[1,128], index: 6, kind: input, shape index: {}]
  %s7 = inlined_call_operand.hbm [shape: f32[2,128], index: 7, kind: output, shape index: {}]
  %s8 = sld [smem:[#allocation0]]
  $region38: #{extended_cnn_forward.7} parent=0
    _
  %s10 = ssub.s32 1, %s8
  %s11 = scalar_select 0, %s10, %s8
  $region1: #{extended_cnn_forward.7} parent=0
    #allocation2 [shape = 'u8[1024]{0}', space=vmem, size = 0x400, scoped, tag = 'output window, operand 0, single buffered']
    #allocation3 [shape = 's32[1]{0}', space=sflag, size = 0x4, scoped, tag = 'scoped memory for extended_cnn_forward.7']
    %12 = vsyncpa [#allocation3], 0
    // Predicated region
    $region2: #{extended_cnn_forward.7} parent=1 // pred_check
      _
    $region3: #{extended_cnn_forward.7} parent=1 // pred_check_branch
      %14 = sbr.rel (0) target = $region5
    $region4: #{extended_cnn_forward.7} parent=1 // pred_region
      _
    $region5: #{extended_cnn_forward.7} parent=1 // pred_fallthru
      _
    // Predicated region
    $region6: #{extended_cnn_forward.7} parent=1 // pred_check
      _
    $region7: #{extended_cnn_forward.7} parent=1 // pred_check_branch
      %16 = sbr.rel (0) target = $region9
    $region8: #{extended_cnn_forward.7} parent=1 // pred_region
      _
    $region9: #{extended_cnn_forward.7} parent=1 // pred_fallthru
      _
    // Predicated region
    $region10: #{extended_cnn_forward.7} parent=1 // pred_check
      _
    $region11: #{extended_cnn_forward.7} parent=1 // pred_check_branch
      %18 = sbr.rel (0) target = $region13
    $region12: #{extended_cnn_forward.7} parent=1 // pred_region
      _
    $region13: #{extended_cnn_forward.7} parent=1 // pred_fallthru
      _
    // Predicated region
    $region14: #{extended_cnn_forward.7} parent=1 // pred_check
      _
    $region15: #{extended_cnn_forward.7} parent=1 // pred_check_branch
      %20 = sbr.rel (0) target = $region17
    $region16: #{extended_cnn_forward.7} parent=1 // pred_region
      _
    $region17: #{extended_cnn_forward.7} parent=1 // pred_fallthru
      _
    // Predicated region
    $region18: #{extended_cnn_forward.7} parent=1 // pred_check
      _
    $region19: #{extended_cnn_forward.7} parent=1 // pred_check_branch
      %22 = sbr.rel (0) target = $region21
    $region20: #{extended_cnn_forward.7} parent=1 // pred_region
      _
    $region21: #{extended_cnn_forward.7} parent=1 // pred_fallthru
      _
    // Predicated region
    $region22: #{extended_cnn_forward.7} parent=1 // pred_check
      _
    $region23: #{extended_cnn_forward.7} parent=1 // pred_check_branch
      %24 = sbr.rel (0) target = $region25
    $region24: #{extended_cnn_forward.7} parent=1 // pred_region
      _
    $region25: #{extended_cnn_forward.7} parent=1 // pred_fallthru
      _
    // Predicated region
    $region26: #{extended_cnn_forward.7} parent=1 // pred_check
      _
    $region27: #{extended_cnn_forward.7} parent=1 // pred_check_branch
      %26 = sbr.rel (0) target = $region29
    $region28: #{extended_cnn_forward.7} parent=1 // pred_region
      _
    $region29: #{extended_cnn_forward.7} parent=1 // pred_fallthru
      _
    %v28 = vld [vmem:[%s0] sm:$0xff]
    %v29 = vld [vmem:[%s0 + $0x8] sm:$0x1]
    %v30 = vld [vmem:[%s1] sm:$0xff]
    %v31 = vld [vmem:[%s1 + $0x8] sm:$0xff]
    %v32 = vld [vmem:[%s1 + $0x10] sm:$0xff]
    %v33 = vld [vmem:[%s1 + $0x18] sm:$0xff]
    %v34 = vld [vmem:[%s1 + $0x20] sm:$0xff]
    %v35 = vld [vmem:[%s1 + $0x28] sm:$0xff]
    %v36 = vld [vmem:[%s1 + $0x30] sm:$0xff]
    %v37 = vld [vmem:[%s1 + $0x38] sm:$0xff]
    %v38 = vld [vmem:[%s1 + $0x40] sm:$0xff]
    %v39 = vld [vmem:[%s1 + $0x48] sm:$0xff]
    %v40 = vld [vmem:[%s1 + $0x50] sm:$0xff]
    %v41 = vld [vmem:[%s1 + $0x58] sm:$0xff]
    %v42 = vld [vmem:[%s1 + $0x60] sm:$0xff]
    %v43 = vld [vmem:[%s1 + $0x68] sm:$0xff]
    %v44 = vld [vmem:[%s1 + $0x70] sm:$0xff]
    %v45 = vld [vmem:[%s1 + $0x78] sm:$0xff]
    %v46 = vld [vmem:[%s1 + $0x80] sm:$0xff]
    %v47 = vld [vmem:[%s1 + $0x88] sm:$0xff]
    %v48 = vld [vmem:[%s1 + $0x90] sm:$0xff]
    %v49 = vld [vmem:[%s1 + $0x98] sm:$0xff]
    %v50 = vld [vmem:[%s1 + $0xa0] sm:$0xff]
    %v51 = vld [vmem:[%s1 + $0xa8] sm:$0xff]
    %v52 = vld [vmem:[%s1 + $0xb0] sm:$0xff]
    %v53 = vld [vmem:[%s1 + $0xb8] sm:$0xff]
    %v54 = vld [vmem:[%s1 + $0xc0] sm:$0xff]
    %v55 = vld [vmem:[%s1 + $0xc8] sm:$0xff]
    %v56 = vld [vmem:[%s1 + $0xd0] sm:$0xff]
    %v57 = vld [vmem:[%s1 + $0xd8] sm:$0xff]
    %v58 = vld [vmem:[%s1 + $0xe0] sm:$0xff]
    %v59 = vld [vmem:[%s1 + $0xe8] sm:$0xff]
    %v60 = vld [vmem:[%s1 + $0xf0] sm:$0xff]
    %v61 = vld [vmem:[%s1 + $0xf8] sm:$0xff]
    %v62 = vld [vmem:[%s1 + $0x100] sm:$0xff]
    %v63 = vld [vmem:[%s1 + $0x108] sm:$0xff]
    %v64 = vld [vmem:[%s1 + $0x110] sm:$0xff]
    %v65 = vld [vmem:[%s1 + $0x118] sm:$0xff]
    %v66 = vld [vmem:[%s1 + $0x120] sm:$0xff]
    %v67 = vld [vmem:[%s1 + $0x128] sm:$0xff]
    %v68 = vld [vmem:[%s1 + $0x130] sm:$0xff]
    %v69 = vld [vmem:[%s1 + $0x138] sm:$0xff]
    %v70 = vld [vmem:[%s1 + $0x140] sm:$0xff]
    %v71 = vld [vmem:[%s1 + $0x148] sm:$0xff]
    %v72 = vld [vmem:[%s1 + $0x150] sm:$0xff]
    %v73 = vld [vmem:[%s1 + $0x158] sm:$0xff]
    %v74 = vld [vmem:[%s1 + $0x160] sm:$0xff]
    %v75 = vld [vmem:[%s1 + $0x168] sm:$0xff]
    %v76 = vld [vmem:[%s1 + $0x170] sm:$0xff]
    %v77 = vld [vmem:[%s1 + $0x178] sm:$0xff]
    %v78 = vld [vmem:[%s1 + $0x180] sm:$0xff]
    %v79 = vld [vmem:[%s1 + $0x188] sm:$0xff]
    %v80 = vld [vmem:[%s1 + $0x190] sm:$0xff]
    %v81 = vld [vmem:[%s1 + $0x198] sm:$0xff]
    %v82 = vld [vmem:[%s1 + $0x1a0] sm:$0xff]
    %v83 = vld [vmem:[%s1 + $0x1a8] sm:$0xff]
    %v84 = vld [vmem:[%s1 + $0x1b0] sm:$0xff]
    %v85 = vld [vmem:[%s1 + $0x1b8] sm:$0xff]
    %v86 = vld [vmem:[%s1 + $0x1c0] sm:$0xff]
    %v87 = vld [vmem:[%s1 + $0x1c8] sm:$0xff]
    %v88 = vld [vmem:[%s1 + $0x1d0] sm:$0xff]
    %v89 = vld [vmem:[%s1 + $0x1d8] sm:$0xff]
    %v90 = vld [vmem:[%s1 + $0x1e0] sm:$0xff]
    %v91 = vld [vmem:[%s1 + $0x1e8] sm:$0xff]
    %v92 = vld [vmem:[%s1 + $0x1f0] sm:$0xff]
    %v93 = vld [vmem:[%s1 + $0x1f8] sm:$0xff]
    %v94 = vld [vmem:[%s1 + $0x200] sm:$0xff]
    %v95 = vld [vmem:[%s1 + $0x208] sm:$0xff]
    %v96 = vld [vmem:[%s1 + $0x210] sm:$0xff]
    %v97 = vld [vmem:[%s1 + $0x218] sm:$0xff]
    %v98 = vld [vmem:[%s1 + $0x220] sm:$0xff]
    %v99 = vld [vmem:[%s1 + $0x228] sm:$0xff]
    %v100 = vld [vmem:[%s1 + $0x230] sm:$0xff]
    %v101 = vld [vmem:[%s1 + $0x238] sm:$0xff]
    %v102 = vld [vmem:[%s1 + $0x240] sm:$0xff]
    %v103 = vld [vmem:[%s1 + $0x248] sm:$0xff]
    %v104 = vld [vmem:[%s1 + $0x250] sm:$0xff]
    %v105 = vld [vmem:[%s1 + $0x258] sm:$0xff]
    %v106 = vld [vmem:[%s1 + $0x260] sm:$0xff]
    %v107 = vld [vmem:[%s1 + $0x268] sm:$0xff]
    %v108 = vld [vmem:[%s1 + $0x270] sm:$0xff]
    %v109 = vld [vmem:[%s1 + $0x278] sm:$0xff]
    %v110 = vld [vmem:[%s1 + $0x280] sm:$0xff]
    %v111 = vld [vmem:[%s1 + $0x288] sm:$0xff]
    %v112 = vld [vmem:[%s1 + $0x290] sm:$0xff]
    %v113 = vld [vmem:[%s1 + $0x298] sm:$0xff]
    %v114 = vld [vmem:[%s1 + $0x2a0] sm:$0xff]
    %v115 = vld [vmem:[%s1 + $0x2a8] sm:$0xff]
    %v116 = vld [vmem:[%s1 + $0x2b0] sm:$0xff]
    %v117 = vld [vmem:[%s1 + $0x2b8] sm:$0xff]
    %v118 = vld [vmem:[%s1 + $0x2c0] sm:$0xff]
    %v119 = vld [vmem:[%s1 + $0x2c8] sm:$0xff]
    %v120 = vld [vmem:[%s1 + $0x2d0] sm:$0xff]
    %v121 = vld [vmem:[%s1 + $0x2d8] sm:$0xff]
    %v122 = vld [vmem:[%s1 + $0x2e0] sm:$0xff]
    %v123 = vld [vmem:[%s1 + $0x2e8] sm:$0xff]
    %v124 = vld [vmem:[%s1 + $0x2f0] sm:$0xff]
    %v125 = vld [vmem:[%s1 + $0x2f8] sm:$0xff]
    %v126 = vld [vmem:[%s1 + $0x300] sm:$0xff]
    %v127 = vld [vmem:[%s1 + $0x308] sm:$0xff]
    %v128 = vld [vmem:[%s1 + $0x310] sm:$0xff]
    %v129 = vld [vmem:[%s1 + $0x318] sm:$0xff]
    %v130 = vld [vmem:[%s1 + $0x320] sm:$0xff]
    %v131 = vld [vmem:[%s1 + $0x328] sm:$0xff]
    %v132 = vld [vmem:[%s1 + $0x330] sm:$0xff]
    %v133 = vld [vmem:[%s1 + $0x338] sm:$0xff]
    %v134 = vld [vmem:[%s1 + $0x340] sm:$0xff]
    %v135 = vld [vmem:[%s1 + $0x348] sm:$0xff]
    %v136 = vld [vmem:[%s1 + $0x350] sm:$0xff]
    %v137 = vld [vmem:[%s1 + $0x358] sm:$0xff]
    %v138 = vld [vmem:[%s1 + $0x360] sm:$0xff]
    %v139 = vld [vmem:[%s1 + $0x368] sm:$0xff]
    %v140 = vld [vmem:[%s1 + $0x370] sm:$0xff]
    %v141 = vld [vmem:[%s1 + $0x378] sm:$0xff]
    %v142 = vld [vmem:[%s1 + $0x380] sm:$0xff]
    %v143 = vld [vmem:[%s1 + $0x388] sm:$0xff]
    %v144 = vld [vmem:[%s1 + $0x390] sm:$0xff]
    %v145 = vld [vmem:[%s1 + $0x398] sm:$0xff]
    %v146 = vld [vmem:[%s1 + $0x3a0] sm:$0xff]
    %v147 = vld [vmem:[%s1 + $0x3a8] sm:$0xff]
    %v148 = vld [vmem:[%s1 + $0x3b0] sm:$0xff]
    %v149 = vld [vmem:[%s1 + $0x3b8] sm:$0xff]
    %v150 = vld [vmem:[%s1 + $0x3c0] sm:$0xff]
    %v151 = vld [vmem:[%s1 + $0x3c8] sm:$0xff]
    %v152 = vld [vmem:[%s1 + $0x3d0] sm:$0xff]
    %v153 = vld [vmem:[%s1 + $0x3d8] sm:$0xff]
    %v154 = vld [vmem:[%s1 + $0x3e0] sm:$0xff]
    %v155 = vld [vmem:[%s1 + $0x3e8] sm:$0xff]
    %v156 = vld [vmem:[%s1 + $0x3f0] sm:$0xff]
    %v157 = vld [vmem:[%s1 + $0x3f8] sm:$0xff]
    %v158 = vld [vmem:[%s1 + $0x400] sm:$0xff]
    %v159 = vld [vmem:[%s1 + $0x408] sm:$0xff]
    %v160 = vld [vmem:[%s1 + $0x410] sm:$0xff]
    %v161 = vld [vmem:[%s1 + $0x418] sm:$0xff]
    %v162 = vld [vmem:[%s1 + $0x420] sm:$0xff]
    %v163 = vld [vmem:[%s1 + $0x428] sm:$0xff]
    %v164 = vld [vmem:[%s1 + $0x430] sm:$0xff]
    %v165 = vld [vmem:[%s1 + $0x438] sm:$0xff]
    %v166 = vld [vmem:[%s1 + $0x440] sm:$0xff]
    %v167 = vld [vmem:[%s1 + $0x448] sm:$0xff]
    %v168 = vld [vmem:[%s1 + $0x450] sm:$0xff]
    %v169 = vld [vmem:[%s1 + $0x458] sm:$0xff]
    %v170 = vld [vmem:[%s1 + $0x460] sm:$0xff]
    %v171 = vld [vmem:[%s1 + $0x468] sm:$0xff]
    %v172 = vld [vmem:[%s1 + $0x470] sm:$0xff]
    %v173 = vld [vmem:[%s1 + $0x478] sm:$0xff]
    %v174 = vld [vmem:[%s2] sm:$0x3]
    %v176 = vlaneseq
    %v177 = vshrl.u32 %v176, 7
    %v178 = vsub.s32 0, %v177
    %v179 = vrot.slane %v174, %v178
    %v180 = vlaneseq
    %v181 = vshrl.u32 %v180, 7
    %v182 = vsub.s32 1, %v181
    %v183 = vrot.slane %v174, %v182
    %v188 = vcombine.high %v28, %v28
    %v190 = vunpack.c.l.s4 1966171168
    %v191 = vunpack.c.0.s8 %v190
    %v192 = vlaneseq
    %v193 = vshrl.u32 %v192, 7
    %v194 = vsub.s32 %v191, %v193
    %v195 = vrot.slane %v28, %v194
    %v197 = vunpack.c.l.s4 1966171168
    %v198 = vunpack.c.0.s8 %v197
    %v199 = vlaneseq
    %v200 = vshrl.u32 %v199, 7
    %v201 = vsub.s32 %v198, %v200
    %v202 = vrot.slane %v188, %v201
    %v203 = vcombine.high %v195, %v195
    %v204 = vcombine.high %v202, %v202
    %v206 = vunpack.c.l.s4 1966171168
    %v207 = vunpack.c.0.s8 %v206
    %v208 = vlaneseq
    %v209 = vshrl.u32 %v208, 7
    %v210 = vsub.s32 %v207, %v209
    %v211 = vrot.slane %v195, %v210
    %v213 = vunpack.c.l.s4 1966171168
    %v214 = vunpack.c.0.s8 %v213
    %v215 = vlaneseq
    %v216 = vshrl.u32 %v215, 7
    %v217 = vsub.s32 %v214, %v216
    %v218 = vrot.slane %v202, %v217
    %v220 = vunpack.c.l.s4 1966171168
    %v221 = vunpack.c.0.s8 %v220
    %v222 = vlaneseq
    %v223 = vshrl.u32 %v222, 7
    %v224 = vsub.s32 %v221, %v223
    %v225 = vrot.slane %v203, %v224
    %v227 = vunpack.c.l.s4 1966171168
    %v228 = vunpack.c.0.s8 %v227
    %v229 = vlaneseq
    %v230 = vshrl.u32 %v229, 7
    %v231 = vsub.s32 %v228, %v230
    %v232 = vrot.slane %v204, %v231
    %v233 = vcombine.high %v211, %v211
    %v234 = vcombine.high %v218, %v218
    %v235 = vcombine.high %v225, %v225
    %v236 = vcombine.high %v232, %v232
    %v238 = vunpack.c.l.s4 1966171168
    %v239 = vunpack.c.0.s8 %v238
    %v240 = vlaneseq
    %v241 = vshrl.u32 %v240, 7
    %v242 = vsub.s32 %v239, %v241
    %v243 = vrot.slane %v29, %v242
    %v245 = vunpack.c.l.s4 1966171168
    %v246 = vunpack.c.0.s8 %v245
    %v247 = vlaneseq
    %v248 = vshrl.u32 %v247, 7
    %v249 = vsub.s32 %v246, %v248
    %v250 = vrot.slane %v243, %v249
    %v404 = vunpack.c.l.b16 %v30
    %v405 = vunpack.c.h.b16 %v30
    %v406 = vunpack.c.l.b16 %v31
    %v407 = vunpack.c.h.b16 %v31
    %v408 = vunpack.c.l.b16 %v32
    %v409 = vunpack.c.h.b16 %v32
    %v410 = vunpack.c.l.b16 %v33
    %v411 = vunpack.c.h.b16 %v33
    %v412 = vunpack.c.l.b16 %v34
    %v413 = vunpack.c.h.b16 %v34
    %v414 = vunpack.c.l.b16 %v35
    %v415 = vunpack.c.h.b16 %v35
    %v416 = vunpack.c.l.b16 %v36
    %v417 = vunpack.c.h.b16 %v36
    %v418 = vunpack.c.l.b16 %v37
    %v419 = vunpack.c.h.b16 %v37
    %v420 = vunpack.c.l.b16 %v38
    %v421 = vunpack.c.h.b16 %v38
    %v422 = vunpack.c.l.b16 %v39
    %v423 = vunpack.c.h.b16 %v39
    %v424 = vunpack.c.l.b16 %v40
    %v425 = vunpack.c.h.b16 %v40
    %v426 = vunpack.c.l.b16 %v41
    %v427 = vunpack.c.h.b16 %v41
    %v428 = vunpack.c.l.b16 %v42
    %v429 = vunpack.c.h.b16 %v42
    %v430 = vunpack.c.l.b16 %v43
    %v431 = vunpack.c.h.b16 %v43
    %v432 = vunpack.c.l.b16 %v44
    %v433 = vunpack.c.h.b16 %v44
    %v434 = vunpack.c.l.b16 %v45
    %v435 = vunpack.c.h.b16 %v45
    %v436 = vunpack.c.l.b16 %v46
    %v437 = vunpack.c.h.b16 %v46
    %v438 = vunpack.c.l.b16 %v47
    %v439 = vunpack.c.h.b16 %v47
    %v440 = vunpack.c.l.b16 %v48
    %v441 = vunpack.c.h.b16 %v48
    %v442 = vunpack.c.l.b16 %v49
    %v443 = vunpack.c.h.b16 %v49
    %v444 = vunpack.c.l.b16 %v50
    %v445 = vunpack.c.h.b16 %v50
    %v446 = vunpack.c.l.b16 %v51
    %v447 = vunpack.c.h.b16 %v51
    %v448 = vunpack.c.l.b16 %v52
    %v449 = vunpack.c.h.b16 %v52
    %v450 = vunpack.c.l.b16 %v53
    %v451 = vunpack.c.h.b16 %v53
    %v452 = vunpack.c.l.b16 %v54
    %v453 = vunpack.c.h.b16 %v54
    %v454 = vunpack.c.l.b16 %v55
    %v455 = vunpack.c.h.b16 %v55
    %v456 = vunpack.c.l.b16 %v56
    %v457 = vunpack.c.h.b16 %v56
    %v458 = vunpack.c.l.b16 %v57
    %v459 = vunpack.c.h.b16 %v57
    %v460 = vunpack.c.l.b16 %v58
    %v461 = vunpack.c.h.b16 %v58
    %v462 = vunpack.c.l.b16 %v59
    %v463 = vunpack.c.h.b16 %v59
    %v464 = vunpack.c.l.b16 %v60
    %v465 = vunpack.c.h.b16 %v60
    %v466 = vunpack.c.l.b16 %v61
    %v467 = vunpack.c.h.b16 %v61
    %v468 = vunpack.c.l.b16 %v62
    %v469 = vunpack.c.h.b16 %v62
    %v470 = vunpack.c.l.b16 %v63
    %v471 = vunpack.c.h.b16 %v63
    %v472 = vunpack.c.l.b16 %v64
    %v473 = vunpack.c.h.b16 %v64
    %v474 = vunpack.c.l.b16 %v65
    %v475 = vunpack.c.h.b16 %v65
    %v476 = vunpack.c.l.b16 %v66
    %v477 = vunpack.c.h.b16 %v66
    %v478 = vunpack.c.l.b16 %v67
    %v479 = vunpack.c.h.b16 %v67
    %v480 = vunpack.c.l.b16 %v68
    %v481 = vunpack.c.h.b16 %v68
    %v482 = vunpack.c.l.b16 %v69
    %v483 = vunpack.c.h.b16 %v69
    %v484 = vunpack.c.l.b16 %v70
    %v485 = vunpack.c.h.b16 %v70
    %v486 = vunpack.c.l.b16 %v71
    %v487 = vunpack.c.h.b16 %v71
    %v488 = vunpack.c.l.b16 %v72
    %v489 = vunpack.c.h.b16 %v72
    %v490 = vunpack.c.l.b16 %v73
    %v491 = vunpack.c.h.b16 %v73
    %v492 = vunpack.c.l.b16 %v74
    %v493 = vunpack.c.h.b16 %v74
    %v494 = vunpack.c.l.b16 %v75
    %v495 = vunpack.c.h.b16 %v75
    %v496 = vunpack.c.l.b16 %v76
    %v497 = vunpack.c.h.b16 %v76
    %v498 = vunpack.c.l.b16 %v77
    %v499 = vunpack.c.h.b16 %v77
    %v500 = vunpack.c.l.b16 %v78
    %v501 = vunpack.c.h.b16 %v78
    %v502 = vunpack.c.l.b16 %v79
    %v503 = vunpack.c.h.b16 %v79
    %v504 = vunpack.c.l.b16 %v80
    %v505 = vunpack.c.h.b16 %v80
    %v506 = vunpack.c.l.b16 %v81
    %v507 = vunpack.c.h.b16 %v81
    %v508 = vunpack.c.l.b16 %v82
    %v509 = vunpack.c.h.b16 %v82
    %v510 = vunpack.c.l.b16 %v83
    %v511 = vunpack.c.h.b16 %v83
    %v512 = vunpack.c.l.b16 %v84
    %v513 = vunpack.c.h.b16 %v84
    %v514 = vunpack.c.l.b16 %v85
    %v515 = vunpack.c.h.b16 %v85
    %v516 = vunpack.c.l.b16 %v86
    %v517 = vunpack.c.h.b16 %v86
    %v518 = vunpack.c.l.b16 %v87
    %v519 = vunpack.c.h.b16 %v87
    %v520 = vunpack.c.l.b16 %v88
    %v521 = vunpack.c.h.b16 %v88
    %v522 = vunpack.c.l.b16 %v89
    %v523 = vunpack.c.h.b16 %v89
    %v524 = vunpack.c.l.b16 %v90
    %v525 = vunpack.c.h.b16 %v90
    %v526 = vunpack.c.l.b16 %v91
    %v527 = vunpack.c.h.b16 %v91
    %v528 = vunpack.c.l.b16 %v92
    %v529 = vunpack.c.h.b16 %v92
    %v530 = vunpack.c.l.b16 %v93
    %v531 = vunpack.c.h.b16 %v93
    %v532 = vunpack.c.l.b16 %v94
    %v533 = vunpack.c.h.b16 %v94
    %v534 = vunpack.c.l.b16 %v95
    %v535 = vunpack.c.h.b16 %v95
    %v536 = vunpack.c.l.b16 %v96
    %v537 = vunpack.c.h.b16 %v96
    %v538 = vunpack.c.l.b16 %v97
    %v539 = vunpack.c.h.b16 %v97
    %v540 = vunpack.c.l.b16 %v98
    %v541 = vunpack.c.h.b16 %v98
    %v542 = vunpack.c.l.b16 %v99
    %v543 = vunpack.c.h.b16 %v99
    %v544 = vunpack.c.l.b16 %v100
    %v545 = vunpack.c.h.b16 %v100
    %v546 = vunpack.c.l.b16 %v101
    %v547 = vunpack.c.h.b16 %v101
    %v548 = vunpack.c.l.b16 %v102
    %v549 = vunpack.c.h.b16 %v102
    %v550 = vunpack.c.l.b16 %v103
    %v551 = vunpack.c.h.b16 %v103
    %v552 = vunpack.c.l.b16 %v104
    %v553 = vunpack.c.h.b16 %v104
    %v554 = vunpack.c.l.b16 %v105
    %v555 = vunpack.c.h.b16 %v105
    %v556 = vunpack.c.l.b16 %v106
    %v557 = vunpack.c.h.b16 %v106
    %v558 = vunpack.c.l.b16 %v107
    %v559 = vunpack.c.h.b16 %v107
    %v560 = vunpack.c.l.b16 %v108
    %v561 = vunpack.c.h.b16 %v108
    %v562 = vunpack.c.l.b16 %v109
    %v563 = vunpack.c.h.b16 %v109
    %v564 = vunpack.c.l.b16 %v110
    %v565 = vunpack.c.h.b16 %v110
    %v566 = vunpack.c.l.b16 %v111
    %v567 = vunpack.c.h.b16 %v111
    %v568 = vunpack.c.l.b16 %v112
    %v569 = vunpack.c.h.b16 %v112
    %v570 = vunpack.c.l.b16 %v113
    %v571 = vunpack.c.h.b16 %v113
    %v572 = vunpack.c.l.b16 %v114
    %v573 = vunpack.c.h.b16 %v114
    %v574 = vunpack.c.l.b16 %v115
    %v575 = vunpack.c.h.b16 %v115
    %v576 = vunpack.c.l.b16 %v116
    %v577 = vunpack.c.h.b16 %v116
    %v578 = vunpack.c.l.b16 %v117
    %v579 = vunpack.c.h.b16 %v117
    %v580 = vunpack.c.l.b16 %v118
    %v581 = vunpack.c.h.b16 %v118
    %v582 = vunpack.c.l.b16 %v119
    %v583 = vunpack.c.h.b16 %v119
    %v584 = vunpack.c.l.b16 %v120
    %v585 = vunpack.c.h.b16 %v120
    %v586 = vunpack.c.l.b16 %v121
    %v587 = vunpack.c.h.b16 %v121
    %v588 = vunpack.c.l.b16 %v122
    %v589 = vunpack.c.h.b16 %v122
    %v590 = vunpack.c.l.b16 %v123
    %v591 = vunpack.c.h.b16 %v123
    %v592 = vunpack.c.l.b16 %v124
    %v593 = vunpack.c.h.b16 %v124
    %v594 = vunpack.c.l.b16 %v125
    %v595 = vunpack.c.h.b16 %v125
    %v596 = vunpack.c.l.b16 %v126
    %v597 = vunpack.c.h.b16 %v126
    %v598 = vunpack.c.l.b16 %v127
    %v599 = vunpack.c.h.b16 %v127
    %v600 = vunpack.c.l.b16 %v128
    %v601 = vunpack.c.h.b16 %v128
    %v602 = vunpack.c.l.b16 %v129
    %v603 = vunpack.c.h.b16 %v129
    %v604 = vunpack.c.l.b16 %v130
    %v605 = vunpack.c.h.b16 %v130
    %v606 = vunpack.c.l.b16 %v131
    %v607 = vunpack.c.h.b16 %v131
    %v608 = vunpack.c.l.b16 %v132
    %v609 = vunpack.c.h.b16 %v132
    %v610 = vunpack.c.l.b16 %v133
    %v611 = vunpack.c.h.b16 %v133
    %v612 = vunpack.c.l.b16 %v134
    %v613 = vunpack.c.h.b16 %v134
    %v614 = vunpack.c.l.b16 %v135
    %v615 = vunpack.c.h.b16 %v135
    %v616 = vunpack.c.l.b16 %v136
    %v617 = vunpack.c.h.b16 %v136
    %v618 = vunpack.c.l.b16 %v137
    %v619 = vunpack.c.h.b16 %v137
    %v620 = vunpack.c.l.b16 %v138
    %v621 = vunpack.c.h.b16 %v138
    %v622 = vunpack.c.l.b16 %v139
    %v623 = vunpack.c.h.b16 %v139
    %v624 = vunpack.c.l.b16 %v140
    %v625 = vunpack.c.h.b16 %v140
    %v626 = vunpack.c.l.b16 %v141
    %v627 = vunpack.c.h.b16 %v141
    %v628 = vunpack.c.l.b16 %v142
    %v629 = vunpack.c.h.b16 %v142
    %v630 = vunpack.c.l.b16 %v143
    %v631 = vunpack.c.h.b16 %v143
    %v632 = vunpack.c.l.b16 %v144
    %v633 = vunpack.c.h.b16 %v144
    %v634 = vunpack.c.l.b16 %v145
    %v635 = vunpack.c.h.b16 %v145
    %v636 = vunpack.c.l.b16 %v146
    %v637 = vunpack.c.h.b16 %v146
    %v638 = vunpack.c.l.b16 %v147
    %v639 = vunpack.c.h.b16 %v147
    %v640 = vunpack.c.l.b16 %v148
    %v641 = vunpack.c.h.b16 %v148
    %v642 = vunpack.c.l.b16 %v149
    %v643 = vunpack.c.h.b16 %v149
    %v644 = vunpack.c.l.b16 %v150
    %v645 = vunpack.c.h.b16 %v150
    %v646 = vunpack.c.l.b16 %v151
    %v647 = vunpack.c.h.b16 %v151
    %v648 = vunpack.c.l.b16 %v152
    %v649 = vunpack.c.h.b16 %v152
    %v650 = vunpack.c.l.b16 %v153
    %v651 = vunpack.c.h.b16 %v153
    %v652 = vunpack.c.l.b16 %v154
    %v653 = vunpack.c.h.b16 %v154
    %v654 = vunpack.c.l.b16 %v155
    %v655 = vunpack.c.h.b16 %v155
    %v656 = vunpack.c.l.b16 %v156
    %v657 = vunpack.c.h.b16 %v156
    %v658 = vunpack.c.l.b16 %v157
    %v659 = vunpack.c.h.b16 %v157
    %v660 = vunpack.c.l.b16 %v158
    %v661 = vunpack.c.h.b16 %v158
    %v662 = vunpack.c.l.b16 %v159
    %v663 = vunpack.c.h.b16 %v159
    %v664 = vunpack.c.l.b16 %v160
    %v665 = vunpack.c.h.b16 %v160
    %v666 = vunpack.c.l.b16 %v161
    %v667 = vunpack.c.h.b16 %v161
    %v668 = vunpack.c.l.b16 %v162
    %v669 = vunpack.c.h.b16 %v162
    %v670 = vunpack.c.l.b16 %v163
    %v671 = vunpack.c.h.b16 %v163
    %v672 = vunpack.c.l.b16 %v164
    %v673 = vunpack.c.h.b16 %v164
    %v674 = vunpack.c.l.b16 %v165
    %v675 = vunpack.c.h.b16 %v165
    %v676 = vunpack.c.l.b16 %v166
    %v677 = vunpack.c.h.b16 %v166
    %v678 = vunpack.c.l.b16 %v167
    %v679 = vunpack.c.h.b16 %v167
    %v680 = vunpack.c.l.b16 %v168
    %v681 = vunpack.c.h.b16 %v168
    %v682 = vunpack.c.l.b16 %v169
    %v683 = vunpack.c.h.b16 %v169
    %v684 = vunpack.c.l.b16 %v170
    %v685 = vunpack.c.h.b16 %v170
    %v686 = vunpack.c.l.b16 %v171
    %v687 = vunpack.c.h.b16 %v171
    %v688 = vunpack.c.l.b16 %v172
    %v689 = vunpack.c.h.b16 %v172
    %v690 = vunpack.c.l.b16 %v173
    %v691 = vunpack.c.h.b16 %v173
    %v692 = vpack.c.b16 %v406, %v404
    %v693 = vpack.c.b16 %v407, %v405
    %v694 = vpack.c.b16 %v410, %v408
    %v695 = vpack.c.b16 %v411, %v409
    %v696 = vpack.c.b16 %v414, %v412
    %v697 = vpack.c.b16 %v415, %v413
    %v698 = vpack.c.b16 %v418, %v416
    %v699 = vpack.c.b16 %v419, %v417
    %v700 = vpack.c.b16 %v422, %v420
    %v701 = vpack.c.b16 %v423, %v421
    %v702 = vpack.c.b16 %v426, %v424
    %v703 = vpack.c.b16 %v427, %v425
    %v704 = vpack.c.b16 %v430, %v428
    %v705 = vpack.c.b16 %v431, %v429
    %v706 = vpack.c.b16 %v434, %v432
    %v707 = vpack.c.b16 %v435, %v433
    %v708 = vpack.c.b16 %v438, %v436
    %v709 = vpack.c.b16 %v439, %v437
    %v710 = vpack.c.b16 %v442, %v440
    %v711 = vpack.c.b16 %v443, %v441
    %v712 = vpack.c.b16 %v446, %v444
    %v713 = vpack.c.b16 %v447, %v445
    %v714 = vpack.c.b16 %v450, %v448
    %v715 = vpack.c.b16 %v451, %v449
    %v716 = vpack.c.b16 %v454, %v452
    %v717 = vpack.c.b16 %v455, %v453
    %v718 = vpack.c.b16 %v458, %v456
    %v719 = vpack.c.b16 %v459, %v457
    %v720 = vpack.c.b16 %v462, %v460
    %v721 = vpack.c.b16 %v463, %v461
    %v722 = vpack.c.b16 %v466, %v464
    %v723 = vpack.c.b16 %v467, %v465
    %v724 = vpack.c.b16 %v470, %v468
    %v725 = vpack.c.b16 %v471, %v469
    %v726 = vpack.c.b16 %v474, %v472
    %v727 = vpack.c.b16 %v475, %v473
    %v728 = vpack.c.b16 %v478, %v476
    %v729 = vpack.c.b16 %v479, %v477
    %v730 = vpack.c.b16 %v482, %v480
    %v731 = vpack.c.b16 %v483, %v481
    %v732 = vpack.c.b16 %v486, %v484
    %v733 = vpack.c.b16 %v487, %v485
    %v734 = vpack.c.b16 %v490, %v488
    %v735 = vpack.c.b16 %v491, %v489
    %v736 = vpack.c.b16 %v494, %v492
    %v737 = vpack.c.b16 %v495, %v493
    %v738 = vpack.c.b16 %v498, %v496
    %v739 = vpack.c.b16 %v499, %v497
    %v740 = vpack.c.b16 %v502, %v500
    %v741 = vpack.c.b16 %v503, %v501
    %v742 = vpack.c.b16 %v506, %v504
    %v743 = vpack.c.b16 %v507, %v505
    %v744 = vpack.c.b16 %v510, %v508
    %v745 = vpack.c.b16 %v511, %v509
    %v746 = vpack.c.b16 %v514, %v512
    %v747 = vpack.c.b16 %v515, %v513
    %v748 = vpack.c.b16 %v518, %v516
    %v749 = vpack.c.b16 %v519, %v517
    %v750 = vpack.c.b16 %v522, %v520
    %v751 = vpack.c.b16 %v523, %v521
    %v752 = vpack.c.b16 %v526, %v524
    %v753 = vpack.c.b16 %v527, %v525
    %v754 = vpack.c.b16 %v530, %v528
    %v755 = vpack.c.b16 %v531, %v529
    %v756 = vpack.c.b16 %v534, %v532
    %v757 = vpack.c.b16 %v535, %v533
    %v758 = vpack.c.b16 %v538, %v536
    %v759 = vpack.c.b16 %v539, %v537
    %v760 = vpack.c.b16 %v542, %v540
    %v761 = vpack.c.b16 %v543, %v541
    %v762 = vpack.c.b16 %v546, %v544
    %v763 = vpack.c.b16 %v547, %v545
    %v764 = vpack.c.b16 %v550, %v548
    %v765 = vpack.c.b16 %v551, %v549
    %v766 = vpack.c.b16 %v554, %v552
    %v767 = vpack.c.b16 %v555, %v553
    %v768 = vpack.c.b16 %v558, %v556
    %v769 = vpack.c.b16 %v559, %v557
    %v770 = vpack.c.b16 %v562, %v560
    %v771 = vpack.c.b16 %v563, %v561
    %v772 = vpack.c.b16 %v566, %v564
    %v773 = vpack.c.b16 %v567, %v565
    %v774 = vpack.c.b16 %v570, %v568
    %v775 = vpack.c.b16 %v571, %v569
    %v776 = vpack.c.b16 %v574, %v572
    %v777 = vpack.c.b16 %v575, %v573
    %v778 = vpack.c.b16 %v578, %v576
    %v779 = vpack.c.b16 %v579, %v577
    %v780 = vpack.c.b16 %v582, %v580
    %v781 = vpack.c.b16 %v583, %v581
    %v782 = vpack.c.b16 %v586, %v584
    %v783 = vpack.c.b16 %v587, %v585
    %v784 = vpack.c.b16 %v590, %v588
    %v785 = vpack.c.b16 %v591, %v589
    %v786 = vpack.c.b16 %v594, %v592
    %v787 = vpack.c.b16 %v595, %v593
    %v788 = vpack.c.b16 %v598, %v596
    %v789 = vpack.c.b16 %v599, %v597
    %v790 = vpack.c.b16 %v602, %v600
    %v791 = vpack.c.b16 %v603, %v601
    %v792 = vpack.c.b16 %v606, %v604
    %v793 = vpack.c.b16 %v607, %v605
    %v794 = vpack.c.b16 %v610, %v608
    %v795 = vpack.c.b16 %v611, %v609
    %v796 = vpack.c.b16 %v614, %v612
    %v797 = vpack.c.b16 %v615, %v613
    %v798 = vpack.c.b16 %v618, %v616
    %v799 = vpack.c.b16 %v619, %v617
    %v800 = vpack.c.b16 %v622, %v620
    %v801 = vpack.c.b16 %v623, %v621
    %v802 = vpack.c.b16 %v626, %v624
    %v803 = vpack.c.b16 %v627, %v625
    %v804 = vpack.c.b16 %v630, %v628
    %v805 = vpack.c.b16 %v631, %v629
    %v806 = vpack.c.b16 %v634, %v632
    %v807 = vpack.c.b16 %v635, %v633
    %v808 = vpack.c.b16 %v638, %v636
    %v809 = vpack.c.b16 %v639, %v637
    %v810 = vpack.c.b16 %v642, %v640
    %v811 = vpack.c.b16 %v643, %v641
    %v812 = vpack.c.b16 %v646, %v644
    %v813 = vpack.c.b16 %v647, %v645
    %v814 = vpack.c.b16 %v650, %v648
    %v815 = vpack.c.b16 %v651, %v649
    %v816 = vpack.c.b16 %v654, %v652
    %v817 = vpack.c.b16 %v655, %v653
    %v818 = vpack.c.b16 %v658, %v656
    %v819 = vpack.c.b16 %v659, %v657
    %v820 = vpack.c.b16 %v662, %v660
    %v821 = vpack.c.b16 %v663, %v661
    %v822 = vpack.c.b16 %v666, %v664
    %v823 = vpack.c.b16 %v667, %v665
    %v824 = vpack.c.b16 %v670, %v668
    %v825 = vpack.c.b16 %v671, %v669
    %v826 = vpack.c.b16 %v674, %v672
    %v827 = vpack.c.b16 %v675, %v673
    %v828 = vpack.c.b16 %v678, %v676
    %v829 = vpack.c.b16 %v679, %v677
    %v830 = vpack.c.b16 %v682, %v680
    %v831 = vpack.c.b16 %v683, %v681
    %v832 = vpack.c.b16 %v686, %v684
    %v833 = vpack.c.b16 %v687, %v685
    %v834 = vpack.c.b16 %v690, %v688
    %v835 = vpack.c.b16 %v691, %v689
    %980 = vmatprep.subr.bf16.mxu0 %v693
    %981 = vmatpush1.bf16.msra.mxu0 %v692
    %982 = vmatprep.subr.bf16.mxu0 %v695
    %983 = vmatpush1.bf16.msra.mxu0 %v694
    %984 = vmatprep.subr.bf16.mxu0 %v697
    %985 = vmatpush1.bf16.msra.mxu0 %v696
    %986 = vmatprep.subr.bf16.mxu0 %v699
    %987 = vmatpush1.bf16.msra.mxu0 %v698
    %988 = vmatprep.subr.bf16.mxu0 %v701
    %989 = vmatpush1.bf16.msra.mxu0 %v700
    %990 = vmatprep.subr.bf16.mxu0 %v703
    %991 = vmatpush1.bf16.msra.mxu0 %v702
    %992 = vmatprep.subr.bf16.mxu0 %v705
    %993 = vmatpush1.bf16.msra.mxu0 %v704
    %994 = vmatprep.subr.bf16.mxu0 %v707
    %995 = vmatpush1.bf16.msra.mxu0 %v706
    %996 = vmatprep.subr.bf16.mxu0 %v709
    %997 = vmatpush1.bf16.msra.mxu0 %v708
    %998 = vmatprep.subr.bf16.mxu0 %v711
    %999 = vmatpush1.bf16.msra.mxu0 %v710
    %1000 = vmatprep.subr.bf16.mxu0 %v713
    %1001 = vmatpush1.bf16.msra.mxu0 %v712
    %1002 = vmatprep.subr.bf16.mxu0 %v715
    %1003 = vmatpush1.bf16.msra.mxu0 %v714
    %1004 = vmatprep.subr.bf16.mxu0 %v717
    %1005 = vmatpush1.bf16.msra.mxu0 %v716
    %1006 = vmatprep.subr.bf16.mxu0 %v719
    %1007 = vmatpush1.bf16.msra.mxu0 %v718
    %1008 = vmatprep.subr.bf16.mxu0 %v721
    %1009 = vmatpush1.bf16.msra.mxu0 %v720
    %1010 = vmatprep.subr.bf16.mxu0 %v723
    %1011 = vmatpush1.bf16.msra.mxu0 %v722
    %1012 = vmatprep.mubr.bf16.mxu0 %v225
    %1013 = vmatmul.mubr.bf16.gmra.mrb[0].mxu0 %v211
    %v1014 = vpop.f32.mrb[0].mxu0
    %v1015 = vadd.f32 %v179, %v1014
    %v1016 = vpop.f32.mrb[0].mxu0
    %v1017 = vadd.f32 %v183, %v1016
    %v1018 = vpop.f32.mrb[0].mxu0
    %v1019 = vpop.f32.mrb[0].mxu0
    %1020 = vdwg.mxu0
    %1021 = vmatprep.subr.bf16.mxu0 %v725
    %1022 = vmatpush1.bf16.msra.mxu0 %v724
    %1023 = vmatprep.subr.bf16.mxu0 %v727
    %1024 = vmatpush1.bf16.msra.mxu0 %v726
    %1025 = vmatprep.subr.bf16.mxu0 %v729
    %1026 = vmatpush1.bf16.msra.mxu0 %v728
    %1027 = vmatprep.subr.bf16.mxu0 %v731
    %1028 = vmatpush1.bf16.msra.mxu0 %v730
    %1029 = vmatprep.subr.bf16.mxu0 %v733
    %1030 = vmatpush1.bf16.msra.mxu0 %v732
    %1031 = vmatprep.subr.bf16.mxu0 %v735
    %1032 = vmatpush1.bf16.msra.mxu0 %v734
    %1033 = vmatprep.subr.bf16.mxu0 %v737
    %1034 = vmatpush1.bf16.msra.mxu0 %v736
    %1035 = vmatprep.subr.bf16.mxu0 %v739
    %1036 = vmatpush1.bf16.msra.mxu0 %v738
    %1037 = vmatprep.subr.bf16.mxu0 %v741
    %1038 = vmatpush1.bf16.msra.mxu0 %v740
    %1039 = vmatprep.subr.bf16.mxu0 %v743
    %1040 = vmatpush1.bf16.msra.mxu0 %v742
    %1041 = vmatprep.subr.bf16.mxu0 %v745
    %1042 = vmatpush1.bf16.msra.mxu0 %v744
    %1043 = vmatprep.subr.bf16.mxu0 %v747
    %1044 = vmatpush1.bf16.msra.mxu0 %v746
    %1045 = vmatprep.subr.bf16.mxu0 %v749
    %1046 = vmatpush1.bf16.msra.mxu0 %v748
    %1047 = vmatprep.subr.bf16.mxu0 %v751
    %1048 = vmatpush1.bf16.msra.mxu0 %v750
    %1049 = vmatprep.subr.bf16.mxu0 %v753
    %1050 = vmatpush1.bf16.msra.mxu0 %v752
    %1051 = vmatprep.subr.bf16.mxu0 %v755
    %1052 = vmatpush1.bf16.msra.mxu0 %v754
    %1053 = vmatprep.mubr.bf16.mxu0 %v235
    %1054 = vmatmul.mubr.bf16.gmra.mrb[0].mxu0 %v233
    %v1055 = vpop.f32.mrb[0].mxu0
    %v1056 = vadd.f32 %v1015, %v1055
    %v1057 = vpop.f32.mrb[0].mxu0
    %v1058 = vadd.f32 %v1017, %v1057
    %v1059 = vpop.f32.mrb[0].mxu0
    %v1060 = vpop.f32.mrb[0].mxu0
    %1061 = vdwg.mxu0
    %1062 = vmatprep.subr.bf16.mxu0 %v757
    %1063 = vmatpush1.bf16.msra.mxu0 %v756
    %1064 = vmatprep.subr.bf16.mxu0 %v759
    %1065 = vmatpush1.bf16.msra.mxu0 %v758
    %1066 = vmatprep.subr.bf16.mxu0 %v761
    %1067 = vmatpush1.bf16.msra.mxu0 %v760
    %1068 = vmatprep.subr.bf16.mxu0 %v763
    %1069 = vmatpush1.bf16.msra.mxu0 %v762
    %1070 = vmatprep.subr.bf16.mxu0 %v765
    %1071 = vmatpush1.bf16.msra.mxu0 %v764
    %1072 = vmatprep.subr.bf16.mxu0 %v767
    %1073 = vmatpush1.bf16.msra.mxu0 %v766
    %1074 = vmatprep.subr.bf16.mxu0 %v769
    %1075 = vmatpush1.bf16.msra.mxu0 %v768
    %1076 = vmatprep.subr.bf16.mxu0 %v771
    %1077 = vmatpush1.bf16.msra.mxu0 %v770
    %1078 = vmatprep.subr.bf16.mxu0 %v773
    %1079 = vmatpush1.bf16.msra.mxu0 %v772
    %1080 = vmatprep.subr.bf16.mxu0 %v775
    %1081 = vmatpush1.bf16.msra.mxu0 %v774
    %1082 = vmatprep.subr.bf16.mxu0 %v777
    %1083 = vmatpush1.bf16.msra.mxu0 %v776
    %1084 = vmatprep.subr.bf16.mxu0 %v779
    %1085 = vmatpush1.bf16.msra.mxu0 %v778
    %1086 = vmatprep.subr.bf16.mxu0 %v781
    %1087 = vmatpush1.bf16.msra.mxu0 %v780
    %1088 = vmatprep.subr.bf16.mxu0 %v783
    %1089 = vmatpush1.bf16.msra.mxu0 %v782
    %1090 = vmatprep.subr.bf16.mxu0 %v785
    %1091 = vmatpush1.bf16.msra.mxu0 %v784
    %1092 = vmatprep.subr.bf16.mxu0 %v787
    %1093 = vmatpush1.bf16.msra.mxu0 %v786
    %1094 = vmatprep.mubr.bf16.mxu0 %v232
    %1095 = vmatmul.mubr.bf16.gmra.mrb[0].mxu0 %v218
    %v1096 = vpop.f32.mrb[0].mxu0
    %v1097 = vadd.f32 %v1056, %v1096
    %v1098 = vpop.f32.mrb[0].mxu0
    %v1099 = vadd.f32 %v1058, %v1098
    %v1100 = vpop.f32.mrb[0].mxu0
    %v1101 = vpop.f32.mrb[0].mxu0
    %1102 = vdwg.mxu0
    %1103 = vmatprep.subr.bf16.mxu0 %v789
    %1104 = vmatpush1.bf16.msra.mxu0 %v788
    %1105 = vmatprep.subr.bf16.mxu0 %v791
    %1106 = vmatpush1.bf16.msra.mxu0 %v790
    %1107 = vmatprep.subr.bf16.mxu0 %v793
    %1108 = vmatpush1.bf16.msra.mxu0 %v792
    %1109 = vmatprep.subr.bf16.mxu0 %v795
    %1110 = vmatpush1.bf16.msra.mxu0 %v794
    %1111 = vmatprep.subr.bf16.mxu0 %v797
    %1112 = vmatpush1.bf16.msra.mxu0 %v796
    %1113 = vmatprep.subr.bf16.mxu0 %v799
    %1114 = vmatpush1.bf16.msra.mxu0 %v798
    %1115 = vmatprep.subr.bf16.mxu0 %v801
    %1116 = vmatpush1.bf16.msra.mxu0 %v800
    %1117 = vmatprep.subr.bf16.mxu0 %v803
    %1118 = vmatpush1.bf16.msra.mxu0 %v802
    %1119 = vmatprep.subr.bf16.mxu0 %v805
    %1120 = vmatpush1.bf16.msra.mxu0 %v804
    %1121 = vmatprep.subr.bf16.mxu0 %v807
    %1122 = vmatpush1.bf16.msra.mxu0 %v806
    %1123 = vmatprep.subr.bf16.mxu0 %v809
    %1124 = vmatpush1.bf16.msra.mxu0 %v808
    %1125 = vmatprep.subr.bf16.mxu0 %v811
    %1126 = vmatpush1.bf16.msra.mxu0 %v810
    %1127 = vmatprep.subr.bf16.mxu0 %v813
    %1128 = vmatpush1.bf16.msra.mxu0 %v812
    %1129 = vmatprep.subr.bf16.mxu0 %v815
    %1130 = vmatpush1.bf16.msra.mxu0 %v814
    %1131 = vmatprep.subr.bf16.mxu0 %v817
    %1132 = vmatpush1.bf16.msra.mxu0 %v816
    %1133 = vmatprep.subr.bf16.mxu0 %v819
    %1134 = vmatpush1.bf16.msra.mxu0 %v818
    %1135 = vmatprep.mubr.bf16.mxu0 %v236
    %1136 = vmatmul.mubr.bf16.gmra.mrb[0].mxu0 %v234
    %v1137 = vpop.f32.mrb[0].mxu0
    %v1138 = vadd.f32 %v1097, %v1137
    %v1139 = vpop.f32.mrb[0].mxu0
    %v1140 = vadd.f32 %v1099, %v1139
    %v1141 = vpop.f32.mrb[0].mxu0
    %v1142 = vpop.f32.mrb[0].mxu0
    %1143 = vdwg.mxu0
    %1144 = vmatprep.subr.bf16.mxu0 %v821
    %1145 = vmatpush1.bf16.msra.mxu0 %v820
    %1146 = vmatprep.subr.bf16.mxu0 %v823
    %1147 = vmatpush1.bf16.msra.mxu0 %v822
    %1148 = vmatprep.subr.bf16.mxu0 %v825
    %1149 = vmatpush1.bf16.msra.mxu0 %v824
    %1150 = vmatprep.subr.bf16.mxu0 %v827
    %1151 = vmatpush1.bf16.msra.mxu0 %v826
    %1152 = vmatprep.subr.bf16.mxu0 %v829
    %1153 = vmatpush1.bf16.msra.mxu0 %v828
    %1154 = vmatprep.subr.bf16.mxu0 %v831
    %1155 = vmatpush1.bf16.msra.mxu0 %v830
    %1156 = vmatprep.subr.bf16.mxu0 %v833
    %1157 = vmatpush1.bf16.msra.mxu0 %v832
    %1158 = vmatprep.subr.bf16.mxu0 %v835
    %1159 = vmatpush1.bf16.msra.mxu0 %v834
    %1160 = vmatprep.subr.bf16.mxu0 0
    %1161 = vmatpush1.bf16.msra.mxu0 0
    %1162 = vmatprep.subr.bf16.mxu0 0
    %1163 = vmatpush1.bf16.msra.mxu0 0
    %1164 = vmatprep.subr.bf16.mxu0 0
    %1165 = vmatpush1.bf16.msra.mxu0 0
    %1166 = vmatprep.subr.bf16.mxu0 0
    %1167 = vmatpush1.bf16.msra.mxu0 0
    %1168 = vmatprep.subr.bf16.mxu0 0
    %1169 = vmatpush1.bf16.msra.mxu0 0
    %1170 = vmatprep.subr.bf16.mxu0 0
    %1171 = vmatpush1.bf16.msra.mxu0 0
    %1172 = vmatprep.subr.bf16.mxu0 0
    %1173 = vmatpush1.bf16.msra.mxu0 0
    %1174 = vmatprep.subr.bf16.mxu0 0
    %1175 = vmatpush1.bf16.msra.mxu0 0
    %1176 = vmatprep.mubr.bf16.mxu0 0
    %1177 = vmatmul.mubr.bf16.gmra.mrb[0].mxu0 %v250
    %v1178 = vpop.f32.mrb[0].mxu0
    %v1179 = vadd.f32 %v1138, %v1178
    %v1180 = vpop.f32.mrb[0].mxu0
    %v1181 = vadd.f32 %v1140, %v1180
    %v1182 = vpop.f32.mrb[0].mxu0
    %v1183 = vpop.f32.mrb[0].mxu0
    %1184 = vdwg.mxu0
    %v1185 = vmax.f32 %v1179, 0.0
    %v1186 = vmax.f32 %v1181, 0.0
    %v1187 = vpack.c.bf16 %v1185, %v1185
    %v1188 = vpack.c.bf16 %v1186, %v1186
    %v1189 = vld [vmem:[%s3] sm:$0xf]
    %v1190 = vld [vmem:[%s3 + $0x4] sm:$0xf]
    %v1191 = vld [vmem:[%s3 + $0x8] sm:$0xf]
    %v1192 = vld [vmem:[%s3 + $0xc] sm:$0xf]
    %v1193 = vld [vmem:[%s3 + $0x10] sm:$0xf]
    %v1194 = vld [vmem:[%s3 + $0x14] sm:$0xf]
    %v1195 = vld [vmem:[%s3 + $0x18] sm:$0xf]
    %v1196 = vld [vmem:[%s3 + $0x1c] sm:$0xf]
    %v1197 = vld [vmem:[%s3 + $0x20] sm:$0xf]
    %v1198 = vld [vmem:[%s3 + $0x24] sm:$0xf]
    %v1199 = vld [vmem:[%s3 + $0x28] sm:$0xf]
    %v1200 = vld [vmem:[%s3 + $0x2c] sm:$0xf]
    %v1201 = vld [vmem:[%s3 + $0x30] sm:$0xf]
    %v1202 = vld [vmem:[%s3 + $0x34] sm:$0xf]
    %v1203 = vld [vmem:[%s3 + $0x38] sm:$0xf]
    %v1204 = vld [vmem:[%s3 + $0x3c] sm:$0xf]
    %v1205 = vld [vmem:[%s3 + $0x40] sm:$0xf]
    %v1206 = vld [vmem:[%s3 + $0x44] sm:$0xf]
    %v1207 = vld [vmem:[%s3 + $0x48] sm:$0xf]
    %v1208 = vld [vmem:[%s3 + $0x4c] sm:$0xf]
    %v1209 = vld [vmem:[%s3 + $0x50] sm:$0xf]
    %v1210 = vld [vmem:[%s3 + $0x54] sm:$0xf]
    %v1211 = vld [vmem:[%s3 + $0x58] sm:$0xf]
    %v1212 = vld [vmem:[%s3 + $0x5c] sm:$0xf]
    %v1213 = vld [vmem:[%s3 + $0x60] sm:$0xf]
    %v1214 = vld [vmem:[%s3 + $0x64] sm:$0xf]
    %v1215 = vld [vmem:[%s3 + $0x68] sm:$0xf]
    %v1216 = vld [vmem:[%s3 + $0x6c] sm:$0xf]
    %v1217 = vld [vmem:[%s3 + $0x70] sm:$0xf]
    %v1218 = vld [vmem:[%s3 + $0x74] sm:$0xf]
    %v1219 = vld [vmem:[%s3 + $0x78] sm:$0xf]
    %v1220 = vld [vmem:[%s3 + $0x7c] sm:$0xf]
    %v1221 = vld [vmem:[%s4] sm:$0x1]
    %v1223 = vlaneseq
    %v1224 = vshrl.u32 %v1223, 7
    %v1225 = vsub.s32 0, %v1224
    %v1226 = vrot.slane %v1221, %v1225
    %v1260 = vunpack.c.l.b16 %v1189
    %v1261 = vunpack.c.l.b16 %v1190
    %v1262 = vunpack.c.l.b16 %v1191
    %v1263 = vunpack.c.l.b16 %v1192
    %v1264 = vunpack.c.l.b16 %v1193
    %v1265 = vunpack.c.l.b16 %v1194
    %v1266 = vunpack.c.l.b16 %v1195
    %v1267 = vunpack.c.l.b16 %v1196
    %v1268 = vunpack.c.l.b16 %v1197
    %v1269 = vunpack.c.l.b16 %v1198
    %v1270 = vunpack.c.l.b16 %v1199
    %v1271 = vunpack.c.l.b16 %v1200
    %v1272 = vunpack.c.l.b16 %v1201
    %v1273 = vunpack.c.l.b16 %v1202
    %v1274 = vunpack.c.l.b16 %v1203
    %v1275 = vunpack.c.l.b16 %v1204
    %v1276 = vunpack.c.l.b16 %v1205
    %v1277 = vunpack.c.l.b16 %v1206
    %v1278 = vunpack.c.l.b16 %v1207
    %v1279 = vunpack.c.l.b16 %v1208
    %v1280 = vunpack.c.l.b16 %v1209
    %v1281 = vunpack.c.l.b16 %v1210
    %v1282 = vunpack.c.l.b16 %v1211
    %v1283 = vunpack.c.l.b16 %v1212
    %v1284 = vunpack.c.l.b16 %v1213
    %v1285 = vunpack.c.l.b16 %v1214
    %v1286 = vunpack.c.l.b16 %v1215
    %v1287 = vunpack.c.l.b16 %v1216
    %v1288 = vunpack.c.l.b16 %v1217
    %v1289 = vunpack.c.l.b16 %v1218
    %v1290 = vunpack.c.l.b16 %v1219
    %v1291 = vunpack.c.l.b16 %v1220
    %v1292 = vpack.c.b16 %v1261, %v1260
    %v1293 = vpack.c.b16 %v1263, %v1262
    %v1294 = vpack.c.b16 %v1265, %v1264
    %v1295 = vpack.c.b16 %v1267, %v1266
    %v1296 = vpack.c.b16 %v1269, %v1268
    %v1297 = vpack.c.b16 %v1271, %v1270
    %v1298 = vpack.c.b16 %v1273, %v1272
    %v1299 = vpack.c.b16 %v1275, %v1274
    %v1300 = vpack.c.b16 %v1277, %v1276
    %v1301 = vpack.c.b16 %v1279, %v1278
    %v1302 = vpack.c.b16 %v1281, %v1280
    %v1303 = vpack.c.b16 %v1283, %v1282
    %v1304 = vpack.c.b16 %v1285, %v1284
    %v1305 = vpack.c.b16 %v1287, %v1286
    %v1306 = vpack.c.b16 %v1289, %v1288
    %v1307 = vpack.c.b16 %v1291, %v1290
    %1324 = vmatprep.subr.bf16.mxu0 0
    %1325 = vmatpush1.bf16.msra.mxu0 %v1292
    %1326 = vmatprep.subr.bf16.mxu0 0
    %1327 = vmatpush1.bf16.msra.mxu0 %v1293
    %1328 = vmatprep.subr.bf16.mxu0 0
    %1329 = vmatpush1.bf16.msra.mxu0 %v1294
    %1330 = vmatprep.subr.bf16.mxu0 0
    %1331 = vmatpush1.bf16.msra.mxu0 %v1295
    %1332 = vmatprep.subr.bf16.mxu0 0
    %1333 = vmatpush1.bf16.msra.mxu0 %v1296
    %1334 = vmatprep.subr.bf16.mxu0 0
    %1335 = vmatpush1.bf16.msra.mxu0 %v1297
    %1336 = vmatprep.subr.bf16.mxu0 0
    %1337 = vmatpush1.bf16.msra.mxu0 %v1298
    %1338 = vmatprep.subr.bf16.mxu0 0
    %1339 = vmatpush1.bf16.msra.mxu0 %v1299
    %1340 = vmatprep.subr.bf16.mxu0 0
    %1341 = vmatpush1.bf16.msra.mxu0 %v1300
    %1342 = vmatprep.subr.bf16.mxu0 0
    %1343 = vmatpush1.bf16.msra.mxu0 %v1301
    %1344 = vmatprep.subr.bf16.mxu0 0
    %1345 = vmatpush1.bf16.msra.mxu0 %v1302
    %1346 = vmatprep.subr.bf16.mxu0 0
    %1347 = vmatpush1.bf16.msra.mxu0 %v1303
    %1348 = vmatprep.subr.bf16.mxu0 0
    %1349 = vmatpush1.bf16.msra.mxu0 %v1304
    %1350 = vmatprep.subr.bf16.mxu0 0
    %1351 = vmatpush1.bf16.msra.mxu0 %v1305
    %1352 = vmatprep.subr.bf16.mxu0 0
    %1353 = vmatpush1.bf16.msra.mxu0 %v1306
    %1354 = vmatprep.subr.bf16.mxu0 0
    %1355 = vmatpush1.bf16.msra.mxu0 %v1307
    %1356 = vmatprep.mubr.bf16.mxu0 %v1188
    %1357 = vmatmul.mubr.bf16.gmra.mrb[0].mxu0 %v1187
    %v1358 = vpop.f32.mrb[0].mxu0
    %v1359 = vadd.f32 %v1226, %v1358
    %v1360 = vpop.f32.mrb[0].mxu0
    %v1361 = vpop.f32.mrb[0].mxu0
    %v1362 = vpop.f32.mrb[0].mxu0
    %1363 = vdwg.mxu0
    %v1364 = vmax.f32 %v1359, 0.0
    %v1365 = vpack.c.bf16 %v1364, %v1364
    %v1366 = vld [vmem:[%s5] sm:$0xf]
    %v1367 = vld [vmem:[%s5 + $0x4] sm:$0xf]
    %v1368 = vld [vmem:[%s5 + $0x8] sm:$0xf]
    %v1369 = vld [vmem:[%s5 + $0xc] sm:$0xf]
    %v1370 = vld [vmem:[%s5 + $0x10] sm:$0xf]
    %v1371 = vld [vmem:[%s5 + $0x14] sm:$0xf]
    %v1372 = vld [vmem:[%s5 + $0x18] sm:$0xf]
    %v1373 = vld [vmem:[%s5 + $0x1c] sm:$0xf]
    %v1374 = vld [vmem:[%s5 + $0x20] sm:$0xf]
    %v1375 = vld [vmem:[%s5 + $0x24] sm:$0xf]
    %v1376 = vld [vmem:[%s5 + $0x28] sm:$0xf]
    %v1377 = vld [vmem:[%s5 + $0x2c] sm:$0xf]
    %v1378 = vld [vmem:[%s5 + $0x30] sm:$0xf]
    %v1379 = vld [vmem:[%s5 + $0x34] sm:$0xf]
    %v1380 = vld [vmem:[%s5 + $0x38] sm:$0xf]
    %v1381 = vld [vmem:[%s5 + $0x3c] sm:$0xf]
    %v1382 = vld [vmem:[%s6] sm:$0x1]
    %v1384 = vlaneseq
    %v1385 = vshrl.u32 %v1384, 7
    %v1386 = vsub.s32 0, %v1385
    %v1387 = vrot.slane %v1382, %v1386
    %v1405 = vunpack.c.l.b16 %v1366
    %v1406 = vunpack.c.l.b16 %v1367
    %v1407 = vunpack.c.l.b16 %v1368
    %v1408 = vunpack.c.l.b16 %v1369
    %v1409 = vunpack.c.l.b16 %v1370
    %v1410 = vunpack.c.l.b16 %v1371
    %v1411 = vunpack.c.l.b16 %v1372
    %v1412 = vunpack.c.l.b16 %v1373
    %v1413 = vunpack.c.l.b16 %v1374
    %v1414 = vunpack.c.l.b16 %v1375
    %v1415 = vunpack.c.l.b16 %v1376
    %v1416 = vunpack.c.l.b16 %v1377
    %v1417 = vunpack.c.l.b16 %v1378
    %v1418 = vunpack.c.l.b16 %v1379
    %v1419 = vunpack.c.l.b16 %v1380
    %v1420 = vunpack.c.l.b16 %v1381
    %v1421 = vpack.c.b16 %v1406, %v1405
    %v1422 = vpack.c.b16 %v1408, %v1407
    %v1423 = vpack.c.b16 %v1410, %v1409
    %v1424 = vpack.c.b16 %v1412, %v1411
    %v1425 = vpack.c.b16 %v1414, %v1413
    %v1426 = vpack.c.b16 %v1416, %v1415
    %v1427 = vpack.c.b16 %v1418, %v1417
    %v1428 = vpack.c.b16 %v1420, %v1419
    %1437 = vmatprep.subr.bf16.mxu0 0
    %1438 = vmatpush1.bf16.msra.mxu0 %v1421
    %1439 = vmatprep.subr.bf16.mxu0 0
    %1440 = vmatpush1.bf16.msra.mxu0 %v1422
    %1441 = vmatprep.subr.bf16.mxu0 0
    %1442 = vmatpush1.bf16.msra.mxu0 %v1423
    %1443 = vmatprep.subr.bf16.mxu0 0
    %1444 = vmatpush1.bf16.msra.mxu0 %v1424
    %1445 = vmatprep.subr.bf16.mxu0 0
    %1446 = vmatpush1.bf16.msra.mxu0 %v1425
    %1447 = vmatprep.subr.bf16.mxu0 0
    %1448 = vmatpush1.bf16.msra.mxu0 %v1426
    %1449 = vmatprep.subr.bf16.mxu0 0
    %1450 = vmatpush1.bf16.msra.mxu0 %v1427
    %1451 = vmatprep.subr.bf16.mxu0 0
    %1452 = vmatpush1.bf16.msra.mxu0 %v1428
    %1453 = vmatprep.subr.bf16.mxu0 0
    %1454 = vmatpush1.bf16.msra.mxu0 0
    %1455 = vmatprep.subr.bf16.mxu0 0
    %1456 = vmatpush1.bf16.msra.mxu0 0
    %1457 = vmatprep.subr.bf16.mxu0 0
    %1458 = vmatpush1.bf16.msra.mxu0 0
    %1459 = vmatprep.subr.bf16.mxu0 0
    %1460 = vmatpush1.bf16.msra.mxu0 0
    %1461 = vmatprep.subr.bf16.mxu0 0
    %1462 = vmatpush1.bf16.msra.mxu0 0
    %1463 = vmatprep.subr.bf16.mxu0 0
    %1464 = vmatpush1.bf16.msra.mxu0 0
    %1465 = vmatprep.subr.bf16.mxu0 0
    %1466 = vmatpush1.bf16.msra.mxu0 0
    %1467 = vmatprep.subr.bf16.mxu0 0
    %1468 = vmatpush1.bf16.msra.mxu0 0
    %1469 = vmatprep.mubr.bf16.mxu0 0
    %1470 = vmatmul.mubr.bf16.gmra.mrb[0].mxu0 %v1365
    %v1471 = vpop.f32.mrb[0].mxu0
    %v1472 = vadd.f32 %v1387, %v1471
    %v1473 = vpop.f32.mrb[0].mxu0
    %v1474 = vpop.f32.mrb[0].mxu0
    %v1475 = vpop.f32.mrb[0].mxu0
    %1476 = vdwg.mxu0
    %1477 = vst [vmem:[#allocation2] sm:$0x3] %v1472
    // Predicated region
    $region30: #{extended_cnn_forward.7} parent=1 // pred_check
      _
    $region31: #{extended_cnn_forward.7} parent=1 // pred_check_branch
      %1479 = sbr.rel (0) target = $region33
    $region32: #{extended_cnn_forward.7} parent=1 // pred_region
      %s1481 = ssub.s32 32, 32
      %1482 = vsyncadd [#allocation3], %s1481
      %s1484 = sshll.u32 [#allocation2], 4
      %s1485 = int_to_ptr.vmem [resolvable:$true] %s1484
      %1487 = dma.vmem_to_hbm [thread:$0]  %s1485, 32, %s7, [#allocation3]
    $region33: #{extended_cnn_forward.7} parent=1 // pred_fallthru
      _
    // Predicated region
    $region34: #{extended_cnn_forward.7} parent=1 // pred_check
      _
    $region35: #{extended_cnn_forward.7} parent=1 // pred_check_branch
      %1489 = sbr.rel (0) target = $region37
    $region36: #{extended_cnn_forward.7} parent=1 // pred_region
      %1490 = dma.done [#allocation3], 32
    $region37: #{extended_cnn_forward.7} parent=1 // pred_fallthru
      _
    %1491 = vsyncpa [#allocation3], 1

</llo_original>
